<compile_context>
chip_gen: v7x
topology: tpu7x:2x2x1
jax: 0.10.0
libtpu: 0.0.40
codegen_flags: <defaults>
</compile_context>

<pallas_src>
import jax
import jax.numpy as jnp
from jax.experimental import pallas as pl
from jax.experimental.pallas import tpu as pltpu

# True / lane-padded layer widths.
_H1_TRUE, _H2_TRUE, _H3_TRUE = 1260, 512, 208
_H1, _H2, _H3 = 1280, 512, 256
_OUT_PAD = 128          # fc4 output padded to one full lane-width column block


def _round_up(x, m):
    return (x + m - 1) // m * m


def _value_net_kernel(x_ref, w1_ref, b1_ref, w2_ref, b2_ref,
                      w3_ref, b3_ref, w4_ref, b4_ref, out_ref):
    x = x_ref[...].astype(jnp.bfloat16)

    h = jnp.dot(x, w1_ref[...], preferred_element_type=jnp.float32) + b1_ref[...]
    h = jnp.maximum(h, 0.0)

    h = jnp.dot(h.astype(jnp.bfloat16), w2_ref[...],
                preferred_element_type=jnp.float32) + b2_ref[...]
    h = jnp.maximum(h, 0.0)

    h = jnp.dot(h.astype(jnp.bfloat16), w3_ref[...],
                preferred_element_type=jnp.float32) + b3_ref[...]
    h = jnp.maximum(h, 0.0)

    # fc4: padded MXU matmul (256 x 128, real weights in column 0) -> lane-dense
    # (tb, 128) output block; column 0 is the true value, rest is zero+bias pad.
    out = jnp.dot(h.astype(jnp.bfloat16), w4_ref[...],
                  preferred_element_type=jnp.float32) + b4_ref[...]
    out_ref[...] = out.astype(out_ref.dtype)


def value_network_forward(state, params, *, batch_tile=1024):
    """state: (B, D0, D1) | (B, state_dim) | (state_dim,).  Returns (B, 1) fp32
    (or (1,) fp32 for a single unbatched state, matching the PyTorch branch)."""
    w1, b1, w2, b2, w3, b3, w4, b4 = params
    state_dim = w1.shape[0]

    squeeze = False
    if state.ndim == 3:                       # PyTorch: state.view(B, -1)
        state = state.reshape(state.shape[0], -1)
    elif state.ndim == 1:                     # PyTorch: state.view(-1)
        state = state.reshape(1, -1)
        squeeze = True
    assert state.shape[-1] == state_dim, (state.shape, state_dim)
    # (clone/detach/requires_grad_ are autograd bookkeeping — no-ops here)

    B = state.shape[0]

    # Equalized tiles: split B into near-equal, 8-aligned tiles (tail padding
    # < 8 rows per tile).  Force >= 2 (even) grid steps when B >= 16 so both
    # v7x TensorCores get work and the pipeline has something to overlap.
    n_tiles = pl.cdiv(B, batch_tile)
    if B >= 16:
        n_tiles = max(n_tiles, 2)
    if n_tiles > 1 and n_tiles % 2 == 1:
        n_tiles += 1
    tb = _round_up(pl.cdiv(B, n_tiles), 8)    # (8,128) rule: TB multiple of 8
    b_pad = _round_up(B, tb)
    if b_pad != B:
        state = jnp.pad(state, ((0, b_pad - B), (0, 0)))
    grid = (b_pad // tb,)

    flops = 2 * b_pad * (state_dim * _H1 + _H1 * _H2 + _H2 * _H3 + _H3 * _OUT_PAD)
    weight_bytes = sum(int(p.size) * p.dtype.itemsize for p in params)
    bytes_accessed = (weight_bytes + b_pad * state_dim * 4
                      + b_pad * _OUT_PAD * 4)

    def _call(single_buffer_weights):
        if single_buffer_weights:
            # Constant index_map -> block never changes; a 2nd pipeline buffer
            # would just waste VMEM.
            def weight_spec(arr):
                return pl.BlockSpec(arr.shape, lambda i: (0, 0),
                                    pipeline_mode=pl.Buffered(1))
        else:
            def weight_spec(arr):
                return pl.BlockSpec(arr.shape, lambda i: (0, 0))

        in_specs = [
            pl.BlockSpec((tb, state_dim), lambda i: (i, 0)),
            weight_spec(w1), weight_spec(b1),
            weight_spec(w2), weight_spec(b2),
            weight_spec(w3), weight_spec(b3),
            weight_spec(w4), weight_spec(b4),
        ]
        out_specs = pl.BlockSpec((tb, _OUT_PAD), lambda i: (i, 0))

        return pl.pallas_call(
            _value_net_kernel,
            out_shape=jax.ShapeDtypeStruct((b_pad, _OUT_PAD), jnp.float32),
            grid=grid,
            in_specs=in_specs,
            out_specs=out_specs,
            compiler_params=pltpu.CompilerParams(
                dimension_semantics=("parallel",),
                vmem_limit_bytes=48 * 1024 * 1024),
            cost_estimate=pl.CostEstimate(
                flops=flops, transcendentals=0, bytes_accessed=bytes_accessed),
        )(state, *params)

    try:
        out = _call(True)
    except Exception:
        # Older JAX without BlockSpec(pipeline_mode=...) support: default buffering.
        out = _call(False)

    out = out[:B, :1]                         # real batch rows, real fc4 column
    if squeeze:
        out = out[0]
    return out


def init_params(key, state_dim):
    """PyTorch-style Linear init (uniform +/- 1/sqrt(fan_in)); hidden dims
    zero-padded to lane-aligned widths; weights cast to bfloat16.
    fc4 is stored as a (256, 128) slab with the real column at index 0."""
    dims_true = [(state_dim, _H1_TRUE), (_H1_TRUE, _H2_TRUE),
                 (_H2_TRUE, _H3_TRUE), (_H3_TRUE, 1)]
    dims_pad = [(state_dim, _H1), (_H1, _H2), (_H2, _H3), (_H3, _OUT_PAD)]

    params = []
    keys = jax.random.split(key, len(dims_true) * 2)
    for idx, ((fin, fout), (pin, pout)) in enumerate(zip(dims_true, dims_pad)):
        bound = 1.0 / (fin ** 0.5)
        w = jax.random.uniform(keys[2 * idx], (fin, fout), jnp.float32,
                               minval=-bound, maxval=bound)
        b = jax.random.uniform(keys[2 * idx + 1], (fout,), jnp.float32,
                               minval=-bound, maxval=bound)
        w_pad = jnp.zeros((pin, pout), jnp.float32).at[:fin, :fout].set(w)
        b_pad = jnp.zeros((1, pout), jnp.float32).at[0, :fout].set(b)
        params += [w_pad.astype(jnp.bfloat16), b_pad]
    return tuple(params)


def reference_forward(state, params):
    """Pure-JAX reference with identical math (bf16 weights, fp32 accumulate).
    NOTE: bf16 weights mean ~1e-3 relative deviation vs the fp32 PyTorch module."""
    w1, b1, w2, b2, w3, b3, w4, b4 = params
    if state.ndim == 3:
        state = state.reshape(state.shape[0], -1)
    elif state.ndim == 1:
        state = state.reshape(1, -1)
    h = jnp.maximum(jnp.dot(state.astype(jnp.bfloat16), w1,
                            preferred_element_type=jnp.float32) + b1, 0.0)
    h = jnp.maximum(jnp.dot(h.astype(jnp.bfloat16), w2,
                            preferred_element_type=jnp.float32) + b2, 0.0)
    h = jnp.maximum(jnp.dot(h.astype(jnp.bfloat16), w3,
                            preferred_element_type=jnp.float32) + b3, 0.0)
    out = jnp.dot(h.astype(jnp.bfloat16), w4,
                  preferred_element_type=jnp.float32) + b4
    return out[:, :1]


if __name__ == "__main__":
    # 3-D state, as in the PyTorch `len(state.shape) == 3` branch:
    # (B, 4, 8) -> flattened to (B, 32); state_dim = 32.
    B, D0, D1 = 2, 4, 8
    state_dim = D0 * D1

    key = jax.random.PRNGKey(0)
    k_x, k_p = jax.random.split(key)

    state_3d = jax.random.normal(k_x, (B, D0, D1), dtype=jnp.float32)
    params = init_params(k_p, state_dim)

    out = value_network_forward(state_3d, params)
    out = jax.block_until_ready(out)

    ref = reference_forward(state_3d, params)
    assert out.shape == (B, 1), out.shape
    assert jnp.allclose(out, ref, atol=2e-3, rtol=2e-3), (out, ref)

    print("KERNEL_OK")
</pallas_src>

<mosaic_0001>
module attributes {stable_mosaic.version = 11 : i64} {
  func.func @_value_net_kernel(%arg0: i32, %arg1: memref<8x32xf32, #tpu.memory_space<vmem>>, %arg2: memref<32x1280xbf16, #tpu.memory_space<vmem>>, %arg3: memref<1x1280xf32, #tpu.memory_space<vmem>>, %arg4: memref<1280x512xbf16, #tpu.memory_space<vmem>>, %arg5: memref<1x512xf32, #tpu.memory_space<vmem>>, %arg6: memref<512x256xbf16, #tpu.memory_space<vmem>>, %arg7: memref<1x256xf32, #tpu.memory_space<vmem>>, %arg8: memref<256x128xbf16, #tpu.memory_space<vmem>>, %arg9: memref<1x128xf32, #tpu.memory_space<vmem>>, %arg10: memref<8x128xf32, #tpu.memory_space<vmem>>) attributes {dimension_semantics = [#tpu.dimension_semantics<parallel>], iteration_bounds = array<i64: 1>, scalar_prefetch = 0 : i64, scratch_operands = 0 : i64, tpu.core_type = #tpu.core_type<tc>, window_params = [{transform_indices = @transform_0, window_bounds = array<i64: 8, 32>}, {pipeline_mode = #tpu.pipeline_mode<synchronous>, transform_indices = @transform_1, window_bounds = array<i64: 32, 1280>}, {pipeline_mode = #tpu.pipeline_mode<synchronous>, transform_indices = @transform_2, window_bounds = array<i64: 1, 1280>}, {pipeline_mode = #tpu.pipeline_mode<synchronous>, transform_indices = @transform_3, window_bounds = array<i64: 1280, 512>}, {pipeline_mode = #tpu.pipeline_mode<synchronous>, transform_indices = @transform_4, window_bounds = array<i64: 1, 512>}, {pipeline_mode = #tpu.pipeline_mode<synchronous>, transform_indices = @transform_5, window_bounds = array<i64: 512, 256>}, {pipeline_mode = #tpu.pipeline_mode<synchronous>, transform_indices = @transform_6, window_bounds = array<i64: 1, 256>}, {pipeline_mode = #tpu.pipeline_mode<synchronous>, transform_indices = @transform_7, window_bounds = array<i64: 256, 128>}, {pipeline_mode = #tpu.pipeline_mode<synchronous>, transform_indices = @transform_8, window_bounds = array<i64: 1, 128>}, {transform_indices = @transform_9, window_bounds = array<i64: 8, 128>}]} {
    %c0 = arith.constant 0 : index
    %c0_0 = arith.constant 0 : index
    %0 = vector.load %arg1[%c0, %c0_0] : memref<8x32xf32, #tpu.memory_space<vmem>>, vector<8x32xf32>
    %1 = arith.truncf %0 : vector<8x32xf32> to vector<8x32xbf16>
    %c0_1 = arith.constant 0 : index
    %c0_2 = arith.constant 0 : index
    %2 = vector.load %arg2[%c0_1, %c0_2] : memref<32x1280xbf16, #tpu.memory_space<vmem>>, vector<32x1280xbf16>
    %cst = arith.constant dense<0.000000e+00> : vector<8x1280xf32>
    %3 = tpu.matmul %1, %2, %cst {dimension_numbers = #tpu.dot_dimension_numbers<[1], [0], [0], [1], [0, 0, 1, 1], [], []>} : vector<8x32xbf16>, vector<32x1280xbf16>, vector<8x1280xf32> -> vector<8x1280xf32>
    %c0_3 = arith.constant 0 : index
    %c0_4 = arith.constant 0 : index
    %4 = vector.load %arg3[%c0_3, %c0_4] : memref<1x1280xf32, #tpu.memory_space<vmem>>, vector<1x1280xf32>
    %5 = vector.broadcast %4 : vector<1x1280xf32> to vector<8x1280xf32>
    %6 = arith.addf %3, %5 : vector<8x1280xf32>
    %cst_5 = arith.constant 0.000000e+00 : f32
    %7 = vector.broadcast %cst_5 : f32 to vector<8x1280xf32>
    %8 = arith.maximumf %6, %7 : vector<8x1280xf32>
    %9 = arith.truncf %8 : vector<8x1280xf32> to vector<8x1280xbf16>
    %c0_6 = arith.constant 0 : index
    %c0_7 = arith.constant 0 : index
    %10 = vector.load %arg4[%c0_6, %c0_7] : memref<1280x512xbf16, #tpu.memory_space<vmem>>, vector<1280x512xbf16>
    %cst_8 = arith.constant dense<0.000000e+00> : vector<8x512xf32>
    %11 = tpu.matmul %9, %10, %cst_8 {dimension_numbers = #tpu.dot_dimension_numbers<[1], [0], [0], [1], [0, 0, 1, 1], [], []>} : vector<8x1280xbf16>, vector<1280x512xbf16>, vector<8x512xf32> -> vector<8x512xf32>
    %c0_9 = arith.constant 0 : index
    %c0_10 = arith.constant 0 : index
    %12 = vector.load %arg5[%c0_9, %c0_10] : memref<1x512xf32, #tpu.memory_space<vmem>>, vector<1x512xf32>
    %13 = vector.broadcast %12 : vector<1x512xf32> to vector<8x512xf32>
    %14 = arith.addf %11, %13 : vector<8x512xf32>
    %cst_11 = arith.constant 0.000000e+00 : f32
    %15 = vector.broadcast %cst_11 : f32 to vector<8x512xf32>
    %16 = arith.maximumf %14, %15 : vector<8x512xf32>
    %17 = arith.truncf %16 : vector<8x512xf32> to vector<8x512xbf16>
    %c0_12 = arith.constant 0 : index
    %c0_13 = arith.constant 0 : index
    %18 = vector.load %arg6[%c0_12, %c0_13] : memref<512x256xbf16, #tpu.memory_space<vmem>>, vector<512x256xbf16>
    %cst_14 = arith.constant dense<0.000000e+00> : vector<8x256xf32>
    %19 = tpu.matmul %17, %18, %cst_14 {dimension_numbers = #tpu.dot_dimension_numbers<[1], [0], [0], [1], [0, 0, 1, 1], [], []>} : vector<8x512xbf16>, vector<512x256xbf16>, vector<8x256xf32> -> vector<8x256xf32>
    %c0_15 = arith.constant 0 : index
    %c0_16 = arith.constant 0 : index
    %20 = vector.load %arg7[%c0_15, %c0_16] : memref<1x256xf32, #tpu.memory_space<vmem>>, vector<1x256xf32>
    %21 = vector.broadcast %20 : vector<1x256xf32> to vector<8x256xf32>
    %22 = arith.addf %19, %21 : vector<8x256xf32>
    %cst_17 = arith.constant 0.000000e+00 : f32
    %23 = vector.broadcast %cst_17 : f32 to vector<8x256xf32>
    %24 = arith.maximumf %22, %23 : vector<8x256xf32>
    %25 = arith.truncf %24 : vector<8x256xf32> to vector<8x256xbf16>
    %c0_18 = arith.constant 0 : index
    %c0_19 = arith.constant 0 : index
    %26 = vector.load %arg8[%c0_18, %c0_19] : memref<256x128xbf16, #tpu.memory_space<vmem>>, vector<256x128xbf16>
    %cst_20 = arith.constant dense<0.000000e+00> : vector<8x128xf32>
    %27 = tpu.matmul %25, %26, %cst_20 {dimension_numbers = #tpu.dot_dimension_numbers<[1], [0], [0], [1], [0, 0, 1, 1], [], []>} : vector<8x256xbf16>, vector<256x128xbf16>, vector<8x128xf32> -> vector<8x128xf32>
    %c0_21 = arith.constant 0 : index
    %c0_22 = arith.constant 0 : index
    %28 = vector.load %arg9[%c0_21, %c0_22] : memref<1x128xf32, #tpu.memory_space<vmem>>, vector<1x128xf32>
    %29 = vector.broadcast %28 : vector<1x128xf32> to vector<8x128xf32>
    %30 = arith.addf %27, %29 : vector<8x128xf32>
    %c0_23 = arith.constant 0 : index
    %c0_24 = arith.constant 0 : index
    %31 = vector.load %arg10[%c0_23, %c0_24] : memref<8x128xf32, #tpu.memory_space<vmem>>, vector<8x128xf32>
    tpu.vector_store %arg10[%c0_23, %c0_24], %30 {strides = array<i32>} : memref<8x128xf32, #tpu.memory_space<vmem>>, vector<8x128xf32>,
    return
  }
  func.func @transform_0(%arg0: i32) -> (i32, i32) {
    %c0_i32 = arith.constant 0 : i32
    %c0_i32_0 = arith.constant 0 : i32
    return %arg0, %c0_i32 : i32, i32
  }
  func.func @transform_1(%arg0: i32) -> (i32, i32) {
    %c0_i32 = arith.constant 0 : i32
    %c0_i32_0 = arith.constant 0 : i32
    %c0_i32_1 = arith.constant 0 : i32
    return %c0_i32, %c0_i32_0 : i32, i32
  }
  func.func @transform_2(%arg0: i32) -> (i32, i32) {
    %c0_i32 = arith.constant 0 : i32
    %c0_i32_0 = arith.constant 0 : i32
    %c0_i32_1 = arith.constant 0 : i32
    return %c0_i32, %c0_i32_0 : i32, i32
  }
  func.func @transform_3(%arg0: i32) -> (i32, i32) {
    %c0_i32 = arith.constant 0 : i32
    %c0_i32_0 = arith.constant 0 : i32
    %c0_i32_1 = arith.constant 0 : i32
    return %c0_i32, %c0_i32_0 : i32, i32
  }
  func.func @transform_4(%arg0: i32) -> (i32, i32) {
    %c0_i32 = arith.constant 0 : i32
    %c0_i32_0 = arith.constant 0 : i32
    %c0_i32_1 = arith.constant 0 : i32
    return %c0_i32, %c0_i32_0 : i32, i32
  }
  func.func @transform_5(%arg0: i32) -> (i32, i32) {
    %c0_i32 = arith.constant 0 : i32
    %c0_i32_0 = arith.constant 0 : i32
    %c0_i32_1 = arith.constant 0 : i32
    return %c0_i32, %c0_i32_0 : i32, i32
  }
  func.func @transform_6(%arg0: i32) -> (i32, i32) {
    %c0_i32 = arith.constant 0 : i32
    %c0_i32_0 = arith.constant 0 : i32
    %c0_i32_1 = arith.constant 0 : i32
    return %c0_i32, %c0_i32_0 : i32, i32
  }
  func.func @transform_7(%arg0: i32) -> (i32, i32) {
    %c0_i32 = arith.constant 0 : i32
    %c0_i32_0 = arith.constant 0 : i32
    %c0_i32_1 = arith.constant 0 : i32
    return %c0_i32, %c0_i32_0 : i32, i32
  }
  func.func @transform_8(%arg0: i32) -> (i32, i32) {
    %c0_i32 = arith.constant 0 : i32
    %c0_i32_0 = arith.constant 0 : i32
    %c0_i32_1 = arith.constant 0 : i32
    return %c0_i32, %c0_i32_0 : i32, i32
  }
  func.func @transform_9(%arg0: i32) -> (i32, i32) {
    %c0_i32 = arith.constant 0 : i32
    %c0_i32_0 = arith.constant 0 : i32
    return %arg0, %c0_i32 : i32, i32
  }
}

module attributes {stable_mosaic.version = 11 : i64} {
  func.func @_value_net_kernel(%arg0: i32, %arg1: memref<8x32xf32, #tpu.memory_space<vmem>>, %arg2: memref<32x1280xbf16, #tpu.memory_space<vmem>>, %arg3: memref<1x1280xf32, #tpu.memory_space<vmem>>, %arg4: memref<1280x512xbf16, #tpu.memory_space<vmem>>, %arg5: memref<1x512xf32, #tpu.memory_space<vmem>>, %arg6: memref<512x256xbf16, #tpu.memory_space<vmem>>, %arg7: memref<1x256xf32, #tpu.memory_space<vmem>>, %arg8: memref<256x128xbf16, #tpu.memory_space<vmem>>, %arg9: memref<1x128xf32, #tpu.memory_space<vmem>>, %arg10: memref<8x128xf32, #tpu.memory_space<vmem>>) attributes {dimension_semantics = [#tpu.dimension_semantics<parallel>], iteration_bounds = array<i64: 1>, scalar_prefetch = 0 : i64, scratch_operands = 0 : i64, tpu.core_type = #tpu.core_type<tc>, window_params = [{transform_indices = @transform_0, window_bounds = array<i64: 8, 32>}, {pipeline_mode = #tpu.pipeline_mode<synchronous>, transform_indices = @transform_1, window_bounds = array<i64: 32, 1280>}, {pipeline_mode = #tpu.pipeline_mode<synchronous>, transform_indices = @transform_2, window_bounds = array<i64: 1, 1280>}, {pipeline_mode = #tpu.pipeline_mode<synchronous>, transform_indices = @transform_3, window_bounds = array<i64: 1280, 512>}, {pipeline_mode = #tpu.pipeline_mode<synchronous>, transform_indices = @transform_4, window_bounds = array<i64: 1, 512>}, {pipeline_mode = #tpu.pipeline_mode<synchronous>, transform_indices = @transform_5, window_bounds = array<i64: 512, 256>}, {pipeline_mode = #tpu.pipeline_mode<synchronous>, transform_indices = @transform_6, window_bounds = array<i64: 1, 256>}, {pipeline_mode = #tpu.pipeline_mode<synchronous>, transform_indices = @transform_7, window_bounds = array<i64: 256, 128>}, {pipeline_mode = #tpu.pipeline_mode<synchronous>, transform_indices = @transform_8, window_bounds = array<i64: 1, 128>}, {transform_indices = @transform_9, window_bounds = array<i64: 8, 128>}]} {
    %c0 = arith.constant 0 : index
    %c0_0 = arith.constant 0 : index
    %0 = vector.load %arg1[%c0, %c0_0] : memref<8x32xf32, #tpu.memory_space<vmem>>, vector<8x32xf32>
    %1 = arith.truncf %0 : vector<8x32xf32> to vector<8x32xbf16>
    %c0_1 = arith.constant 0 : index
    %c0_2 = arith.constant 0 : index
    %2 = vector.load %arg2[%c0_1, %c0_2] : memref<32x1280xbf16, #tpu.memory_space<vmem>>, vector<32x1280xbf16>
    %cst = arith.constant dense<0.000000e+00> : vector<8x1280xf32>
    %3 = tpu.matmul %1, %2, %cst {dimension_numbers = #tpu.dot_dimension_numbers<[1], [0], [0], [1], [0, 0, 1, 1], [], []>} : vector<8x32xbf16>, vector<32x1280xbf16>, vector<8x1280xf32> -> vector<8x1280xf32>
    %c0_3 = arith.constant 0 : index
    %c0_4 = arith.constant 0 : index
    %4 = vector.load %arg3[%c0_3, %c0_4] : memref<1x1280xf32, #tpu.memory_space<vmem>>, vector<1x1280xf32>
    %5 = vector.broadcast %4 : vector<1x1280xf32> to vector<8x1280xf32>
    %6 = arith.addf %3, %5 : vector<8x1280xf32>
    %cst_5 = arith.constant 0.000000e+00 : f32
    %7 = vector.broadcast %cst_5 : f32 to vector<8x1280xf32>
    %8 = arith.maximumf %6, %7 : vector<8x1280xf32>
    %9 = arith.truncf %8 : vector<8x1280xf32> to vector<8x1280xbf16>
    %c0_6 = arith.constant 0 : index
    %c0_7 = arith.constant 0 : index
    %10 = vector.load %arg4[%c0_6, %c0_7] : memref<1280x512xbf16, #tpu.memory_space<vmem>>, vector<1280x512xbf16>
    %cst_8 = arith.constant dense<0.000000e+00> : vector<8x512xf32>
    %11 = tpu.matmul %9, %10, %cst_8 {dimension_numbers = #tpu.dot_dimension_numbers<[1], [0], [0], [1], [0, 0, 1, 1], [], []>} : vector<8x1280xbf16>, vector<1280x512xbf16>, vector<8x512xf32> -> vector<8x512xf32>
    %c0_9 = arith.constant 0 : index
    %c0_10 = arith.constant 0 : index
    %12 = vector.load %arg5[%c0_9, %c0_10] : memref<1x512xf32, #tpu.memory_space<vmem>>, vector<1x512xf32>
    %13 = vector.broadcast %12 : vector<1x512xf32> to vector<8x512xf32>
    %14 = arith.addf %11, %13 : vector<8x512xf32>
    %cst_11 = arith.constant 0.000000e+00 : f32
    %15 = vector.broadcast %cst_11 : f32 to vector<8x512xf32>
    %16 = arith.maximumf %14, %15 : vector<8x512xf32>
    %17 = arith.truncf %16 : vector<8x512xf32> to vector<8x512xbf16>
    %c0_12 = arith.constant 0 : index
    %c0_13 = arith.constant 0 : index
    %18 = vector.load %arg6[%c0_12, %c0_13] : memref<512x256xbf16, #tpu.memory_space<vmem>>, vector<512x256xbf16>
    %cst_14 = arith.constant dense<0.000000e+00> : vector<8x256xf32>
    %19 = tpu.matmul %17, %18, %cst_14 {dimension_numbers = #tpu.dot_dimension_numbers<[1], [0], [0], [1], [0, 0, 1, 1], [], []>} : vector<8x512xbf16>, vector<512x256xbf16>, vector<8x256xf32> -> vector<8x256xf32>
    %c0_15 = arith.constant 0 : index
    %c0_16 = arith.constant 0 : index
    %20 = vector.load %arg7[%c0_15, %c0_16] : memref<1x256xf32, #tpu.memory_space<vmem>>, vector<1x256xf32>
    %21 = vector.broadcast %20 : vector<1x256xf32> to vector<8x256xf32>
    %22 = arith.addf %19, %21 : vector<8x256xf32>
    %cst_17 = arith.constant 0.000000e+00 : f32
    %23 = vector.broadcast %cst_17 : f32 to vector<8x256xf32>
    %24 = arith.maximumf %22, %23 : vector<8x256xf32>
    %25 = arith.truncf %24 : vector<8x256xf32> to vector<8x256xbf16>
    %c0_18 = arith.constant 0 : index
    %c0_19 = arith.constant 0 : index
    %26 = vector.load %arg8[%c0_18, %c0_19] : memref<256x128xbf16, #tpu.memory_space<vmem>>, vector<256x128xbf16>
    %cst_20 = arith.constant dense<0.000000e+00> : vector<8x128xf32>
    %27 = tpu.matmul %25, %26, %cst_20 {dimension_numbers = #tpu.dot_dimension_numbers<[1], [0], [0], [1], [0, 0, 1, 1], [], []>} : vector<8x256xbf16>, vector<256x128xbf16>, vector<8x128xf32> -> vector<8x128xf32>
    %c0_21 = arith.constant 0 : index
    %c0_22 = arith.constant 0 : index
    %28 = vector.load %arg9[%c0_21, %c0_22] : memref<1x128xf32, #tpu.memory_space<vmem>>, vector<1x128xf32>
    %29 = vector.broadcast %28 : vector<1x128xf32> to vector<8x128xf32>
    %30 = arith.addf %27, %29 : vector<8x128xf32>
    %c0_23 = arith.constant 0 : index
    %c0_24 = arith.constant 0 : index
    %31 = vector.load %arg10[%c0_23, %c0_24] : memref<8x128xf32, #tpu.memory_space<vmem>>, vector<8x128xf32>
    tpu.vector_store %arg10[%c0_23, %c0_24], %30 {strides = array<i32>} : memref<8x128xf32, #tpu.memory_space<vmem>>, vector<8x128xf32>,
    return
  }
  func.func @transform_0(%arg0: i32) -> (i32, i32) {
    %c0_i32 = arith.constant 0 : i32
    %c0_i32_0 = arith.constant 0 : i32
    return %arg0, %c0_i32 : i32, i32
  }
  func.func @transform_1(%arg0: i32) -> (i32, i32) {
    %c0_i32 = arith.constant 0 : i32
    %c0_i32_0 = arith.constant 0 : i32
    %c0_i32_1 = arith.constant 0 : i32
    return %c0_i32, %c0_i32_0 : i32, i32
  }
  func.func @transform_2(%arg0: i32) -> (i32, i32) {
    %c0_i32 = arith.constant 0 : i32
    %c0_i32_0 = arith.constant 0 : i32
    %c0_i32_1 = arith.constant 0 : i32
    return %c0_i32, %c0_i32_0 : i32, i32
  }
  func.func @transform_3(%arg0: i32) -> (i32, i32) {
    %c0_i32 = arith.constant 0 : i32
    %c0_i32_0 = arith.constant 0 : i32
    %c0_i32_1 = arith.constant 0 : i32
    return %c0_i32, %c0_i32_0 : i32, i32
  }
  func.func @transform_4(%arg0: i32) -> (i32, i32) {
    %c0_i32 = arith.constant 0 : i32
    %c0_i32_0 = arith.constant 0 : i32
    %c0_i32_1 = arith.constant 0 : i32
    return %c0_i32, %c0_i32_0 : i32, i32
  }
  func.func @transform_5(%arg0: i32) -> (i32, i32) {
    %c0_i32 = arith.constant 0 : i32
    %c0_i32_0 = arith.constant 0 : i32
    %c0_i32_1 = arith.constant 0 : i32
    return %c0_i32, %c0_i32_0 : i32, i32
  }
  func.func @transform_6(%arg0: i32) -> (i32, i32) {
    %c0_i32 = arith.constant 0 : i32
    %c0_i32_0 = arith.constant 0 : i32
    %c0_i32_1 = arith.constant 0 : i32
    return %c0_i32, %c0_i32_0 : i32, i32
  }
  func.func @transform_7(%arg0: i32) -> (i32, i32) {
    %c0_i32 = arith.constant 0 : i32
    %c0_i32_0 = arith.constant 0 : i32
    %c0_i32_1 = arith.constant 0 : i32
    return %c0_i32, %c0_i32_0 : i32, i32
  }
  func.func @transform_8(%arg0: i32) -> (i32, i32) {
    %c0_i32 = arith.constant 0 : i32
    %c0_i32_0 = arith.constant 0 : i32
    %c0_i32_1 = arith.constant 0 : i32
    return %c0_i32, %c0_i32_0 : i32, i32
  }
  func.func @transform_9(%arg0: i32) -> (i32, i32) {
    %c0_i32 = arith.constant 0 : i32
    %c0_i32_0 = arith.constant 0 : i32
    return %arg0, %c0_i32 : i32, i32
  }
}

</mosaic_0001>

<llo_original>
// kernel: tpu_custom_call.1
$region0: #{tpu_custom_call.1}
  #allocation0 [shape = 'u32[]', space=smem, size = 0x4, offset = 0x4, fixed_abs, tag = 'smem constant byte address 0x4 - core index']
  #allocation1 [shape = 'u32[144,128]{1,0:T(1,128)}', space=vmem, size = 0x12000, scoped, tag = 'internal scratch']
  %s0 = inlined_call_operand.hbm [shape: f32[8,32], index: 0, kind: input, shape index: {}]
  %s1 = inlined_call_operand.hbm [shape: bf16[32,1280], index: 1, kind: input, shape index: {}]
  %s2 = inlined_call_operand.hbm [shape: f32[1,1280], index: 2, kind: input, shape index: {}]
  %s3 = inlined_call_operand.hbm [shape: bf16[1280,512], index: 3, kind: input, shape index: {}]
  %s4 = inlined_call_operand.hbm [shape: f32[1,512], index: 4, kind: input, shape index: {}]
  %s5 = inlined_call_operand.hbm [shape: bf16[512,256], index: 5, kind: input, shape index: {}]
  %s6 = inlined_call_operand.hbm [shape: f32[1,256], index: 6, kind: input, shape index: {}]
  %s7 = inlined_call_operand.hbm [shape: bf16[256,128], index: 7, kind: input, shape index: {}]
  %s8 = inlined_call_operand.hbm [shape: f32[1,128], index: 8, kind: input, shape index: {}]
  %s9 = inlined_call_operand.hbm [shape: f32[8,128], index: 9, kind: output, shape index: {}]
  %s10 = sld [smem:[#allocation0]]
  $region82: #{tpu_custom_call.1} parent=0
    _
  %s12 = ssub.s32 1, %s10
  %s13 = scalar_select 0, %s12, %s10
  $region1: #{tpu_custom_call.1} parent=0
    #allocation2 [shape = 'u8[4096]{0}', space=vmem, size = 0x1000, scoped, tag = 'input window, operand 0, single buffered']
    #allocation3 [shape = 's32[1]{0}', space=sflag, size = 0x4, scoped, tag = 'scoped memory for tpu_custom_call.1']
    #allocation4 [shape = 's32[1]{0}', space=sflag, size = 0x4, scoped, tag = 'scoped memory for tpu_custom_call.1']
    #allocation5 [shape = 'u8[81920]{0}', space=vmem, size = 0x14000, scoped, tag = 'input window, operand 1, single buffered']
    #allocation6 [shape = 's32[1]{0}', space=sflag, size = 0x4, scoped, tag = 'scoped memory for tpu_custom_call.1']
    #allocation7 [shape = 'u8[5120]{0}', space=vmem, size = 0x1400, scoped, tag = 'input window, operand 2, single buffered']
    #allocation8 [shape = 'u8[1310720]{0}', space=vmem, size = 0x140000, scoped, tag = 'input window, operand 3, single buffered']
    #allocation9 [shape = 's32[1]{0}', space=sflag, size = 0x4, scoped, tag = 'scoped memory for tpu_custom_call.1']
    #allocation10 [shape = 'u8[2048]{0}', space=vmem, size = 0x800, scoped, tag = 'input window, operand 4, single buffered']
    #allocation11 [shape = 'u8[262144]{0}', space=vmem, size = 0x40000, scoped, tag = 'input window, operand 5, single buffered']
    #allocation12 [shape = 's32[1]{0}', space=sflag, size = 0x4, scoped, tag = 'scoped memory for tpu_custom_call.1']
    #allocation13 [shape = 'u8[1024]{0}', space=vmem, size = 0x400, scoped, tag = 'input window, operand 6, single buffered']
    #allocation14 [shape = 'u8[65536]{0}', space=vmem, size = 0x10000, scoped, tag = 'input window, operand 7, single buffered']
    #allocation15 [shape = 's32[1]{0}', space=sflag, size = 0x4, scoped, tag = 'scoped memory for tpu_custom_call.1']
    #allocation16 [shape = 'u8[512]{0}', space=vmem, size = 0x400, scoped, tag = 'input window, operand 8, single buffered']
    #allocation17 [shape = 'u8[4096]{0}', space=vmem, size = 0x1000, scoped, tag = 'output window, operand 0, single buffered']
    %14 = vsyncpa [#allocation3], 0
    %15 = vsyncpa [#allocation6], 0
    %16 = vsyncpa [#allocation9], 0
    %17 = vsyncpa [#allocation12], 0
    %18 = vsyncpa [#allocation15], 0
    %19 = vsyncpa [#allocation4], 0
    // Predicated region
    $region2: #{tpu_custom_call.1} parent=1 // pred_check
      _
    $region3: #{tpu_custom_call.1} parent=1 // pred_check_branch
      %21 = sbr.rel (0) target = $region5
    $region4: #{tpu_custom_call.1} parent=1 // pred_region
      %s23 = ssub.s32 128, 128
      %24 = vsyncadd [#allocation3], %s23
      %s26 = sshll.u32 [#allocation2], 4
      %s27 = int_to_ptr.vmem [resolvable:$true] %s26
      %29 = dma.hbm_to_vmem [thread:$0]  %s0, 128, %s27, [#allocation3]
    $region5: #{tpu_custom_call.1} parent=1 // pred_fallthru
      _
    // Predicated region
    $region6: #{tpu_custom_call.1} parent=1 // pred_check
      _
    $region7: #{tpu_custom_call.1} parent=1 // pred_check_branch
      %31 = sbr.rel (0) target = $region9
    $region8: #{tpu_custom_call.1} parent=1 // pred_region
      %s33 = ssub.s32 2560, 2560
      %34 = vsyncadd [#allocation6], %s33
      %s35 = sshll.u32 [#allocation5], 4
      %s36 = int_to_ptr.vmem [resolvable:$true] %s35
      %41 = dma.hbm_to_vmem [thread:$0]  %s1, 2560, %s36, [#allocation6], 640, 640, 40
    $region9: #{tpu_custom_call.1} parent=1 // pred_fallthru
      _
    // Predicated region
    $region10: #{tpu_custom_call.1} parent=1 // pred_check
      _
    $region11: #{tpu_custom_call.1} parent=1 // pred_check_branch
      %43 = sbr.rel (0) target = $region13
    $region12: #{tpu_custom_call.1} parent=1 // pred_region
      %s45 = ssub.s32 160, 160
      %46 = vsyncadd [#allocation6], %s45
      %s48 = sshll.u32 [#allocation7], 4
      %s49 = int_to_ptr.vmem [resolvable:$true] %s48
      %51 = dma.hbm_to_vmem [thread:$0]  %s2, 160, %s49, [#allocation6]
    $region13: #{tpu_custom_call.1} parent=1 // pred_fallthru
      _
    // Predicated region
    $region14: #{tpu_custom_call.1} parent=1 // pred_check
      _
    $region15: #{tpu_custom_call.1} parent=1 // pred_check_branch
      %53 = sbr.rel (0) target = $region17
    $region16: #{tpu_custom_call.1} parent=1 // pred_region
      %s55 = ssub.s32 40960, 40960
      %56 = vsyncadd [#allocation9], %s55
      %s57 = sshll.u32 [#allocation8], 4
      %s58 = int_to_ptr.vmem [resolvable:$true] %s57
      %63 = dma.hbm_to_vmem [thread:$0]  %s3, 40960, %s58, [#allocation9], 256, 256, 16
    $region17: #{tpu_custom_call.1} parent=1 // pred_fallthru
      _
    // Predicated region
    $region18: #{tpu_custom_call.1} parent=1 // pred_check
      _
    $region19: #{tpu_custom_call.1} parent=1 // pred_check_branch
      %65 = sbr.rel (0) target = $region21
    $region20: #{tpu_custom_call.1} parent=1 // pred_region
      %s67 = ssub.s32 64, 64
      %68 = vsyncadd [#allocation9], %s67
      %s70 = sshll.u32 [#allocation10], 4
      %s71 = int_to_ptr.vmem [resolvable:$true] %s70
      %73 = dma.hbm_to_vmem [thread:$0]  %s4, 64, %s71, [#allocation9]
    $region21: #{tpu_custom_call.1} parent=1 // pred_fallthru
      _
    // Predicated region
    $region22: #{tpu_custom_call.1} parent=1 // pred_check
      _
    $region23: #{tpu_custom_call.1} parent=1 // pred_check_branch
      %75 = sbr.rel (0) target = $region25
    $region24: #{tpu_custom_call.1} parent=1 // pred_region
      %s77 = ssub.s32 8192, 8192
      %78 = vsyncadd [#allocation12], %s77
      %s79 = sshll.u32 [#allocation11], 4
      %s80 = int_to_ptr.vmem [resolvable:$true] %s79
      %85 = dma.hbm_to_vmem [thread:$0]  %s5, 8192, %s80, [#allocation12], 128, 128, 8
    $region25: #{tpu_custom_call.1} parent=1 // pred_fallthru
      _
    // Predicated region
    $region26: #{tpu_custom_call.1} parent=1 // pred_check
      _
    $region27: #{tpu_custom_call.1} parent=1 // pred_check_branch
      %87 = sbr.rel (0) target = $region29
    $region28: #{tpu_custom_call.1} parent=1 // pred_region
      %s89 = ssub.s32 32, 32
      %90 = vsyncadd [#allocation12], %s89
      %s92 = sshll.u32 [#allocation13], 4
      %s93 = int_to_ptr.vmem [resolvable:$true] %s92
      %95 = dma.hbm_to_vmem [thread:$0]  %s6, 32, %s93, [#allocation12]
    $region29: #{tpu_custom_call.1} parent=1 // pred_fallthru
      _
    // Predicated region
    $region30: #{tpu_custom_call.1} parent=1 // pred_check
      _
    $region31: #{tpu_custom_call.1} parent=1 // pred_check_branch
      %97 = sbr.rel (0) target = $region33
    $region32: #{tpu_custom_call.1} parent=1 // pred_region
      %s99 = ssub.s32 2048, 2048
      %100 = vsyncadd [#allocation15], %s99
      %s101 = sshll.u32 [#allocation14], 4
      %s102 = int_to_ptr.vmem [resolvable:$true] %s101
      %107 = dma.hbm_to_vmem [thread:$0]  %s7, 2048, %s102, [#allocation15], 64, 64, 4
    $region33: #{tpu_custom_call.1} parent=1 // pred_fallthru
      _
    // Predicated region
    $region34: #{tpu_custom_call.1} parent=1 // pred_check
      _
    $region35: #{tpu_custom_call.1} parent=1 // pred_check_branch
      %109 = sbr.rel (0) target = $region37
    $region36: #{tpu_custom_call.1} parent=1 // pred_region
      %s111 = ssub.s32 16, 16
      %112 = vsyncadd [#allocation15], %s111
      %s114 = sshll.u32 [#allocation16], 4
      %s115 = int_to_ptr.vmem [resolvable:$true] %s114
      %117 = dma.hbm_to_vmem [thread:$0]  %s8, 16, %s115, [#allocation15]
    $region37: #{tpu_custom_call.1} parent=1 // pred_fallthru
      _
    // Predicated region
    $region38: #{tpu_custom_call.1} parent=1 // pred_check
      _
    $region39: #{tpu_custom_call.1} parent=1 // pred_check_branch
      %119 = sbr.rel (0) target = $region41
    $region40: #{tpu_custom_call.1} parent=1 // pred_region
      %120 = dma.done [#allocation3], 128
    $region41: #{tpu_custom_call.1} parent=1 // pred_fallthru
      _
    // Predicated region
    $region42: #{tpu_custom_call.1} parent=1 // pred_check
      _
    $region43: #{tpu_custom_call.1} parent=1 // pred_check_branch
      %122 = sbr.rel (0) target = $region45
    $region44: #{tpu_custom_call.1} parent=1 // pred_region
      %123 = dma.done [#allocation6], 2560
    $region45: #{tpu_custom_call.1} parent=1 // pred_fallthru
      _
    // Predicated region
    $region46: #{tpu_custom_call.1} parent=1 // pred_check
      _
    $region47: #{tpu_custom_call.1} parent=1 // pred_check_branch
      %125 = sbr.rel (0) target = $region49
    $region48: #{tpu_custom_call.1} parent=1 // pred_region
      %126 = dma.done [#allocation6], 160
    $region49: #{tpu_custom_call.1} parent=1 // pred_fallthru
      _
    // Predicated region
    $region50: #{tpu_custom_call.1} parent=1 // pred_check
      _
    $region51: #{tpu_custom_call.1} parent=1 // pred_check_branch
      %128 = sbr.rel (0) target = $region53
    $region52: #{tpu_custom_call.1} parent=1 // pred_region
      %129 = dma.done [#allocation9], 40960
    $region53: #{tpu_custom_call.1} parent=1 // pred_fallthru
      _
    // Predicated region
    $region54: #{tpu_custom_call.1} parent=1 // pred_check
      _
    $region55: #{tpu_custom_call.1} parent=1 // pred_check_branch
      %131 = sbr.rel (0) target = $region57
    $region56: #{tpu_custom_call.1} parent=1 // pred_region
      %132 = dma.done [#allocation9], 64
    $region57: #{tpu_custom_call.1} parent=1 // pred_fallthru
      _
    // Predicated region
    $region58: #{tpu_custom_call.1} parent=1 // pred_check
      _
    $region59: #{tpu_custom_call.1} parent=1 // pred_check_branch
      %134 = sbr.rel (0) target = $region61
    $region60: #{tpu_custom_call.1} parent=1 // pred_region
      %135 = dma.done [#allocation12], 8192
    $region61: #{tpu_custom_call.1} parent=1 // pred_fallthru
      _
    // Predicated region
    $region62: #{tpu_custom_call.1} parent=1 // pred_check
      _
    $region63: #{tpu_custom_call.1} parent=1 // pred_check_branch
      %137 = sbr.rel (0) target = $region65
    $region64: #{tpu_custom_call.1} parent=1 // pred_region
      %138 = dma.done [#allocation12], 32
    $region65: #{tpu_custom_call.1} parent=1 // pred_fallthru
      _
    // Predicated region
    $region66: #{tpu_custom_call.1} parent=1 // pred_check
      _
    $region67: #{tpu_custom_call.1} parent=1 // pred_check_branch
      %140 = sbr.rel (0) target = $region69
    $region68: #{tpu_custom_call.1} parent=1 // pred_region
      %141 = dma.done [#allocation15], 2048
    $region69: #{tpu_custom_call.1} parent=1 // pred_fallthru
      _
    // Predicated region
    $region70: #{tpu_custom_call.1} parent=1 // pred_check
      _
    $region71: #{tpu_custom_call.1} parent=1 // pred_check_branch
      %143 = sbr.rel (0) target = $region73
    $region72: #{tpu_custom_call.1} parent=1 // pred_region
      %144 = dma.done [#allocation15], 16
    $region73: #{tpu_custom_call.1} parent=1 // pred_fallthru
      _
    %v146 = vld [vmem:[#allocation2] sm:$0xff]
    %v147 = vpack.c.bf16 %v146, %v146
    %v148 = vld [vmem:[#allocation5] sm:$0xff]
    %v149 = vld [vmem:[#allocation5 + $0x8] sm:$0xff]
    %v150 = vld [vmem:[#allocation5 + $0x10] sm:$0xff]
    %v151 = vld [vmem:[#allocation5 + $0x18] sm:$0xff]
    %v152 = vld [vmem:[#allocation5 + $0x20] sm:$0xff]
    %v153 = vld [vmem:[#allocation5 + $0x28] sm:$0xff]
    %v154 = vld [vmem:[#allocation5 + $0x30] sm:$0xff]
    %v155 = vld [vmem:[#allocation5 + $0x38] sm:$0xff]
    %v156 = vld [vmem:[#allocation5 + $0x40] sm:$0xff]
    %v157 = vld [vmem:[#allocation5 + $0x48] sm:$0xff]
    %v158 = vld [vmem:[#allocation5 + $0x50] sm:$0xff]
    %v159 = vld [vmem:[#allocation5 + $0x58] sm:$0xff]
    %v160 = vld [vmem:[#allocation5 + $0x60] sm:$0xff]
    %v161 = vld [vmem:[#allocation5 + $0x68] sm:$0xff]
    %v162 = vld [vmem:[#allocation5 + $0x70] sm:$0xff]
    %v163 = vld [vmem:[#allocation5 + $0x78] sm:$0xff]
    %v164 = vld [vmem:[#allocation5 + $0x80] sm:$0xff]
    %v165 = vld [vmem:[#allocation5 + $0x88] sm:$0xff]
    %v166 = vld [vmem:[#allocation5 + $0x90] sm:$0xff]
    %v167 = vld [vmem:[#allocation5 + $0x98] sm:$0xff]
    %v168 = vld [vmem:[#allocation7] sm:$0xff]
    %v169 = vld [vmem:[#allocation7 + $0x8] sm:$0x3]
    %v172 = vlaneseq
    %v173 = vshrl.u32 %v172, 7
    %v174 = vsub.s32 0, %v173
    %v175 = vrot.slane %v168, %v174
    %v176 = vlaneseq
    %v177 = vshrl.u32 %v176, 7
    %v178 = vsub.s32 1, %v177
    %v179 = vrot.slane %v168, %v178
    %v180 = vlaneseq
    %v181 = vshrl.u32 %v180, 7
    %v182 = vsub.s32 2, %v181
    %v183 = vrot.slane %v168, %v182
    %v184 = vlaneseq
    %v185 = vshrl.u32 %v184, 7
    %v186 = vsub.s32 3, %v185
    %v187 = vrot.slane %v168, %v186
    %v188 = vlaneseq
    %v189 = vshrl.u32 %v188, 7
    %v190 = vsub.s32 4, %v189
    %v191 = vrot.slane %v168, %v190
    %v192 = vlaneseq
    %v193 = vshrl.u32 %v192, 7
    %v194 = vsub.s32 5, %v193
    %v195 = vrot.slane %v168, %v194
    %v196 = vlaneseq
    %v197 = vshrl.u32 %v196, 7
    %v198 = vsub.s32 6, %v197
    %v199 = vrot.slane %v168, %v198
    %v200 = vlaneseq
    %v201 = vshrl.u32 %v200, 7
    %v202 = vsub.s32 7, %v201
    %v203 = vrot.slane %v168, %v202
    %v204 = vlaneseq
    %v205 = vshrl.u32 %v204, 7
    %v206 = vsub.s32 0, %v205
    %v207 = vrot.slane %v169, %v206
    %v208 = vlaneseq
    %v209 = vshrl.u32 %v208, 7
    %v210 = vsub.s32 1, %v209
    %v211 = vrot.slane %v169, %v210
    %v242 = vunpack.c.l.b16 %v148
    %v243 = vunpack.c.h.b16 %v148
    %v244 = vunpack.c.l.b16 %v149
    %v245 = vunpack.c.h.b16 %v149
    %v246 = vunpack.c.l.b16 %v150
    %v247 = vunpack.c.h.b16 %v150
    %v248 = vunpack.c.l.b16 %v151
    %v249 = vunpack.c.h.b16 %v151
    %v250 = vunpack.c.l.b16 %v152
    %v251 = vunpack.c.h.b16 %v152
    %v252 = vunpack.c.l.b16 %v153
    %v253 = vunpack.c.h.b16 %v153
    %v254 = vunpack.c.l.b16 %v154
    %v255 = vunpack.c.h.b16 %v154
    %v256 = vunpack.c.l.b16 %v155
    %v257 = vunpack.c.h.b16 %v155
    %v258 = vunpack.c.l.b16 %v156
    %v259 = vunpack.c.h.b16 %v156
    %v260 = vunpack.c.l.b16 %v157
    %v261 = vunpack.c.h.b16 %v157
    %v262 = vunpack.c.l.b16 %v158
    %v263 = vunpack.c.h.b16 %v158
    %v264 = vunpack.c.l.b16 %v159
    %v265 = vunpack.c.h.b16 %v159
    %v266 = vunpack.c.l.b16 %v160
    %v267 = vunpack.c.h.b16 %v160
    %v268 = vunpack.c.l.b16 %v161
    %v269 = vunpack.c.h.b16 %v161
    %v270 = vunpack.c.l.b16 %v162
    %v271 = vunpack.c.h.b16 %v162
    %v272 = vunpack.c.l.b16 %v163
    %v273 = vunpack.c.h.b16 %v163
    %v274 = vunpack.c.l.b16 %v164
    %v275 = vunpack.c.h.b16 %v164
    %v276 = vunpack.c.l.b16 %v165
    %v277 = vunpack.c.h.b16 %v165
    %v278 = vunpack.c.l.b16 %v166
    %v279 = vunpack.c.h.b16 %v166
    %v280 = vunpack.c.l.b16 %v167
    %v281 = vunpack.c.h.b16 %v167
    %v282 = vpack.c.b16 %v252, %v242
    %v283 = vpack.c.b16 %v253, %v243
    %v284 = vpack.c.b16 %v254, %v244
    %v285 = vpack.c.b16 %v255, %v245
    %v286 = vpack.c.b16 %v256, %v246
    %v287 = vpack.c.b16 %v257, %v247
    %v288 = vpack.c.b16 %v258, %v248
    %v289 = vpack.c.b16 %v259, %v249
    %v290 = vpack.c.b16 %v260, %v250
    %v291 = vpack.c.b16 %v261, %v251
    %v292 = vpack.c.b16 %v272, %v262
    %v293 = vpack.c.b16 %v273, %v263
    %v294 = vpack.c.b16 %v274, %v264
    %v295 = vpack.c.b16 %v275, %v265
    %v296 = vpack.c.b16 %v276, %v266
    %v297 = vpack.c.b16 %v277, %v267
    %v298 = vpack.c.b16 %v278, %v268
    %v299 = vpack.c.b16 %v279, %v269
    %v300 = vpack.c.b16 %v280, %v270
    %v301 = vpack.c.b16 %v281, %v271
    %vm322 = vcmask 261120
    %v324 = vsel %vm322, %v147, 0
    %326 = vmatprep.subr.bf16.mxu0 %v283
    %327 = vmatpush1.bf16.msra.mxu0 %v282
    %328 = vmatprep.subr.bf16.mxu0 %v293
    %329 = vmatpush1.bf16.msra.mxu0 %v292
    %330 = vmatprep.subr.bf16.mxu0 0
    %331 = vmatpush1.bf16.msra.mxu0 0
    %332 = vmatprep.subr.bf16.mxu0 0
    %333 = vmatpush1.bf16.msra.mxu0 0
    %334 = vmatprep.subr.bf16.mxu0 0
    %335 = vmatpush1.bf16.msra.mxu0 0
    %336 = vmatprep.subr.bf16.mxu0 0
    %337 = vmatpush1.bf16.msra.mxu0 0
    %338 = vmatprep.subr.bf16.mxu0 0
    %339 = vmatpush1.bf16.msra.mxu0 0
    %340 = vmatprep.subr.bf16.mxu0 0
    %341 = vmatpush1.bf16.msra.mxu0 0
    %342 = vmatprep.subr.bf16.mxu0 0
    %343 = vmatpush1.bf16.msra.mxu0 0
    %344 = vmatprep.subr.bf16.mxu0 0
    %345 = vmatpush1.bf16.msra.mxu0 0
    %346 = vmatprep.subr.bf16.mxu0 0
    %347 = vmatpush1.bf16.msra.mxu0 0
    %348 = vmatprep.subr.bf16.mxu0 0
    %349 = vmatpush1.bf16.msra.mxu0 0
    %350 = vmatprep.subr.bf16.mxu0 0
    %351 = vmatpush1.bf16.msra.mxu0 0
    %352 = vmatprep.subr.bf16.mxu0 0
    %353 = vmatpush1.bf16.msra.mxu0 0
    %354 = vmatprep.subr.bf16.mxu0 0
    %355 = vmatpush1.bf16.msra.mxu0 0
    %356 = vmatprep.subr.bf16.mxu0 0
    %357 = vmatpush1.bf16.msra.mxu0 0
    %358 = vmatprep.mubr.bf16.mxu0 0
    %359 = vmatmul.mubr.bf16.gmra.mrb[0].mxu0 %v324
    %v360 = vpop.f32.mrb[0].mxu0
    %v361 = vadd.f32 %v175, %v360
    %v362 = vpop.f32.mrb[0].mxu0
    %v363 = vadd.f32 %v179, %v362
    %v364 = vpop.f32.mrb[0].mxu0
    %v365 = vpop.f32.mrb[0].mxu0
    %366 = vdwg.mxu0
    %367 = vmatprep.subr.bf16.mxu0 %v285
    %368 = vmatpush1.bf16.msra.mxu0 %v284
    %369 = vmatprep.subr.bf16.mxu0 %v295
    %370 = vmatpush1.bf16.msra.mxu0 %v294
    %371 = vmatprep.subr.bf16.mxu0 0
    %372 = vmatpush1.bf16.msra.mxu0 0
    %373 = vmatprep.subr.bf16.mxu0 0
    %374 = vmatpush1.bf16.msra.mxu0 0
    %375 = vmatprep.subr.bf16.mxu0 0
    %376 = vmatpush1.bf16.msra.mxu0 0
    %377 = vmatprep.subr.bf16.mxu0 0
    %378 = vmatpush1.bf16.msra.mxu0 0
    %379 = vmatprep.subr.bf16.mxu0 0
    %380 = vmatpush1.bf16.msra.mxu0 0
    %381 = vmatprep.subr.bf16.mxu0 0
    %382 = vmatpush1.bf16.msra.mxu0 0
    %383 = vmatprep.subr.bf16.mxu0 0
    %384 = vmatpush1.bf16.msra.mxu0 0
    %385 = vmatprep.subr.bf16.mxu0 0
    %386 = vmatpush1.bf16.msra.mxu0 0
    %387 = vmatprep.subr.bf16.mxu0 0
    %388 = vmatpush1.bf16.msra.mxu0 0
    %389 = vmatprep.subr.bf16.mxu0 0
    %390 = vmatpush1.bf16.msra.mxu0 0
    %391 = vmatprep.subr.bf16.mxu0 0
    %392 = vmatpush1.bf16.msra.mxu0 0
    %393 = vmatprep.subr.bf16.mxu0 0
    %394 = vmatpush1.bf16.msra.mxu0 0
    %395 = vmatprep.subr.bf16.mxu0 0
    %396 = vmatpush1.bf16.msra.mxu0 0
    %397 = vmatprep.subr.bf16.mxu0 0
    %398 = vmatpush1.bf16.msra.mxu0 0
    %399 = vmatprep.mubr.bf16.mxu0 0
    %400 = vmatmul.mubr.bf16.gmra.mrb[0].mxu0 %v324
    %v401 = vpop.f32.mrb[0].mxu0
    %v402 = vadd.f32 %v183, %v401
    %v403 = vpop.f32.mrb[0].mxu0
    %v404 = vadd.f32 %v187, %v403
    %v405 = vpop.f32.mrb[0].mxu0
    %v406 = vpop.f32.mrb[0].mxu0
    %407 = vdwg.mxu0
    %408 = vmatprep.subr.bf16.mxu0 %v287
    %409 = vmatpush1.bf16.msra.mxu0 %v286
    %410 = vmatprep.subr.bf16.mxu0 %v297
    %411 = vmatpush1.bf16.msra.mxu0 %v296
    %412 = vmatprep.subr.bf16.mxu0 0
    %413 = vmatpush1.bf16.msra.mxu0 0
    %414 = vmatprep.subr.bf16.mxu0 0
    %415 = vmatpush1.bf16.msra.mxu0 0
    %416 = vmatprep.subr.bf16.mxu0 0
    %417 = vmatpush1.bf16.msra.mxu0 0
    %418 = vmatprep.subr.bf16.mxu0 0
    %419 = vmatpush1.bf16.msra.mxu0 0
    %420 = vmatprep.subr.bf16.mxu0 0
    %421 = vmatpush1.bf16.msra.mxu0 0
    %422 = vmatprep.subr.bf16.mxu0 0
    %423 = vmatpush1.bf16.msra.mxu0 0
    %424 = vmatprep.subr.bf16.mxu0 0
    %425 = vmatpush1.bf16.msra.mxu0 0
    %426 = vmatprep.subr.bf16.mxu0 0
    %427 = vmatpush1.bf16.msra.mxu0 0
    %428 = vmatprep.subr.bf16.mxu0 0
    %429 = vmatpush1.bf16.msra.mxu0 0
    %430 = vmatprep.subr.bf16.mxu0 0
    %431 = vmatpush1.bf16.msra.mxu0 0
    %432 = vmatprep.subr.bf16.mxu0 0
    %433 = vmatpush1.bf16.msra.mxu0 0
    %434 = vmatprep.subr.bf16.mxu0 0
    %435 = vmatpush1.bf16.msra.mxu0 0
    %436 = vmatprep.subr.bf16.mxu0 0
    %437 = vmatpush1.bf16.msra.mxu0 0
    %438 = vmatprep.subr.bf16.mxu0 0
    %439 = vmatpush1.bf16.msra.mxu0 0
    %440 = vmatprep.mubr.bf16.mxu0 0
    %441 = vmatmul.mubr.bf16.gmra.mrb[0].mxu0 %v324
    %v442 = vpop.f32.mrb[0].mxu0
    %v443 = vadd.f32 %v191, %v442
    %v444 = vpop.f32.mrb[0].mxu0
    %v445 = vadd.f32 %v195, %v444
    %v446 = vpop.f32.mrb[0].mxu0
    %v447 = vpop.f32.mrb[0].mxu0
    %448 = vdwg.mxu0
    %449 = vmatprep.subr.bf16.mxu0 %v289
    %450 = vmatpush1.bf16.msra.mxu0 %v288
    %451 = vmatprep.subr.bf16.mxu0 %v299
    %452 = vmatpush1.bf16.msra.mxu0 %v298
    %453 = vmatprep.subr.bf16.mxu0 0
    %454 = vmatpush1.bf16.msra.mxu0 0
    %455 = vmatprep.subr.bf16.mxu0 0
    %456 = vmatpush1.bf16.msra.mxu0 0
    %457 = vmatprep.subr.bf16.mxu0 0
    %458 = vmatpush1.bf16.msra.mxu0 0
    %459 = vmatprep.subr.bf16.mxu0 0
    %460 = vmatpush1.bf16.msra.mxu0 0
    %461 = vmatprep.subr.bf16.mxu0 0
    %462 = vmatpush1.bf16.msra.mxu0 0
    %463 = vmatprep.subr.bf16.mxu0 0
    %464 = vmatpush1.bf16.msra.mxu0 0
    %465 = vmatprep.subr.bf16.mxu0 0
    %466 = vmatpush1.bf16.msra.mxu0 0
    %467 = vmatprep.subr.bf16.mxu0 0
    %468 = vmatpush1.bf16.msra.mxu0 0
    %469 = vmatprep.subr.bf16.mxu0 0
    %470 = vmatpush1.bf16.msra.mxu0 0
    %471 = vmatprep.subr.bf16.mxu0 0
    %472 = vmatpush1.bf16.msra.mxu0 0
    %473 = vmatprep.subr.bf16.mxu0 0
    %474 = vmatpush1.bf16.msra.mxu0 0
    %475 = vmatprep.subr.bf16.mxu0 0
    %476 = vmatpush1.bf16.msra.mxu0 0
    %477 = vmatprep.subr.bf16.mxu0 0
    %478 = vmatpush1.bf16.msra.mxu0 0
    %479 = vmatprep.subr.bf16.mxu0 0
    %480 = vmatpush1.bf16.msra.mxu0 0
    %481 = vmatprep.mubr.bf16.mxu0 0
    %482 = vmatmul.mubr.bf16.gmra.mrb[0].mxu0 %v324
    %v483 = vpop.f32.mrb[0].mxu0
    %v484 = vadd.f32 %v199, %v483
    %v485 = vpop.f32.mrb[0].mxu0
    %v486 = vadd.f32 %v203, %v485
    %v487 = vpop.f32.mrb[0].mxu0
    %v488 = vpop.f32.mrb[0].mxu0
    %489 = vdwg.mxu0
    %490 = vmatprep.subr.bf16.mxu0 %v291
    %491 = vmatpush1.bf16.msra.mxu0 %v290
    %492 = vmatprep.subr.bf16.mxu0 %v301
    %493 = vmatpush1.bf16.msra.mxu0 %v300
    %494 = vmatprep.subr.bf16.mxu0 0
    %495 = vmatpush1.bf16.msra.mxu0 0
    %496 = vmatprep.subr.bf16.mxu0 0
    %497 = vmatpush1.bf16.msra.mxu0 0
    %498 = vmatprep.subr.bf16.mxu0 0
    %499 = vmatpush1.bf16.msra.mxu0 0
    %500 = vmatprep.subr.bf16.mxu0 0
    %501 = vmatpush1.bf16.msra.mxu0 0
    %502 = vmatprep.subr.bf16.mxu0 0
    %503 = vmatpush1.bf16.msra.mxu0 0
    %504 = vmatprep.subr.bf16.mxu0 0
    %505 = vmatpush1.bf16.msra.mxu0 0
    %506 = vmatprep.subr.bf16.mxu0 0
    %507 = vmatpush1.bf16.msra.mxu0 0
    %508 = vmatprep.subr.bf16.mxu0 0
    %509 = vmatpush1.bf16.msra.mxu0 0
    %510 = vmatprep.subr.bf16.mxu0 0
    %511 = vmatpush1.bf16.msra.mxu0 0
    %512 = vmatprep.subr.bf16.mxu0 0
    %513 = vmatpush1.bf16.msra.mxu0 0
    %514 = vmatprep.subr.bf16.mxu0 0
    %515 = vmatpush1.bf16.msra.mxu0 0
    %516 = vmatprep.subr.bf16.mxu0 0
    %517 = vmatpush1.bf16.msra.mxu0 0
    %518 = vmatprep.subr.bf16.mxu0 0
    %519 = vmatpush1.bf16.msra.mxu0 0
    %520 = vmatprep.subr.bf16.mxu0 0
    %521 = vmatpush1.bf16.msra.mxu0 0
    %522 = vmatprep.mubr.bf16.mxu0 0
    %523 = vmatmul.mubr.bf16.gmra.mrb[0].mxu0 %v324
    %v524 = vpop.f32.mrb[0].mxu0
    %v525 = vadd.f32 %v207, %v524
    %v526 = vpop.f32.mrb[0].mxu0
    %v527 = vadd.f32 %v211, %v526
    %v528 = vpop.f32.mrb[0].mxu0
    %v529 = vpop.f32.mrb[0].mxu0
    %530 = vdwg.mxu0
    %v531 = vmax.f32 %v361, 0.0
    %v532 = vmax.f32 %v363, 0.0
    %v533 = vmax.f32 %v402, 0.0
    %v534 = vmax.f32 %v404, 0.0
    %v535 = vmax.f32 %v443, 0.0
    %v536 = vmax.f32 %v445, 0.0
    %v537 = vmax.f32 %v484, 0.0
    %v538 = vmax.f32 %v486, 0.0
    %v539 = vmax.f32 %v525, 0.0
    %v540 = vmax.f32 %v527, 0.0
    %v541 = vpack.c.bf16 %v531, %v531
    %v542 = vpack.c.bf16 %v532, %v532
    %v543 = vpack.c.bf16 %v533, %v533
    %v544 = vpack.c.bf16 %v534, %v534
    %v545 = vpack.c.bf16 %v535, %v535
    %v546 = vpack.c.bf16 %v536, %v536
    %v547 = vpack.c.bf16 %v537, %v537
    %v548 = vpack.c.bf16 %v538, %v538
    %v549 = vpack.c.bf16 %v539, %v539
    %v550 = vpack.c.bf16 %v540, %v540
    %v551 = vld [vmem:[#allocation8] sm:$0xff]
    %v552 = vld [vmem:[#allocation8 + $0x8] sm:$0xff]
    %v553 = vld [vmem:[#allocation8 + $0x10] sm:$0xff]
    %v554 = vld [vmem:[#allocation8 + $0x18] sm:$0xff]
    %v555 = vld [vmem:[#allocation8 + $0x20] sm:$0xff]
    %v556 = vld [vmem:[#allocation8 + $0x28] sm:$0xff]
    %v557 = vld [vmem:[#allocation8 + $0x30] sm:$0xff]
    %v558 = vld [vmem:[#allocation8 + $0x38] sm:$0xff]
    %v559 = vld [vmem:[#allocation8 + $0x40] sm:$0xff]
    %v560 = vld [vmem:[#allocation8 + $0x48] sm:$0xff]
    %v561 = vld [vmem:[#allocation8 + $0x50] sm:$0xff]
    %v562 = vld [vmem:[#allocation8 + $0x58] sm:$0xff]
    %v563 = vld [vmem:[#allocation8 + $0x60] sm:$0xff]
    %v564 = vld [vmem:[#allocation8 + $0x68] sm:$0xff]
    %v565 = vld [vmem:[#allocation8 + $0x70] sm:$0xff]
    %v566 = vld [vmem:[#allocation8 + $0x78] sm:$0xff]
    %v567 = vld [vmem:[#allocation8 + $0x80] sm:$0xff]
    %v568 = vld [vmem:[#allocation8 + $0x88] sm:$0xff]
    %v569 = vld [vmem:[#allocation8 + $0x90] sm:$0xff]
    %v570 = vld [vmem:[#allocation8 + $0x98] sm:$0xff]
    %v571 = vld [vmem:[#allocation8 + $0xa0] sm:$0xff]
    %v572 = vld [vmem:[#allocation8 + $0xa8] sm:$0xff]
    %v573 = vld [vmem:[#allocation8 + $0xb0] sm:$0xff]
    %v574 = vld [vmem:[#allocation8 + $0xb8] sm:$0xff]
    %v575 = vld [vmem:[#allocation8 + $0xc0] sm:$0xff]
    %v576 = vld [vmem:[#allocation8 + $0xc8] sm:$0xff]
    %v577 = vld [vmem:[#allocation8 + $0xd0] sm:$0xff]
    %v578 = vld [vmem:[#allocation8 + $0xd8] sm:$0xff]
    %v579 = vld [vmem:[#allocation8 + $0xe0] sm:$0xff]
    %v580 = vld [vmem:[#allocation8 + $0xe8] sm:$0xff]
    %v581 = vld [vmem:[#allocation8 + $0xf0] sm:$0xff]
    %v582 = vld [vmem:[#allocation8 + $0xf8] sm:$0xff]
    %v583 = vld [vmem:[#allocation8 + $0x100] sm:$0xff]
    %v584 = vld [vmem:[#allocation8 + $0x108] sm:$0xff]
    %v585 = vld [vmem:[#allocation8 + $0x110] sm:$0xff]
    %v586 = vld [vmem:[#allocation8 + $0x118] sm:$0xff]
    %v587 = vld [vmem:[#allocation8 + $0x120] sm:$0xff]
    %v588 = vld [vmem:[#allocation8 + $0x128] sm:$0xff]
    %v589 = vld [vmem:[#allocation8 + $0x130] sm:$0xff]
    %v590 = vld [vmem:[#allocation8 + $0x138] sm:$0xff]
    %v591 = vld [vmem:[#allocation8 + $0x140] sm:$0xff]
    %v592 = vld [vmem:[#allocation8 + $0x148] sm:$0xff]
    %v593 = vld [vmem:[#allocation8 + $0x150] sm:$0xff]
    %v594 = vld [vmem:[#allocation8 + $0x158] sm:$0xff]
    %v595 = vld [vmem:[#allocation8 + $0x160] sm:$0xff]
    %v596 = vld [vmem:[#allocation8 + $0x168] sm:$0xff]
    %v597 = vld [vmem:[#allocation8 + $0x170] sm:$0xff]
    %v598 = vld [vmem:[#allocation8 + $0x178] sm:$0xff]
    %v599 = vld [vmem:[#allocation8 + $0x180] sm:$0xff]
    %v600 = vld [vmem:[#allocation8 + $0x188] sm:$0xff]
    %v601 = vld [vmem:[#allocation8 + $0x190] sm:$0xff]
    %v602 = vld [vmem:[#allocation8 + $0x198] sm:$0xff]
    %v603 = vld [vmem:[#allocation8 + $0x1a0] sm:$0xff]
    %v604 = vld [vmem:[#allocation8 + $0x1a8] sm:$0xff]
    %v605 = vld [vmem:[#allocation8 + $0x1b0] sm:$0xff]
    %v606 = vld [vmem:[#allocation8 + $0x1b8] sm:$0xff]
    %v607 = vld [vmem:[#allocation8 + $0x1c0] sm:$0xff]
    %v608 = vld [vmem:[#allocation8 + $0x1c8] sm:$0xff]
    %v609 = vld [vmem:[#allocation8 + $0x1d0] sm:$0xff]
    %v610 = vld [vmem:[#allocation8 + $0x1d8] sm:$0xff]
    %v611 = vld [vmem:[#allocation8 + $0x1e0] sm:$0xff]
    %v612 = vld [vmem:[#allocation8 + $0x1e8] sm:$0xff]
    %v613 = vld [vmem:[#allocation8 + $0x1f0] sm:$0xff]
    %v614 = vld [vmem:[#allocation8 + $0x1f8] sm:$0xff]
    %v615 = vld [vmem:[#allocation8 + $0x200] sm:$0xff]
    %v616 = vld [vmem:[#allocation8 + $0x208] sm:$0xff]
    %v617 = vld [vmem:[#allocation8 + $0x210] sm:$0xff]
    %v618 = vld [vmem:[#allocation8 + $0x218] sm:$0xff]
    %v619 = vld [vmem:[#allocation8 + $0x220] sm:$0xff]
    %v620 = vld [vmem:[#allocation8 + $0x228] sm:$0xff]
    %v621 = vld [vmem:[#allocation8 + $0x230] sm:$0xff]
    %v622 = vld [vmem:[#allocation8 + $0x238] sm:$0xff]
    %v623 = vld [vmem:[#allocation8 + $0x240] sm:$0xff]
    %v624 = vld [vmem:[#allocation8 + $0x248] sm:$0xff]
    %v625 = vld [vmem:[#allocation8 + $0x250] sm:$0xff]
    %v626 = vld [vmem:[#allocation8 + $0x258] sm:$0xff]
    %v627 = vld [vmem:[#allocation8 + $0x260] sm:$0xff]
    %v628 = vld [vmem:[#allocation8 + $0x268] sm:$0xff]
    %v629 = vld [vmem:[#allocation8 + $0x270] sm:$0xff]
    %v630 = vld [vmem:[#allocation8 + $0x278] sm:$0xff]
    %v631 = vld [vmem:[#allocation8 + $0x280] sm:$0xff]
    %v632 = vld [vmem:[#allocation8 + $0x288] sm:$0xff]
    %v633 = vld [vmem:[#allocation8 + $0x290] sm:$0xff]
    %v634 = vld [vmem:[#allocation8 + $0x298] sm:$0xff]
    %v635 = vld [vmem:[#allocation8 + $0x2a0] sm:$0xff]
    %v636 = vld [vmem:[#allocation8 + $0x2a8] sm:$0xff]
    %v637 = vld [vmem:[#allocation8 + $0x2b0] sm:$0xff]
    %v638 = vld [vmem:[#allocation8 + $0x2b8] sm:$0xff]
    %v639 = vld [vmem:[#allocation8 + $0x2c0] sm:$0xff]
    %v640 = vld [vmem:[#allocation8 + $0x2c8] sm:$0xff]
    %v641 = vld [vmem:[#allocation8 + $0x2d0] sm:$0xff]
    %v642 = vld [vmem:[#allocation8 + $0x2d8] sm:$0xff]
    %v643 = vld [vmem:[#allocation8 + $0x2e0] sm:$0xff]
    %v644 = vld [vmem:[#allocation8 + $0x2e8] sm:$0xff]
    %v645 = vld [vmem:[#allocation8 + $0x2f0] sm:$0xff]
    %v646 = vld [vmem:[#allocation8 + $0x2f8] sm:$0xff]
    %v647 = vld [vmem:[#allocation8 + $0x300] sm:$0xff]
    %v648 = vld [vmem:[#allocation8 + $0x308] sm:$0xff]
    %v649 = vld [vmem:[#allocation8 + $0x310] sm:$0xff]
    %v650 = vld [vmem:[#allocation8 + $0x318] sm:$0xff]
    %v651 = vld [vmem:[#allocation8 + $0x320] sm:$0xff]
    %v652 = vld [vmem:[#allocation8 + $0x328] sm:$0xff]
    %v653 = vld [vmem:[#allocation8 + $0x330] sm:$0xff]
    %v654 = vld [vmem:[#allocation8 + $0x338] sm:$0xff]
    %v655 = vld [vmem:[#allocation8 + $0x340] sm:$0xff]
    %v656 = vld [vmem:[#allocation8 + $0x348] sm:$0xff]
    %v657 = vld [vmem:[#allocation8 + $0x350] sm:$0xff]
    %v658 = vld [vmem:[#allocation8 + $0x358] sm:$0xff]
    %v659 = vld [vmem:[#allocation8 + $0x360] sm:$0xff]
    %v660 = vld [vmem:[#allocation8 + $0x368] sm:$0xff]
    %v661 = vld [vmem:[#allocation8 + $0x370] sm:$0xff]
    %v662 = vld [vmem:[#allocation8 + $0x378] sm:$0xff]
    %v663 = vld [vmem:[#allocation8 + $0x380] sm:$0xff]
    %v664 = vld [vmem:[#allocation8 + $0x388] sm:$0xff]
    %v665 = vld [vmem:[#allocation8 + $0x390] sm:$0xff]
    %v666 = vld [vmem:[#allocation8 + $0x398] sm:$0xff]
    %v667 = vld [vmem:[#allocation8 + $0x3a0] sm:$0xff]
    %v668 = vld [vmem:[#allocation8 + $0x3a8] sm:$0xff]
    %v669 = vld [vmem:[#allocation8 + $0x3b0] sm:$0xff]
    %v670 = vld [vmem:[#allocation8 + $0x3b8] sm:$0xff]
    %v671 = vld [vmem:[#allocation8 + $0x3c0] sm:$0xff]
    %v672 = vld [vmem:[#allocation8 + $0x3c8] sm:$0xff]
    %v673 = vld [vmem:[#allocation8 + $0x3d0] sm:$0xff]
    %v674 = vld [vmem:[#allocation8 + $0x3d8] sm:$0xff]
    %v675 = vld [vmem:[#allocation8 + $0x3e0] sm:$0xff]
    %v676 = vld [vmem:[#allocation8 + $0x3e8] sm:$0xff]
    %v677 = vld [vmem:[#allocation8 + $0x3f0] sm:$0xff]
    %v678 = vld [vmem:[#allocation8 + $0x3f8] sm:$0xff]
    %v679 = vld [vmem:[#allocation8 + $0x400] sm:$0xff]
    %v680 = vld [vmem:[#allocation8 + $0x408] sm:$0xff]
    %v681 = vld [vmem:[#allocation8 + $0x410] sm:$0xff]
    %v682 = vld [vmem:[#allocation8 + $0x418] sm:$0xff]
    %v683 = vld [vmem:[#allocation8 + $0x420] sm:$0xff]
    %v684 = vld [vmem:[#allocation8 + $0x428] sm:$0xff]
    %v685 = vld [vmem:[#allocation8 + $0x430] sm:$0xff]
    %v686 = vld [vmem:[#allocation8 + $0x438] sm:$0xff]
    %v687 = vld [vmem:[#allocation8 + $0x440] sm:$0xff]
    %v688 = vld [vmem:[#allocation8 + $0x448] sm:$0xff]
    %v689 = vld [vmem:[#allocation8 + $0x450] sm:$0xff]
    %v690 = vld [vmem:[#allocation8 + $0x458] sm:$0xff]
    %v691 = vld [vmem:[#allocation8 + $0x460] sm:$0xff]
    %v692 = vld [vmem:[#allocation8 + $0x468] sm:$0xff]
    %v693 = vld [vmem:[#allocation8 + $0x470] sm:$0xff]
    %v694 = vld [vmem:[#allocation8 + $0x478] sm:$0xff]
    %v695 = vld [vmem:[#allocation8 + $0x480] sm:$0xff]
    %v696 = vld [vmem:[#allocation8 + $0x488] sm:$0xff]
    %v697 = vld [vmem:[#allocation8 + $0x490] sm:$0xff]
    %v698 = vld [vmem:[#allocation8 + $0x498] sm:$0xff]
    %v699 = vld [vmem:[#allocation8 + $0x4a0] sm:$0xff]
    %v700 = vld [vmem:[#allocation8 + $0x4a8] sm:$0xff]
    %v701 = vld [vmem:[#allocation8 + $0x4b0] sm:$0xff]
    %v702 = vld [vmem:[#allocation8 + $0x4b8] sm:$0xff]
    %v703 = vld [vmem:[#allocation8 + $0x4c0] sm:$0xff]
    %v704 = vld [vmem:[#allocation8 + $0x4c8] sm:$0xff]
    %v705 = vld [vmem:[#allocation8 + $0x4d0] sm:$0xff]
    %v706 = vld [vmem:[#allocation8 + $0x4d8] sm:$0xff]
    %v707 = vld [vmem:[#allocation8 + $0x4e0] sm:$0xff]
    %v708 = vld [vmem:[#allocation8 + $0x4e8] sm:$0xff]
    %v709 = vld [vmem:[#allocation8 + $0x4f0] sm:$0xff]
    %v710 = vld [vmem:[#allocation8 + $0x4f8] sm:$0xff]
    %v711 = vld [vmem:[#allocation8 + $0x500] sm:$0xff]
    %v712 = vld [vmem:[#allocation8 + $0x508] sm:$0xff]
    %v713 = vld [vmem:[#allocation8 + $0x510] sm:$0xff]
    %v714 = vld [vmem:[#allocation8 + $0x518] sm:$0xff]
    %v715 = vld [vmem:[#allocation8 + $0x520] sm:$0xff]
    %v716 = vld [vmem:[#allocation8 + $0x528] sm:$0xff]
    %v717 = vld [vmem:[#allocation8 + $0x530] sm:$0xff]
    %v718 = vld [vmem:[#allocation8 + $0x538] sm:$0xff]
    %v719 = vld [vmem:[#allocation8 + $0x540] sm:$0xff]
    %v720 = vld [vmem:[#allocation8 + $0x548] sm:$0xff]
    %v721 = vld [vmem:[#allocation8 + $0x550] sm:$0xff]
    %v722 = vld [vmem:[#allocation8 + $0x558] sm:$0xff]
    %v723 = vld [vmem:[#allocation8 + $0x560] sm:$0xff]
    %v724 = vld [vmem:[#allocation8 + $0x568] sm:$0xff]
    %v725 = vld [vmem:[#allocation8 + $0x570] sm:$0xff]
    %v726 = vld [vmem:[#allocation8 + $0x578] sm:$0xff]
    %v727 = vld [vmem:[#allocation8 + $0x580] sm:$0xff]
    %v728 = vld [vmem:[#allocation8 + $0x588] sm:$0xff]
    %v729 = vld [vmem:[#allocation8 + $0x590] sm:$0xff]
    %v730 = vld [vmem:[#allocation8 + $0x598] sm:$0xff]
    %v731 = vld [vmem:[#allocation8 + $0x5a0] sm:$0xff]
    %v732 = vld [vmem:[#allocation8 + $0x5a8] sm:$0xff]
    %v733 = vld [vmem:[#allocation8 + $0x5b0] sm:$0xff]
    %v734 = vld [vmem:[#allocation8 + $0x5b8] sm:$0xff]
    %v735 = vld [vmem:[#allocation8 + $0x5c0] sm:$0xff]
    %v736 = vld [vmem:[#allocation8 + $0x5c8] sm:$0xff]
    %v737 = vld [vmem:[#allocation8 + $0x5d0] sm:$0xff]
    %v738 = vld [vmem:[#allocation8 + $0x5d8] sm:$0xff]
    %v739 = vld [vmem:[#allocation8 + $0x5e0] sm:$0xff]
    %v740 = vld [vmem:[#allocation8 + $0x5e8] sm:$0xff]
    %v741 = vld [vmem:[#allocation8 + $0x5f0] sm:$0xff]
    %v742 = vld [vmem:[#allocation8 + $0x5f8] sm:$0xff]
    %v743 = vld [vmem:[#allocation8 + $0x600] sm:$0xff]
    %v744 = vld [vmem:[#allocation8 + $0x608] sm:$0xff]
    %v745 = vld [vmem:[#allocation8 + $0x610] sm:$0xff]
    %v746 = vld [vmem:[#allocation8 + $0x618] sm:$0xff]
    %v747 = vld [vmem:[#allocation8 + $0x620] sm:$0xff]
    %v748 = vld [vmem:[#allocation8 + $0x628] sm:$0xff]
    %v749 = vld [vmem:[#allocation8 + $0x630] sm:$0xff]
    %v750 = vld [vmem:[#allocation8 + $0x638] sm:$0xff]
    %v751 = vld [vmem:[#allocation8 + $0x640] sm:$0xff]
    %v752 = vld [vmem:[#allocation8 + $0x648] sm:$0xff]
    %v753 = vld [vmem:[#allocation8 + $0x650] sm:$0xff]
    %v754 = vld [vmem:[#allocation8 + $0x658] sm:$0xff]
    %v755 = vld [vmem:[#allocation8 + $0x660] sm:$0xff]
    %v756 = vld [vmem:[#allocation8 + $0x668] sm:$0xff]
    %v757 = vld [vmem:[#allocation8 + $0x670] sm:$0xff]
    %v758 = vld [vmem:[#allocation8 + $0x678] sm:$0xff]
    %v759 = vld [vmem:[#allocation8 + $0x680] sm:$0xff]
    %v760 = vld [vmem:[#allocation8 + $0x688] sm:$0xff]
    %v761 = vld [vmem:[#allocation8 + $0x690] sm:$0xff]
    %v762 = vld [vmem:[#allocation8 + $0x698] sm:$0xff]
    %v763 = vld [vmem:[#allocation8 + $0x6a0] sm:$0xff]
    %v764 = vld [vmem:[#allocation8 + $0x6a8] sm:$0xff]
    %v765 = vld [vmem:[#allocation8 + $0x6b0] sm:$0xff]
    %v766 = vld [vmem:[#allocation8 + $0x6b8] sm:$0xff]
    %v767 = vld [vmem:[#allocation8 + $0x6c0] sm:$0xff]
    %v768 = vld [vmem:[#allocation8 + $0x6c8] sm:$0xff]
    %v769 = vld [vmem:[#allocation8 + $0x6d0] sm:$0xff]
    %v770 = vld [vmem:[#allocation8 + $0x6d8] sm:$0xff]
    %v771 = vld [vmem:[#allocation8 + $0x6e0] sm:$0xff]
    %v772 = vld [vmem:[#allocation8 + $0x6e8] sm:$0xff]
    %v773 = vld [vmem:[#allocation8 + $0x6f0] sm:$0xff]
    %v774 = vld [vmem:[#allocation8 + $0x6f8] sm:$0xff]
    %v775 = vld [vmem:[#allocation8 + $0x700] sm:$0xff]
    %v776 = vld [vmem:[#allocation8 + $0x708] sm:$0xff]
    %v777 = vld [vmem:[#allocation8 + $0x710] sm:$0xff]
    %v778 = vld [vmem:[#allocation8 + $0x718] sm:$0xff]
    %v779 = vld [vmem:[#allocation8 + $0x720] sm:$0xff]
    %v780 = vld [vmem:[#allocation8 + $0x728] sm:$0xff]
    %v781 = vld [vmem:[#allocation8 + $0x730] sm:$0xff]
    %v782 = vld [vmem:[#allocation8 + $0x738] sm:$0xff]
    %v783 = vld [vmem:[#allocation8 + $0x740] sm:$0xff]
    %v784 = vld [vmem:[#allocation8 + $0x748] sm:$0xff]
    %v785 = vld [vmem:[#allocation8 + $0x750] sm:$0xff]
    %v786 = vld [vmem:[#allocation8 + $0x758] sm:$0xff]
    %v787 = vld [vmem:[#allocation8 + $0x760] sm:$0xff]
    %v788 = vld [vmem:[#allocation8 + $0x768] sm:$0xff]
    %v789 = vld [vmem:[#allocation8 + $0x770] sm:$0xff]
    %v790 = vld [vmem:[#allocation8 + $0x778] sm:$0xff]
    %v791 = vld [vmem:[#allocation8 + $0x780] sm:$0xff]
    %v792 = vld [vmem:[#allocation8 + $0x788] sm:$0xff]
    %v793 = vld [vmem:[#allocation8 + $0x790] sm:$0xff]
    %v794 = vld [vmem:[#allocation8 + $0x798] sm:$0xff]
    %v795 = vld [vmem:[#allocation8 + $0x7a0] sm:$0xff]
    %v796 = vld [vmem:[#allocation8 + $0x7a8] sm:$0xff]
    %v797 = vld [vmem:[#allocation8 + $0x7b0] sm:$0xff]
    %v798 = vld [vmem:[#allocation8 + $0x7b8] sm:$0xff]
    %v799 = vld [vmem:[#allocation8 + $0x7c0] sm:$0xff]
    %v800 = vld [vmem:[#allocation8 + $0x7c8] sm:$0xff]
    %v801 = vld [vmem:[#allocation8 + $0x7d0] sm:$0xff]
    %v802 = vld [vmem:[#allocation8 + $0x7d8] sm:$0xff]
    %v803 = vld [vmem:[#allocation8 + $0x7e0] sm:$0xff]
    %v804 = vld [vmem:[#allocation8 + $0x7e8] sm:$0xff]
    %v805 = vld [vmem:[#allocation8 + $0x7f0] sm:$0xff]
    %v806 = vld [vmem:[#allocation8 + $0x7f8] sm:$0xff]
    %v807 = vld [vmem:[#allocation8 + $0x800] sm:$0xff]
    %v808 = vld [vmem:[#allocation8 + $0x808] sm:$0xff]
    %v809 = vld [vmem:[#allocation8 + $0x810] sm:$0xff]
    %v810 = vld [vmem:[#allocation8 + $0x818] sm:$0xff]
    %v811 = vld [vmem:[#allocation8 + $0x820] sm:$0xff]
    %v812 = vld [vmem:[#allocation8 + $0x828] sm:$0xff]
    %v813 = vld [vmem:[#allocation8 + $0x830] sm:$0xff]
    %v814 = vld [vmem:[#allocation8 + $0x838] sm:$0xff]
    %v815 = vld [vmem:[#allocation8 + $0x840] sm:$0xff]
    %v816 = vld [vmem:[#allocation8 + $0x848] sm:$0xff]
    %v817 = vld [vmem:[#allocation8 + $0x850] sm:$0xff]
    %v818 = vld [vmem:[#allocation8 + $0x858] sm:$0xff]
    %v819 = vld [vmem:[#allocation8 + $0x860] sm:$0xff]
    %v820 = vld [vmem:[#allocation8 + $0x868] sm:$0xff]
    %v821 = vld [vmem:[#allocation8 + $0x870] sm:$0xff]
    %v822 = vld [vmem:[#allocation8 + $0x878] sm:$0xff]
    %v823 = vld [vmem:[#allocation8 + $0x880] sm:$0xff]
    %v824 = vld [vmem:[#allocation8 + $0x888] sm:$0xff]
    %v825 = vld [vmem:[#allocation8 + $0x890] sm:$0xff]
    %v826 = vld [vmem:[#allocation8 + $0x898] sm:$0xff]
    %v827 = vld [vmem:[#allocation8 + $0x8a0] sm:$0xff]
    %v828 = vld [vmem:[#allocation8 + $0x8a8] sm:$0xff]
    %v829 = vld [vmem:[#allocation8 + $0x8b0] sm:$0xff]
    %v830 = vld [vmem:[#allocation8 + $0x8b8] sm:$0xff]
    %v831 = vld [vmem:[#allocation8 + $0x8c0] sm:$0xff]
    %v832 = vld [vmem:[#allocation8 + $0x8c8] sm:$0xff]
    %v833 = vld [vmem:[#allocation8 + $0x8d0] sm:$0xff]
    %v834 = vld [vmem:[#allocation8 + $0x8d8] sm:$0xff]
    %v835 = vld [vmem:[#allocation8 + $0x8e0] sm:$0xff]
    %v836 = vld [vmem:[#allocation8 + $0x8e8] sm:$0xff]
    %v837 = vld [vmem:[#allocation8 + $0x8f0] sm:$0xff]
    %v838 = vld [vmem:[#allocation8 + $0x8f8] sm:$0xff]
    %v839 = vld [vmem:[#allocation8 + $0x900] sm:$0xff]
    %v840 = vld [vmem:[#allocation8 + $0x908] sm:$0xff]
    %v841 = vld [vmem:[#allocation8 + $0x910] sm:$0xff]
    %v842 = vld [vmem:[#allocation8 + $0x918] sm:$0xff]
    %v843 = vld [vmem:[#allocation8 + $0x920] sm:$0xff]
    %v844 = vld [vmem:[#allocation8 + $0x928] sm:$0xff]
    %v845 = vld [vmem:[#allocation8 + $0x930] sm:$0xff]
    %v846 = vld [vmem:[#allocation8 + $0x938] sm:$0xff]
    %v847 = vld [vmem:[#allocation8 + $0x940] sm:$0xff]
    %v848 = vld [vmem:[#allocation8 + $0x948] sm:$0xff]
    %v849 = vld [vmem:[#allocation8 + $0x950] sm:$0xff]
    %v850 = vld [vmem:[#allocation8 + $0x958] sm:$0xff]
    %v851 = vld [vmem:[#allocation8 + $0x960] sm:$0xff]
    %v852 = vld [vmem:[#allocation8 + $0x968] sm:$0xff]
    %v853 = vld [vmem:[#allocation8 + $0x970] sm:$0xff]
    %v854 = vld [vmem:[#allocation8 + $0x978] sm:$0xff]
    %v855 = vld [vmem:[#allocation8 + $0x980] sm:$0xff]
    %v856 = vld [vmem:[#allocation8 + $0x988] sm:$0xff]
    %v857 = vld [vmem:[#allocation8 + $0x990] sm:$0xff]
    %v858 = vld [vmem:[#allocation8 + $0x998] sm:$0xff]
    %v859 = vld [vmem:[#allocation8 + $0x9a0] sm:$0xff]
    %v860 = vld [vmem:[#allocation8 + $0x9a8] sm:$0xff]
    %v861 = vld [vmem:[#allocation8 + $0x9b0] sm:$0xff]
    %v862 = vld [vmem:[#allocation8 + $0x9b8] sm:$0xff]
    %v863 = vld [vmem:[#allocation8 + $0x9c0] sm:$0xff]
    %v864 = vld [vmem:[#allocation8 + $0x9c8] sm:$0xff]
    %v865 = vld [vmem:[#allocation8 + $0x9d0] sm:$0xff]
    %v866 = vld [vmem:[#allocation8 + $0x9d8] sm:$0xff]
    %v867 = vld [vmem:[#allocation8 + $0x9e0] sm:$0xff]
    %v868 = vld [vmem:[#allocation8 + $0x9e8] sm:$0xff]
    %v869 = vld [vmem:[#allocation8 + $0x9f0] sm:$0xff]
    %v870 = vld [vmem:[#allocation8 + $0x9f8] sm:$0xff]
    %v871 = vld [vmem:[#allocation10] sm:$0xf]
    %v873 = vlaneseq
    %v874 = vshrl.u32 %v873, 7
    %v875 = vsub.s32 0, %v874
    %v876 = vrot.slane %v871, %v875
    %v877 = vlaneseq
    %v878 = vshrl.u32 %v877, 7
    %v879 = vsub.s32 1, %v878
    %v880 = vrot.slane %v871, %v879
    %v881 = vlaneseq
    %v882 = vshrl.u32 %v881, 7
    %v883 = vsub.s32 2, %v882
    %v884 = vrot.slane %v871, %v883
    %v885 = vlaneseq
    %v886 = vshrl.u32 %v885, 7
    %v887 = vsub.s32 3, %v886
    %v888 = vrot.slane %v871, %v887
    %v1213 = vunpack.c.l.b16 %v551
    %v1214 = vunpack.c.h.b16 %v551
    %v1215 = vunpack.c.l.b16 %v552
    %v1216 = vunpack.c.h.b16 %v552
    %v1217 = vunpack.c.l.b16 %v553
    %v1218 = vunpack.c.h.b16 %v553
    %v1219 = vunpack.c.l.b16 %v554
    %v1220 = vunpack.c.h.b16 %v554
    %v1221 = vunpack.c.l.b16 %v555
    %v1222 = vunpack.c.h.b16 %v555
    %v1223 = vunpack.c.l.b16 %v556
    %v1224 = vunpack.c.h.b16 %v556
    %v1225 = vunpack.c.l.b16 %v557
    %v1226 = vunpack.c.h.b16 %v557
    %v1227 = vunpack.c.l.b16 %v558
    %v1228 = vunpack.c.h.b16 %v558
    %v1229 = vunpack.c.l.b16 %v559
    %v1230 = vunpack.c.h.b16 %v559
    %v1231 = vunpack.c.l.b16 %v560
    %v1232 = vunpack.c.h.b16 %v560
    %v1233 = vunpack.c.l.b16 %v561
    %v1234 = vunpack.c.h.b16 %v561
    %v1235 = vunpack.c.l.b16 %v562
    %v1236 = vunpack.c.h.b16 %v562
    %v1237 = vunpack.c.l.b16 %v563
    %v1238 = vunpack.c.h.b16 %v563
    %v1239 = vunpack.c.l.b16 %v564
    %v1240 = vunpack.c.h.b16 %v564
    %v1241 = vunpack.c.l.b16 %v565
    %v1242 = vunpack.c.h.b16 %v565
    %v1243 = vunpack.c.l.b16 %v566
    %v1244 = vunpack.c.h.b16 %v566
    %v1245 = vunpack.c.l.b16 %v567
    %v1246 = vunpack.c.h.b16 %v567
    %v1247 = vunpack.c.l.b16 %v568
    %v1248 = vunpack.c.h.b16 %v568
    %v1249 = vunpack.c.l.b16 %v569
    %v1250 = vunpack.c.h.b16 %v569
    %v1251 = vunpack.c.l.b16 %v570
    %v1252 = vunpack.c.h.b16 %v570
    %v1253 = vunpack.c.l.b16 %v571
    %v1254 = vunpack.c.h.b16 %v571
    %v1255 = vunpack.c.l.b16 %v572
    %v1256 = vunpack.c.h.b16 %v572
    %v1257 = vunpack.c.l.b16 %v573
    %v1258 = vunpack.c.h.b16 %v573
    %v1259 = vunpack.c.l.b16 %v574
    %v1260 = vunpack.c.h.b16 %v574
    %v1261 = vunpack.c.l.b16 %v575
    %v1262 = vunpack.c.h.b16 %v575
    %v1263 = vunpack.c.l.b16 %v576
    %v1264 = vunpack.c.h.b16 %v576
    %v1265 = vunpack.c.l.b16 %v577
    %v1266 = vunpack.c.h.b16 %v577
    %v1267 = vunpack.c.l.b16 %v578
    %v1268 = vunpack.c.h.b16 %v578
    %v1269 = vunpack.c.l.b16 %v579
    %v1270 = vunpack.c.h.b16 %v579
    %v1271 = vunpack.c.l.b16 %v580
    %v1272 = vunpack.c.h.b16 %v580
    %v1273 = vunpack.c.l.b16 %v581
    %v1274 = vunpack.c.h.b16 %v581
    %v1275 = vunpack.c.l.b16 %v582
    %v1276 = vunpack.c.h.b16 %v582
    %v1277 = vunpack.c.l.b16 %v583
    %v1278 = vunpack.c.h.b16 %v583
    %v1279 = vunpack.c.l.b16 %v584
    %v1280 = vunpack.c.h.b16 %v584
    %v1281 = vunpack.c.l.b16 %v585
    %v1282 = vunpack.c.h.b16 %v585
    %v1283 = vunpack.c.l.b16 %v586
    %v1284 = vunpack.c.h.b16 %v586
    %v1285 = vunpack.c.l.b16 %v587
    %v1286 = vunpack.c.h.b16 %v587
    %v1287 = vunpack.c.l.b16 %v588
    %v1288 = vunpack.c.h.b16 %v588
    %v1289 = vunpack.c.l.b16 %v589
    %v1290 = vunpack.c.h.b16 %v589
    %v1291 = vunpack.c.l.b16 %v590
    %v1292 = vunpack.c.h.b16 %v590
    %v1293 = vunpack.c.l.b16 %v591
    %v1294 = vunpack.c.h.b16 %v591
    %v1295 = vunpack.c.l.b16 %v592
    %v1296 = vunpack.c.h.b16 %v592
    %v1297 = vunpack.c.l.b16 %v593
    %v1298 = vunpack.c.h.b16 %v593
    %v1299 = vunpack.c.l.b16 %v594
    %v1300 = vunpack.c.h.b16 %v594
    %v1301 = vunpack.c.l.b16 %v595
    %v1302 = vunpack.c.h.b16 %v595
    %v1303 = vunpack.c.l.b16 %v596
    %v1304 = vunpack.c.h.b16 %v596
    %v1305 = vunpack.c.l.b16 %v597
    %v1306 = vunpack.c.h.b16 %v597
    %v1307 = vunpack.c.l.b16 %v598
    %v1308 = vunpack.c.h.b16 %v598
    %v1309 = vunpack.c.l.b16 %v599
    %v1310 = vunpack.c.h.b16 %v599
    %v1311 = vunpack.c.l.b16 %v600
    %v1312 = vunpack.c.h.b16 %v600
    %v1313 = vunpack.c.l.b16 %v601
    %v1314 = vunpack.c.h.b16 %v601
    %v1315 = vunpack.c.l.b16 %v602
    %v1316 = vunpack.c.h.b16 %v602
    %v1317 = vunpack.c.l.b16 %v603
    %v1318 = vunpack.c.h.b16 %v603
    %v1319 = vunpack.c.l.b16 %v604
    %v1320 = vunpack.c.h.b16 %v604
    %v1321 = vunpack.c.l.b16 %v605
    %v1322 = vunpack.c.h.b16 %v605
    %v1323 = vunpack.c.l.b16 %v606
    %v1324 = vunpack.c.h.b16 %v606
    %v1325 = vunpack.c.l.b16 %v607
    %v1326 = vunpack.c.h.b16 %v607
    %v1327 = vunpack.c.l.b16 %v608
    %v1328 = vunpack.c.h.b16 %v608
    %v1329 = vunpack.c.l.b16 %v609
    %v1330 = vunpack.c.h.b16 %v609
    %v1331 = vunpack.c.l.b16 %v610
    %v1332 = vunpack.c.h.b16 %v610
    %v1333 = vunpack.c.l.b16 %v611
    %v1334 = vunpack.c.h.b16 %v611
    %v1335 = vunpack.c.l.b16 %v612
    %v1336 = vunpack.c.h.b16 %v612
    %v1337 = vunpack.c.l.b16 %v613
    %v1338 = vunpack.c.h.b16 %v613
    %v1339 = vunpack.c.l.b16 %v614
    %v1340 = vunpack.c.h.b16 %v614
    %v1341 = vunpack.c.l.b16 %v615
    %v1342 = vunpack.c.h.b16 %v615
    %v1343 = vunpack.c.l.b16 %v616
    %v1344 = vunpack.c.h.b16 %v616
    %v1345 = vunpack.c.l.b16 %v617
    %v1346 = vunpack.c.h.b16 %v617
    %v1347 = vunpack.c.l.b16 %v618
    %v1348 = vunpack.c.h.b16 %v618
    %v1349 = vunpack.c.l.b16 %v619
    %v1350 = vunpack.c.h.b16 %v619
    %v1351 = vunpack.c.l.b16 %v620
    %v1352 = vunpack.c.h.b16 %v620
    %v1353 = vunpack.c.l.b16 %v621
    %v1354 = vunpack.c.h.b16 %v621
    %v1355 = vunpack.c.l.b16 %v622
    %v1356 = vunpack.c.h.b16 %v622
    %v1357 = vunpack.c.l.b16 %v623
    %v1358 = vunpack.c.h.b16 %v623
    %v1359 = vunpack.c.l.b16 %v624
    %v1360 = vunpack.c.h.b16 %v624
    %v1361 = vunpack.c.l.b16 %v625
    %v1362 = vunpack.c.h.b16 %v625
    %v1363 = vunpack.c.l.b16 %v626
    %v1364 = vunpack.c.h.b16 %v626
    %v1365 = vunpack.c.l.b16 %v627
    %v1366 = vunpack.c.h.b16 %v627
    %v1367 = vunpack.c.l.b16 %v628
    %v1368 = vunpack.c.h.b16 %v628
    %v1369 = vunpack.c.l.b16 %v629
    %v1370 = vunpack.c.h.b16 %v629
    %v1371 = vunpack.c.l.b16 %v630
    %v1372 = vunpack.c.h.b16 %v630
    %v1373 = vunpack.c.l.b16 %v631
    %v1374 = vunpack.c.h.b16 %v631
    %v1375 = vunpack.c.l.b16 %v632
    %v1376 = vunpack.c.h.b16 %v632
    %v1377 = vunpack.c.l.b16 %v633
    %v1378 = vunpack.c.h.b16 %v633
    %v1379 = vunpack.c.l.b16 %v634
    %v1380 = vunpack.c.h.b16 %v634
    %v1381 = vunpack.c.l.b16 %v635
    %v1382 = vunpack.c.h.b16 %v635
    %v1383 = vunpack.c.l.b16 %v636
    %v1384 = vunpack.c.h.b16 %v636
    %v1385 = vunpack.c.l.b16 %v637
    %v1386 = vunpack.c.h.b16 %v637
    %v1387 = vunpack.c.l.b16 %v638
    %v1388 = vunpack.c.h.b16 %v638
    %v1389 = vunpack.c.l.b16 %v639
    %v1390 = vunpack.c.h.b16 %v639
    %v1391 = vunpack.c.l.b16 %v640
    %v1392 = vunpack.c.h.b16 %v640
    %v1393 = vunpack.c.l.b16 %v641
    %v1394 = vunpack.c.h.b16 %v641
    %v1395 = vunpack.c.l.b16 %v642
    %v1396 = vunpack.c.h.b16 %v642
    %v1397 = vunpack.c.l.b16 %v643
    %v1398 = vunpack.c.h.b16 %v643
    %v1399 = vunpack.c.l.b16 %v644
    %v1400 = vunpack.c.h.b16 %v644
    %v1401 = vunpack.c.l.b16 %v645
    %v1402 = vunpack.c.h.b16 %v645
    %v1403 = vunpack.c.l.b16 %v646
    %v1404 = vunpack.c.h.b16 %v646
    %v1405 = vunpack.c.l.b16 %v647
    %v1406 = vunpack.c.h.b16 %v647
    %v1407 = vunpack.c.l.b16 %v648
    %v1408 = vunpack.c.h.b16 %v648
    %v1409 = vunpack.c.l.b16 %v649
    %v1410 = vunpack.c.h.b16 %v649
    %v1411 = vunpack.c.l.b16 %v650
    %v1412 = vunpack.c.h.b16 %v650
    %v1413 = vunpack.c.l.b16 %v651
    %v1414 = vunpack.c.h.b16 %v651
    %v1415 = vunpack.c.l.b16 %v652
    %v1416 = vunpack.c.h.b16 %v652
    %v1417 = vunpack.c.l.b16 %v653
    %v1418 = vunpack.c.h.b16 %v653
    %v1419 = vunpack.c.l.b16 %v654
    %v1420 = vunpack.c.h.b16 %v654
    %v1421 = vunpack.c.l.b16 %v655
    %v1422 = vunpack.c.h.b16 %v655
    %v1423 = vunpack.c.l.b16 %v656
    %v1424 = vunpack.c.h.b16 %v656
    %v1425 = vunpack.c.l.b16 %v657
    %v1426 = vunpack.c.h.b16 %v657
    %v1427 = vunpack.c.l.b16 %v658
    %v1428 = vunpack.c.h.b16 %v658
    %v1429 = vunpack.c.l.b16 %v659
    %v1430 = vunpack.c.h.b16 %v659
    %v1431 = vunpack.c.l.b16 %v660
    %v1432 = vunpack.c.h.b16 %v660
    %v1433 = vunpack.c.l.b16 %v661
    %v1434 = vunpack.c.h.b16 %v661
    %v1435 = vunpack.c.l.b16 %v662
    %v1436 = vunpack.c.h.b16 %v662
    %v1437 = vunpack.c.l.b16 %v663
    %v1438 = vunpack.c.h.b16 %v663
    %v1439 = vunpack.c.l.b16 %v664
    %v1440 = vunpack.c.h.b16 %v664
    %v1441 = vunpack.c.l.b16 %v665
    %v1442 = vunpack.c.h.b16 %v665
    %v1443 = vunpack.c.l.b16 %v666
    %v1444 = vunpack.c.h.b16 %v666
    %v1445 = vunpack.c.l.b16 %v667
    %v1446 = vunpack.c.h.b16 %v667
    %v1447 = vunpack.c.l.b16 %v668
    %v1448 = vunpack.c.h.b16 %v668
    %v1449 = vunpack.c.l.b16 %v669
    %v1450 = vunpack.c.h.b16 %v669
    %v1451 = vunpack.c.l.b16 %v670
    %v1452 = vunpack.c.h.b16 %v670
    %v1453 = vunpack.c.l.b16 %v671
    %v1454 = vunpack.c.h.b16 %v671
    %v1455 = vunpack.c.l.b16 %v672
    %v1456 = vunpack.c.h.b16 %v672
    %v1457 = vunpack.c.l.b16 %v673
    %v1458 = vunpack.c.h.b16 %v673
    %v1459 = vunpack.c.l.b16 %v674
    %v1460 = vunpack.c.h.b16 %v674
    %v1461 = vunpack.c.l.b16 %v675
    %v1462 = vunpack.c.h.b16 %v675
    %v1463 = vunpack.c.l.b16 %v676
    %v1464 = vunpack.c.h.b16 %v676
    %v1465 = vunpack.c.l.b16 %v677
    %v1466 = vunpack.c.h.b16 %v677
    %v1467 = vunpack.c.l.b16 %v678
    %v1468 = vunpack.c.h.b16 %v678
    %v1469 = vunpack.c.l.b16 %v679
    %v1470 = vunpack.c.h.b16 %v679
    %v1471 = vunpack.c.l.b16 %v680
    %v1472 = vunpack.c.h.b16 %v680
    %v1473 = vunpack.c.l.b16 %v681
    %v1474 = vunpack.c.h.b16 %v681
    %v1475 = vunpack.c.l.b16 %v682
    %v1476 = vunpack.c.h.b16 %v682
    %v1477 = vunpack.c.l.b16 %v683
    %v1478 = vunpack.c.h.b16 %v683
    %v1479 = vunpack.c.l.b16 %v684
    %v1480 = vunpack.c.h.b16 %v684
    %v1481 = vunpack.c.l.b16 %v685
    %v1482 = vunpack.c.h.b16 %v685
    %v1483 = vunpack.c.l.b16 %v686
    %v1484 = vunpack.c.h.b16 %v686
    %v1485 = vunpack.c.l.b16 %v687
    %v1486 = vunpack.c.h.b16 %v687
    %v1487 = vunpack.c.l.b16 %v688
    %v1488 = vunpack.c.h.b16 %v688
    %v1489 = vunpack.c.l.b16 %v689
    %v1490 = vunpack.c.h.b16 %v689
    %v1491 = vunpack.c.l.b16 %v690
    %v1492 = vunpack.c.h.b16 %v690
    %v1493 = vunpack.c.l.b16 %v691
    %v1494 = vunpack.c.h.b16 %v691
    %v1495 = vunpack.c.l.b16 %v692
    %v1496 = vunpack.c.h.b16 %v692
    %v1497 = vunpack.c.l.b16 %v693
    %v1498 = vunpack.c.h.b16 %v693
    %v1499 = vunpack.c.l.b16 %v694
    %v1500 = vunpack.c.h.b16 %v694
    %v1501 = vunpack.c.l.b16 %v695
    %v1502 = vunpack.c.h.b16 %v695
    %v1503 = vunpack.c.l.b16 %v696
    %v1504 = vunpack.c.h.b16 %v696
    %v1505 = vunpack.c.l.b16 %v697
    %v1506 = vunpack.c.h.b16 %v697
    %v1507 = vunpack.c.l.b16 %v698
    %v1508 = vunpack.c.h.b16 %v698
    %v1509 = vunpack.c.l.b16 %v699
    %v1510 = vunpack.c.h.b16 %v699
    %v1511 = vunpack.c.l.b16 %v700
    %v1512 = vunpack.c.h.b16 %v700
    %v1513 = vunpack.c.l.b16 %v701
    %v1514 = vunpack.c.h.b16 %v701
    %v1515 = vunpack.c.l.b16 %v702
    %v1516 = vunpack.c.h.b16 %v702
    %v1517 = vunpack.c.l.b16 %v703
    %v1518 = vunpack.c.h.b16 %v703
    %v1519 = vunpack.c.l.b16 %v704
    %v1520 = vunpack.c.h.b16 %v704
    %v1521 = vunpack.c.l.b16 %v705
    %v1522 = vunpack.c.h.b16 %v705
    %v1523 = vunpack.c.l.b16 %v706
    %v1524 = vunpack.c.h.b16 %v706
    %v1525 = vunpack.c.l.b16 %v707
    %v1526 = vunpack.c.h.b16 %v707
    %v1527 = vunpack.c.l.b16 %v708
    %v1528 = vunpack.c.h.b16 %v708
    %v1529 = vunpack.c.l.b16 %v709
    %v1530 = vunpack.c.h.b16 %v709
    %v1531 = vunpack.c.l.b16 %v710
    %v1532 = vunpack.c.h.b16 %v710
    %v1533 = vunpack.c.l.b16 %v711
    %v1534 = vunpack.c.h.b16 %v711
    %v1535 = vunpack.c.l.b16 %v712
    %v1536 = vunpack.c.h.b16 %v712
    %v1537 = vunpack.c.l.b16 %v713
    %v1538 = vunpack.c.h.b16 %v713
    %v1539 = vunpack.c.l.b16 %v714
    %v1540 = vunpack.c.h.b16 %v714
    %v1541 = vunpack.c.l.b16 %v715
    %v1542 = vunpack.c.h.b16 %v715
    %v1543 = vunpack.c.l.b16 %v716
    %v1544 = vunpack.c.h.b16 %v716
    %v1545 = vunpack.c.l.b16 %v717
    %v1546 = vunpack.c.h.b16 %v717
    %v1547 = vunpack.c.l.b16 %v718
    %v1548 = vunpack.c.h.b16 %v718
    %v1549 = vunpack.c.l.b16 %v719
    %v1550 = vunpack.c.h.b16 %v719
    %v1551 = vunpack.c.l.b16 %v720
    %v1552 = vunpack.c.h.b16 %v720
    %v1553 = vunpack.c.l.b16 %v721
    %v1554 = vunpack.c.h.b16 %v721
    %v1555 = vunpack.c.l.b16 %v722
    %v1556 = vunpack.c.h.b16 %v722
    %v1557 = vunpack.c.l.b16 %v723
    %v1558 = vunpack.c.h.b16 %v723
    %v1559 = vunpack.c.l.b16 %v724
    %v1560 = vunpack.c.h.b16 %v724
    %v1561 = vunpack.c.l.b16 %v725
    %v1562 = vunpack.c.h.b16 %v725
    %v1563 = vunpack.c.l.b16 %v726
    %v1564 = vunpack.c.h.b16 %v726
    %v1565 = vunpack.c.l.b16 %v727
    %v1566 = vunpack.c.h.b16 %v727
    %v1567 = vunpack.c.l.b16 %v728
    %v1568 = vunpack.c.h.b16 %v728
    %v1569 = vunpack.c.l.b16 %v729
    %v1570 = vunpack.c.h.b16 %v729
    %v1571 = vunpack.c.l.b16 %v730
    %v1572 = vunpack.c.h.b16 %v730
    %v1573 = vunpack.c.l.b16 %v731
    %v1574 = vunpack.c.h.b16 %v731
    %v1575 = vunpack.c.l.b16 %v732
    %v1576 = vunpack.c.h.b16 %v732
    %v1577 = vunpack.c.l.b16 %v733
    %v1578 = vunpack.c.h.b16 %v733
    %v1579 = vunpack.c.l.b16 %v734
    %v1580 = vunpack.c.h.b16 %v734
    %v1581 = vunpack.c.l.b16 %v735
    %v1582 = vunpack.c.h.b16 %v735
    %v1583 = vunpack.c.l.b16 %v736
    %v1584 = vunpack.c.h.b16 %v736
    %v1585 = vunpack.c.l.b16 %v737
    %v1586 = vunpack.c.h.b16 %v737
    %v1587 = vunpack.c.l.b16 %v738
    %v1588 = vunpack.c.h.b16 %v738
    %v1589 = vunpack.c.l.b16 %v739
    %v1590 = vunpack.c.h.b16 %v739
    %v1591 = vunpack.c.l.b16 %v740
    %v1592 = vunpack.c.h.b16 %v740
    %v1593 = vunpack.c.l.b16 %v741
    %v1594 = vunpack.c.h.b16 %v741
    %v1595 = vunpack.c.l.b16 %v742
    %v1596 = vunpack.c.h.b16 %v742
    %v1597 = vunpack.c.l.b16 %v743
    %v1598 = vunpack.c.h.b16 %v743
    %v1599 = vunpack.c.l.b16 %v744
    %v1600 = vunpack.c.h.b16 %v744
    %v1601 = vunpack.c.l.b16 %v745
    %v1602 = vunpack.c.h.b16 %v745
    %v1603 = vunpack.c.l.b16 %v746
    %v1604 = vunpack.c.h.b16 %v746
    %v1605 = vunpack.c.l.b16 %v747
    %v1606 = vunpack.c.h.b16 %v747
    %v1607 = vunpack.c.l.b16 %v748
    %v1608 = vunpack.c.h.b16 %v748
    %v1609 = vunpack.c.l.b16 %v749
    %v1610 = vunpack.c.h.b16 %v749
    %v1611 = vunpack.c.l.b16 %v750
    %v1612 = vunpack.c.h.b16 %v750
    %v1613 = vunpack.c.l.b16 %v751
    %v1614 = vunpack.c.h.b16 %v751
    %v1615 = vunpack.c.l.b16 %v752
    %v1616 = vunpack.c.h.b16 %v752
    %v1617 = vunpack.c.l.b16 %v753
    %v1618 = vunpack.c.h.b16 %v753
    %v1619 = vunpack.c.l.b16 %v754
    %v1620 = vunpack.c.h.b16 %v754
    %v1621 = vunpack.c.l.b16 %v755
    %v1622 = vunpack.c.h.b16 %v755
    %v1623 = vunpack.c.l.b16 %v756
    %v1624 = vunpack.c.h.b16 %v756
    %v1625 = vunpack.c.l.b16 %v757
    %v1626 = vunpack.c.h.b16 %v757
    %v1627 = vunpack.c.l.b16 %v758
    %v1628 = vunpack.c.h.b16 %v758
    %v1629 = vunpack.c.l.b16 %v759
    %v1630 = vunpack.c.h.b16 %v759
    %v1631 = vunpack.c.l.b16 %v760
    %v1632 = vunpack.c.h.b16 %v760
    %v1633 = vunpack.c.l.b16 %v761
    %v1634 = vunpack.c.h.b16 %v761
    %v1635 = vunpack.c.l.b16 %v762
    %v1636 = vunpack.c.h.b16 %v762
    %v1637 = vunpack.c.l.b16 %v763
    %v1638 = vunpack.c.h.b16 %v763
    %v1639 = vunpack.c.l.b16 %v764
    %v1640 = vunpack.c.h.b16 %v764
    %v1641 = vunpack.c.l.b16 %v765
    %v1642 = vunpack.c.h.b16 %v765
    %v1643 = vunpack.c.l.b16 %v766
    %v1644 = vunpack.c.h.b16 %v766
    %v1645 = vunpack.c.l.b16 %v767
    %v1646 = vunpack.c.h.b16 %v767
    %v1647 = vunpack.c.l.b16 %v768
    %v1648 = vunpack.c.h.b16 %v768
    %v1649 = vunpack.c.l.b16 %v769
    %v1650 = vunpack.c.h.b16 %v769
    %v1651 = vunpack.c.l.b16 %v770
    %v1652 = vunpack.c.h.b16 %v770
    %v1653 = vunpack.c.l.b16 %v771
    %v1654 = vunpack.c.h.b16 %v771
    %v1655 = vunpack.c.l.b16 %v772
    %v1656 = vunpack.c.h.b16 %v772
    %v1657 = vunpack.c.l.b16 %v773
    %v1658 = vunpack.c.h.b16 %v773
    %v1659 = vunpack.c.l.b16 %v774
    %v1660 = vunpack.c.h.b16 %v774
    %v1661 = vunpack.c.l.b16 %v775
    %v1662 = vunpack.c.h.b16 %v775
    %v1663 = vunpack.c.l.b16 %v776
    %v1664 = vunpack.c.h.b16 %v776
    %v1665 = vunpack.c.l.b16 %v777
    %v1666 = vunpack.c.h.b16 %v777
    %v1667 = vunpack.c.l.b16 %v778
    %v1668 = vunpack.c.h.b16 %v778
    %v1669 = vunpack.c.l.b16 %v779
    %v1670 = vunpack.c.h.b16 %v779
    %v1671 = vunpack.c.l.b16 %v780
    %v1672 = vunpack.c.h.b16 %v780
    %v1673 = vunpack.c.l.b16 %v781
    %v1674 = vunpack.c.h.b16 %v781
    %v1675 = vunpack.c.l.b16 %v782
    %v1676 = vunpack.c.h.b16 %v782
    %v1677 = vunpack.c.l.b16 %v783
    %v1678 = vunpack.c.h.b16 %v783
    %v1679 = vunpack.c.l.b16 %v784
    %v1680 = vunpack.c.h.b16 %v784
    %v1681 = vunpack.c.l.b16 %v785
    %v1682 = vunpack.c.h.b16 %v785
    %v1683 = vunpack.c.l.b16 %v786
    %v1684 = vunpack.c.h.b16 %v786
    %v1685 = vunpack.c.l.b16 %v787
    %v1686 = vunpack.c.h.b16 %v787
    %v1687 = vunpack.c.l.b16 %v788
    %v1688 = vunpack.c.h.b16 %v788
    %v1689 = vunpack.c.l.b16 %v789
    %v1690 = vunpack.c.h.b16 %v789
    %v1691 = vunpack.c.l.b16 %v790
    %v1692 = vunpack.c.h.b16 %v790
    %v1693 = vunpack.c.l.b16 %v791
    %v1694 = vunpack.c.h.b16 %v791
    %v1695 = vunpack.c.l.b16 %v792
    %v1696 = vunpack.c.h.b16 %v792
    %v1697 = vunpack.c.l.b16 %v793
    %v1698 = vunpack.c.h.b16 %v793
    %v1699 = vunpack.c.l.b16 %v794
    %v1700 = vunpack.c.h.b16 %v794
    %v1701 = vunpack.c.l.b16 %v795
    %v1702 = vunpack.c.h.b16 %v795
    %v1703 = vunpack.c.l.b16 %v796
    %v1704 = vunpack.c.h.b16 %v796
    %v1705 = vunpack.c.l.b16 %v797
    %v1706 = vunpack.c.h.b16 %v797
    %v1707 = vunpack.c.l.b16 %v798
    %v1708 = vunpack.c.h.b16 %v798
    %v1709 = vunpack.c.l.b16 %v799
    %v1710 = vunpack.c.h.b16 %v799
    %v1711 = vunpack.c.l.b16 %v800
    %v1712 = vunpack.c.h.b16 %v800
    %v1713 = vunpack.c.l.b16 %v801
    %v1714 = vunpack.c.h.b16 %v801
    %v1715 = vunpack.c.l.b16 %v802
    %v1716 = vunpack.c.h.b16 %v802
    %v1717 = vunpack.c.l.b16 %v803
    %v1718 = vunpack.c.h.b16 %v803
    %v1719 = vunpack.c.l.b16 %v804
    %v1720 = vunpack.c.h.b16 %v804
    %v1721 = vunpack.c.l.b16 %v805
    %v1722 = vunpack.c.h.b16 %v805
    %v1723 = vunpack.c.l.b16 %v806
    %v1724 = vunpack.c.h.b16 %v806
    %v1725 = vunpack.c.l.b16 %v807
    %v1726 = vunpack.c.h.b16 %v807
    %v1727 = vunpack.c.l.b16 %v808
    %v1728 = vunpack.c.h.b16 %v808
    %v1729 = vunpack.c.l.b16 %v809
    %v1730 = vunpack.c.h.b16 %v809
    %v1731 = vunpack.c.l.b16 %v810
    %v1732 = vunpack.c.h.b16 %v810
    %v1733 = vunpack.c.l.b16 %v811
    %v1734 = vunpack.c.h.b16 %v811
    %v1735 = vunpack.c.l.b16 %v812
    %v1736 = vunpack.c.h.b16 %v812
    %v1737 = vunpack.c.l.b16 %v813
    %v1738 = vunpack.c.h.b16 %v813
    %v1739 = vunpack.c.l.b16 %v814
    %v1740 = vunpack.c.h.b16 %v814
    %v1741 = vunpack.c.l.b16 %v815
    %v1742 = vunpack.c.h.b16 %v815
    %v1743 = vunpack.c.l.b16 %v816
    %v1744 = vunpack.c.h.b16 %v816
    %v1745 = vunpack.c.l.b16 %v817
    %v1746 = vunpack.c.h.b16 %v817
    %v1747 = vunpack.c.l.b16 %v818
    %v1748 = vunpack.c.h.b16 %v818
    %v1749 = vunpack.c.l.b16 %v819
    %v1750 = vunpack.c.h.b16 %v819
    %v1751 = vunpack.c.l.b16 %v820
    %v1752 = vunpack.c.h.b16 %v820
    %v1753 = vunpack.c.l.b16 %v821
    %v1754 = vunpack.c.h.b16 %v821
    %v1755 = vunpack.c.l.b16 %v822
    %v1756 = vunpack.c.h.b16 %v822
    %v1757 = vunpack.c.l.b16 %v823
    %v1758 = vunpack.c.h.b16 %v823
    %v1759 = vunpack.c.l.b16 %v824
    %v1760 = vunpack.c.h.b16 %v824
    %v1761 = vunpack.c.l.b16 %v825
    %v1762 = vunpack.c.h.b16 %v825
    %v1763 = vunpack.c.l.b16 %v826
    %v1764 = vunpack.c.h.b16 %v826
    %v1765 = vunpack.c.l.b16 %v827
    %v1766 = vunpack.c.h.b16 %v827
    %v1767 = vunpack.c.l.b16 %v828
    %v1768 = vunpack.c.h.b16 %v828
    %v1769 = vunpack.c.l.b16 %v829
    %v1770 = vunpack.c.h.b16 %v829
    %v1771 = vunpack.c.l.b16 %v830
    %v1772 = vunpack.c.h.b16 %v830
    %v1773 = vunpack.c.l.b16 %v831
    %v1774 = vunpack.c.h.b16 %v831
    %v1775 = vunpack.c.l.b16 %v832
    %v1776 = vunpack.c.h.b16 %v832
    %v1777 = vunpack.c.l.b16 %v833
    %v1778 = vunpack.c.h.b16 %v833
    %v1779 = vunpack.c.l.b16 %v834
    %v1780 = vunpack.c.h.b16 %v834
    %v1781 = vunpack.c.l.b16 %v835
    %v1782 = vunpack.c.h.b16 %v835
    %v1783 = vunpack.c.l.b16 %v836
    %v1784 = vunpack.c.h.b16 %v836
    %v1785 = vunpack.c.l.b16 %v837
    %v1786 = vunpack.c.h.b16 %v837
    %v1787 = vunpack.c.l.b16 %v838
    %v1788 = vunpack.c.h.b16 %v838
    %v1789 = vunpack.c.l.b16 %v839
    %v1790 = vunpack.c.h.b16 %v839
    %v1791 = vunpack.c.l.b16 %v840
    %v1792 = vunpack.c.h.b16 %v840
    %v1793 = vunpack.c.l.b16 %v841
    %v1794 = vunpack.c.h.b16 %v841
    %v1795 = vunpack.c.l.b16 %v842
    %v1796 = vunpack.c.h.b16 %v842
    %v1797 = vunpack.c.l.b16 %v843
    %v1798 = vunpack.c.h.b16 %v843
    %v1799 = vunpack.c.l.b16 %v844
    %v1800 = vunpack.c.h.b16 %v844
    %v1801 = vunpack.c.l.b16 %v845
    %v1802 = vunpack.c.h.b16 %v845
    %v1803 = vunpack.c.l.b16 %v846
    %v1804 = vunpack.c.h.b16 %v846
    %v1805 = vunpack.c.l.b16 %v847
    %v1806 = vunpack.c.h.b16 %v847
    %v1807 = vunpack.c.l.b16 %v848
    %v1808 = vunpack.c.h.b16 %v848
    %v1809 = vunpack.c.l.b16 %v849
    %v1810 = vunpack.c.h.b16 %v849
    %v1811 = vunpack.c.l.b16 %v850
    %v1812 = vunpack.c.h.b16 %v850
    %v1813 = vunpack.c.l.b16 %v851
    %v1814 = vunpack.c.h.b16 %v851
    %v1815 = vunpack.c.l.b16 %v852
    %v1816 = vunpack.c.h.b16 %v852
    %v1817 = vunpack.c.l.b16 %v853
    %v1818 = vunpack.c.h.b16 %v853
    %v1819 = vunpack.c.l.b16 %v854
    %v1820 = vunpack.c.h.b16 %v854
    %v1821 = vunpack.c.l.b16 %v855
    %v1822 = vunpack.c.h.b16 %v855
    %v1823 = vunpack.c.l.b16 %v856
    %v1824 = vunpack.c.h.b16 %v856
    %v1825 = vunpack.c.l.b16 %v857
    %v1826 = vunpack.c.h.b16 %v857
    %v1827 = vunpack.c.l.b16 %v858
    %v1828 = vunpack.c.h.b16 %v858
    %v1829 = vunpack.c.l.b16 %v859
    %v1830 = vunpack.c.h.b16 %v859
    %v1831 = vunpack.c.l.b16 %v860
    %v1832 = vunpack.c.h.b16 %v860
    %v1833 = vunpack.c.l.b16 %v861
    %v1834 = vunpack.c.h.b16 %v861
    %v1835 = vunpack.c.l.b16 %v862
    %v1836 = vunpack.c.h.b16 %v862
    %v1837 = vunpack.c.l.b16 %v863
    %v1838 = vunpack.c.h.b16 %v863
    %v1839 = vunpack.c.l.b16 %v864
    %v1840 = vunpack.c.h.b16 %v864
    %v1841 = vunpack.c.l.b16 %v865
    %v1842 = vunpack.c.h.b16 %v865
    %v1843 = vunpack.c.l.b16 %v866
    %v1844 = vunpack.c.h.b16 %v866
    %v1845 = vunpack.c.l.b16 %v867
    %v1846 = vunpack.c.h.b16 %v867
    %v1847 = vunpack.c.l.b16 %v868
    %v1848 = vunpack.c.h.b16 %v868
    %v1849 = vunpack.c.l.b16 %v869
    %v1850 = vunpack.c.h.b16 %v869
    %v1851 = vunpack.c.l.b16 %v870
    %v1852 = vunpack.c.h.b16 %v870
    %v1853 = vpack.c.b16 %v1217, %v1213
    %v1854 = vpack.c.b16 %v1218, %v1214
    %v1855 = vpack.c.b16 %v1219, %v1215
    %v1856 = vpack.c.b16 %v1220, %v1216
    %v1857 = vpack.c.b16 %v1225, %v1221
    %v1858 = vpack.c.b16 %v1226, %v1222
    %v1859 = vpack.c.b16 %v1227, %v1223
    %v1860 = vpack.c.b16 %v1228, %v1224
    %v1861 = vpack.c.b16 %v1233, %v1229
    %v1862 = vpack.c.b16 %v1234, %v1230
    %v1863 = vpack.c.b16 %v1235, %v1231
    %v1864 = vpack.c.b16 %v1236, %v1232
    %v1865 = vpack.c.b16 %v1241, %v1237
    %v1866 = vpack.c.b16 %v1242, %v1238
    %v1867 = vpack.c.b16 %v1243, %v1239
    %v1868 = vpack.c.b16 %v1244, %v1240
    %v1869 = vpack.c.b16 %v1249, %v1245
    %v1870 = vpack.c.b16 %v1250, %v1246
    %v1871 = vpack.c.b16 %v1251, %v1247
    %v1872 = vpack.c.b16 %v1252, %v1248
    %v1873 = vpack.c.b16 %v1257, %v1253
    %v1874 = vpack.c.b16 %v1258, %v1254
    %v1875 = vpack.c.b16 %v1259, %v1255
    %v1876 = vpack.c.b16 %v1260, %v1256
    %v1877 = vpack.c.b16 %v1265, %v1261
    %v1878 = vpack.c.b16 %v1266, %v1262
    %v1879 = vpack.c.b16 %v1267, %v1263
    %v1880 = vpack.c.b16 %v1268, %v1264
    %v1881 = vpack.c.b16 %v1273, %v1269
    %v1882 = vpack.c.b16 %v1274, %v1270
    %v1883 = vpack.c.b16 %v1275, %v1271
    %v1884 = vpack.c.b16 %v1276, %v1272
    %v1885 = vpack.c.b16 %v1281, %v1277
    %v1886 = vpack.c.b16 %v1282, %v1278
    %v1887 = vpack.c.b16 %v1283, %v1279
    %v1888 = vpack.c.b16 %v1284, %v1280
    %v1889 = vpack.c.b16 %v1289, %v1285
    %v1890 = vpack.c.b16 %v1290, %v1286
    %v1891 = vpack.c.b16 %v1291, %v1287
    %v1892 = vpack.c.b16 %v1292, %v1288
    %v1893 = vpack.c.b16 %v1297, %v1293
    %v1894 = vpack.c.b16 %v1298, %v1294
    %v1895 = vpack.c.b16 %v1299, %v1295
    %v1896 = vpack.c.b16 %v1300, %v1296
    %v1897 = vpack.c.b16 %v1305, %v1301
    %v1898 = vpack.c.b16 %v1306, %v1302
    %v1899 = vpack.c.b16 %v1307, %v1303
    %v1900 = vpack.c.b16 %v1308, %v1304
    %v1901 = vpack.c.b16 %v1313, %v1309
    %v1902 = vpack.c.b16 %v1314, %v1310
    %v1903 = vpack.c.b16 %v1315, %v1311
    %v1904 = vpack.c.b16 %v1316, %v1312
    %v1905 = vpack.c.b16 %v1321, %v1317
    %v1906 = vpack.c.b16 %v1322, %v1318
    %v1907 = vpack.c.b16 %v1323, %v1319
    %v1908 = vpack.c.b16 %v1324, %v1320
    %v1909 = vpack.c.b16 %v1329, %v1325
    %v1910 = vpack.c.b16 %v1330, %v1326
    %v1911 = vpack.c.b16 %v1331, %v1327
    %v1912 = vpack.c.b16 %v1332, %v1328
    %v1913 = vpack.c.b16 %v1337, %v1333
    %v1914 = vpack.c.b16 %v1338, %v1334
    %v1915 = vpack.c.b16 %v1339, %v1335
    %v1916 = vpack.c.b16 %v1340, %v1336
    %v1917 = vpack.c.b16 %v1345, %v1341
    %v1918 = vpack.c.b16 %v1346, %v1342
    %v1919 = vpack.c.b16 %v1347, %v1343
    %v1920 = vpack.c.b16 %v1348, %v1344
    %v1921 = vpack.c.b16 %v1353, %v1349
    %v1922 = vpack.c.b16 %v1354, %v1350
    %v1923 = vpack.c.b16 %v1355, %v1351
    %v1924 = vpack.c.b16 %v1356, %v1352
    %v1925 = vpack.c.b16 %v1361, %v1357
    %v1926 = vpack.c.b16 %v1362, %v1358
    %v1927 = vpack.c.b16 %v1363, %v1359
    %v1928 = vpack.c.b16 %v1364, %v1360
    %v1929 = vpack.c.b16 %v1369, %v1365
    %v1930 = vpack.c.b16 %v1370, %v1366
    %v1931 = vpack.c.b16 %v1371, %v1367
    %v1932 = vpack.c.b16 %v1372, %v1368
    %v1933 = vpack.c.b16 %v1377, %v1373
    %v1934 = vpack.c.b16 %v1378, %v1374
    %v1935 = vpack.c.b16 %v1379, %v1375
    %v1936 = vpack.c.b16 %v1380, %v1376
    %v1937 = vpack.c.b16 %v1385, %v1381
    %v1938 = vpack.c.b16 %v1386, %v1382
    %v1939 = vpack.c.b16 %v1387, %v1383
    %v1940 = vpack.c.b16 %v1388, %v1384
    %v1941 = vpack.c.b16 %v1393, %v1389
    %v1942 = vpack.c.b16 %v1394, %v1390
    %v1943 = vpack.c.b16 %v1395, %v1391
    %v1944 = vpack.c.b16 %v1396, %v1392
    %v1945 = vpack.c.b16 %v1401, %v1397
    %v1946 = vpack.c.b16 %v1402, %v1398
    %v1947 = vpack.c.b16 %v1403, %v1399
    %v1948 = vpack.c.b16 %v1404, %v1400
    %v1949 = vpack.c.b16 %v1409, %v1405
    %v1950 = vpack.c.b16 %v1410, %v1406
    %v1951 = vpack.c.b16 %v1411, %v1407
    %v1952 = vpack.c.b16 %v1412, %v1408
    %v1953 = vpack.c.b16 %v1417, %v1413
    %v1954 = vpack.c.b16 %v1418, %v1414
    %v1955 = vpack.c.b16 %v1419, %v1415
    %v1956 = vpack.c.b16 %v1420, %v1416
    %v1957 = vpack.c.b16 %v1425, %v1421
    %v1958 = vpack.c.b16 %v1426, %v1422
    %v1959 = vpack.c.b16 %v1427, %v1423
    %v1960 = vpack.c.b16 %v1428, %v1424
    %v1961 = vpack.c.b16 %v1433, %v1429
    %v1962 = vpack.c.b16 %v1434, %v1430
    %v1963 = vpack.c.b16 %v1435, %v1431
    %v1964 = vpack.c.b16 %v1436, %v1432
    %v1965 = vpack.c.b16 %v1441, %v1437
    %v1966 = vpack.c.b16 %v1442, %v1438
    %v1967 = vpack.c.b16 %v1443, %v1439
    %v1968 = vpack.c.b16 %v1444, %v1440
    %v1969 = vpack.c.b16 %v1449, %v1445
    %v1970 = vpack.c.b16 %v1450, %v1446
    %v1971 = vpack.c.b16 %v1451, %v1447
    %v1972 = vpack.c.b16 %v1452, %v1448
    %v1973 = vpack.c.b16 %v1457, %v1453
    %v1974 = vpack.c.b16 %v1458, %v1454
    %v1975 = vpack.c.b16 %v1459, %v1455
    %v1976 = vpack.c.b16 %v1460, %v1456
    %v1977 = vpack.c.b16 %v1465, %v1461
    %v1978 = vpack.c.b16 %v1466, %v1462
    %v1979 = vpack.c.b16 %v1467, %v1463
    %v1980 = vpack.c.b16 %v1468, %v1464
    %v1981 = vpack.c.b16 %v1473, %v1469
    %v1982 = vpack.c.b16 %v1474, %v1470
    %v1983 = vpack.c.b16 %v1475, %v1471
    %v1984 = vpack.c.b16 %v1476, %v1472
    %v1985 = vpack.c.b16 %v1481, %v1477
    %v1986 = vpack.c.b16 %v1482, %v1478
    %v1987 = vpack.c.b16 %v1483, %v1479
    %v1988 = vpack.c.b16 %v1484, %v1480
    %v1989 = vpack.c.b16 %v1489, %v1485
    %v1990 = vpack.c.b16 %v1490, %v1486
    %v1991 = vpack.c.b16 %v1491, %v1487
    %v1992 = vpack.c.b16 %v1492, %v1488
    %v1993 = vpack.c.b16 %v1497, %v1493
    %v1994 = vpack.c.b16 %v1498, %v1494
    %v1995 = vpack.c.b16 %v1499, %v1495
    %v1996 = vpack.c.b16 %v1500, %v1496
    %v1997 = vpack.c.b16 %v1505, %v1501
    %v1998 = vpack.c.b16 %v1506, %v1502
    %v1999 = vpack.c.b16 %v1507, %v1503
    %v2000 = vpack.c.b16 %v1508, %v1504
    %v2001 = vpack.c.b16 %v1513, %v1509
    %v2002 = vpack.c.b16 %v1514, %v1510
    %v2003 = vpack.c.b16 %v1515, %v1511
    %v2004 = vpack.c.b16 %v1516, %v1512
    %v2005 = vpack.c.b16 %v1521, %v1517
    %v2006 = vpack.c.b16 %v1522, %v1518
    %v2007 = vpack.c.b16 %v1523, %v1519
    %v2008 = vpack.c.b16 %v1524, %v1520
    %v2009 = vpack.c.b16 %v1529, %v1525
    %v2010 = vpack.c.b16 %v1530, %v1526
    %v2011 = vpack.c.b16 %v1531, %v1527
    %v2012 = vpack.c.b16 %v1532, %v1528
    %v2013 = vpack.c.b16 %v1537, %v1533
    %v2014 = vpack.c.b16 %v1538, %v1534
    %v2015 = vpack.c.b16 %v1539, %v1535
    %v2016 = vpack.c.b16 %v1540, %v1536
    %v2017 = vpack.c.b16 %v1545, %v1541
    %v2018 = vpack.c.b16 %v1546, %v1542
    %v2019 = vpack.c.b16 %v1547, %v1543
    %v2020 = vpack.c.b16 %v1548, %v1544
    %v2021 = vpack.c.b16 %v1553, %v1549
    %v2022 = vpack.c.b16 %v1554, %v1550
    %v2023 = vpack.c.b16 %v1555, %v1551
    %v2024 = vpack.c.b16 %v1556, %v1552
    %v2025 = vpack.c.b16 %v1561, %v1557
    %v2026 = vpack.c.b16 %v1562, %v1558
    %v2027 = vpack.c.b16 %v1563, %v1559
    %v2028 = vpack.c.b16 %v1564, %v1560
    %v2029 = vpack.c.b16 %v1569, %v1565
    %v2030 = vpack.c.b16 %v1570, %v1566
    %v2031 = vpack.c.b16 %v1571, %v1567
    %v2032 = vpack.c.b16 %v1572, %v1568
    %v2033 = vpack.c.b16 %v1577, %v1573
    %v2034 = vpack.c.b16 %v1578, %v1574
    %v2035 = vpack.c.b16 %v1579, %v1575
    %v2036 = vpack.c.b16 %v1580, %v1576
    %v2037 = vpack.c.b16 %v1585, %v1581
    %v2038 = vpack.c.b16 %v1586, %v1582
    %v2039 = vpack.c.b16 %v1587, %v1583
    %v2040 = vpack.c.b16 %v1588, %v1584
    %v2041 = vpack.c.b16 %v1593, %v1589
    %v2042 = vpack.c.b16 %v1594, %v1590
    %v2043 = vpack.c.b16 %v1595, %v1591
    %v2044 = vpack.c.b16 %v1596, %v1592
    %v2045 = vpack.c.b16 %v1601, %v1597
    %v2046 = vpack.c.b16 %v1602, %v1598
    %v2047 = vpack.c.b16 %v1603, %v1599
    %v2048 = vpack.c.b16 %v1604, %v1600
    %v2049 = vpack.c.b16 %v1609, %v1605
    %v2050 = vpack.c.b16 %v1610, %v1606
    %v2051 = vpack.c.b16 %v1611, %v1607
    %v2052 = vpack.c.b16 %v1612, %v1608
    %v2053 = vpack.c.b16 %v1617, %v1613
    %v2054 = vpack.c.b16 %v1618, %v1614
    %v2055 = vpack.c.b16 %v1619, %v1615
    %v2056 = vpack.c.b16 %v1620, %v1616
    %v2057 = vpack.c.b16 %v1625, %v1621
    %v2058 = vpack.c.b16 %v1626, %v1622
    %v2059 = vpack.c.b16 %v1627, %v1623
    %v2060 = vpack.c.b16 %v1628, %v1624
    %v2061 = vpack.c.b16 %v1633, %v1629
    %v2062 = vpack.c.b16 %v1634, %v1630
    %v2063 = vpack.c.b16 %v1635, %v1631
    %v2064 = vpack.c.b16 %v1636, %v1632
    %v2065 = vpack.c.b16 %v1641, %v1637
    %v2066 = vpack.c.b16 %v1642, %v1638
    %v2067 = vpack.c.b16 %v1643, %v1639
    %v2068 = vpack.c.b16 %v1644, %v1640
    %v2069 = vpack.c.b16 %v1649, %v1645
    %v2070 = vpack.c.b16 %v1650, %v1646
    %v2071 = vpack.c.b16 %v1651, %v1647
    %v2072 = vpack.c.b16 %v1652, %v1648
    %v2073 = vpack.c.b16 %v1657, %v1653
    %v2074 = vpack.c.b16 %v1658, %v1654
    %v2075 = vpack.c.b16 %v1659, %v1655
    %v2076 = vpack.c.b16 %v1660, %v1656
    %v2077 = vpack.c.b16 %v1665, %v1661
    %v2078 = vpack.c.b16 %v1666, %v1662
    %v2079 = vpack.c.b16 %v1667, %v1663
    %v2080 = vpack.c.b16 %v1668, %v1664
    %v2081 = vpack.c.b16 %v1673, %v1669
    %v2082 = vpack.c.b16 %v1674, %v1670
    %v2083 = vpack.c.b16 %v1675, %v1671
    %v2084 = vpack.c.b16 %v1676, %v1672
    %v2085 = vpack.c.b16 %v1681, %v1677
    %v2086 = vpack.c.b16 %v1682, %v1678
    %v2087 = vpack.c.b16 %v1683, %v1679
    %v2088 = vpack.c.b16 %v1684, %v1680
    %v2089 = vpack.c.b16 %v1689, %v1685
    %v2090 = vpack.c.b16 %v1690, %v1686
    %v2091 = vpack.c.b16 %v1691, %v1687
    %v2092 = vpack.c.b16 %v1692, %v1688
    %v2093 = vpack.c.b16 %v1697, %v1693
    %v2094 = vpack.c.b16 %v1698, %v1694
    %v2095 = vpack.c.b16 %v1699, %v1695
    %v2096 = vpack.c.b16 %v1700, %v1696
    %v2097 = vpack.c.b16 %v1705, %v1701
    %v2098 = vpack.c.b16 %v1706, %v1702
    %v2099 = vpack.c.b16 %v1707, %v1703
    %v2100 = vpack.c.b16 %v1708, %v1704
    %v2101 = vpack.c.b16 %v1713, %v1709
    %v2102 = vpack.c.b16 %v1714, %v1710
    %v2103 = vpack.c.b16 %v1715, %v1711
    %v2104 = vpack.c.b16 %v1716, %v1712
    %v2105 = vpack.c.b16 %v1721, %v1717
    %v2106 = vpack.c.b16 %v1722, %v1718
    %v2107 = vpack.c.b16 %v1723, %v1719
    %v2108 = vpack.c.b16 %v1724, %v1720
    %v2109 = vpack.c.b16 %v1729, %v1725
    %v2110 = vpack.c.b16 %v1730, %v1726
    %v2111 = vpack.c.b16 %v1731, %v1727
    %v2112 = vpack.c.b16 %v1732, %v1728
    %v2113 = vpack.c.b16 %v1737, %v1733
    %v2114 = vpack.c.b16 %v1738, %v1734
    %v2115 = vpack.c.b16 %v1739, %v1735
    %v2116 = vpack.c.b16 %v1740, %v1736
    %v2117 = vpack.c.b16 %v1745, %v1741
    %v2118 = vpack.c.b16 %v1746, %v1742
    %v2119 = vpack.c.b16 %v1747, %v1743
    %v2120 = vpack.c.b16 %v1748, %v1744
    %v2121 = vpack.c.b16 %v1753, %v1749
    %v2122 = vpack.c.b16 %v1754, %v1750
    %v2123 = vpack.c.b16 %v1755, %v1751
    %v2124 = vpack.c.b16 %v1756, %v1752
    %v2125 = vpack.c.b16 %v1761, %v1757
    %v2126 = vpack.c.b16 %v1762, %v1758
    %v2127 = vpack.c.b16 %v1763, %v1759
    %v2128 = vpack.c.b16 %v1764, %v1760
    %v2129 = vpack.c.b16 %v1769, %v1765
    %v2130 = vpack.c.b16 %v1770, %v1766
    %v2131 = vpack.c.b16 %v1771, %v1767
    %v2132 = vpack.c.b16 %v1772, %v1768
    %v2133 = vpack.c.b16 %v1777, %v1773
    %v2134 = vpack.c.b16 %v1778, %v1774
    %v2135 = vpack.c.b16 %v1779, %v1775
    %v2136 = vpack.c.b16 %v1780, %v1776
    %v2137 = vpack.c.b16 %v1785, %v1781
    %v2138 = vpack.c.b16 %v1786, %v1782
    %v2139 = vpack.c.b16 %v1787, %v1783
    %v2140 = vpack.c.b16 %v1788, %v1784
    %v2141 = vpack.c.b16 %v1793, %v1789
    %v2142 = vpack.c.b16 %v1794, %v1790
    %v2143 = vpack.c.b16 %v1795, %v1791
    %v2144 = vpack.c.b16 %v1796, %v1792
    %v2145 = vpack.c.b16 %v1801, %v1797
    %v2146 = vpack.c.b16 %v1802, %v1798
    %v2147 = vpack.c.b16 %v1803, %v1799
    %v2148 = vpack.c.b16 %v1804, %v1800
    %v2149 = vpack.c.b16 %v1809, %v1805
    %v2150 = vpack.c.b16 %v1810, %v1806
    %v2151 = vpack.c.b16 %v1811, %v1807
    %v2152 = vpack.c.b16 %v1812, %v1808
    %v2153 = vpack.c.b16 %v1817, %v1813
    %v2154 = vpack.c.b16 %v1818, %v1814
    %v2155 = vpack.c.b16 %v1819, %v1815
    %v2156 = vpack.c.b16 %v1820, %v1816
    %v2157 = vpack.c.b16 %v1825, %v1821
    %v2158 = vpack.c.b16 %v1826, %v1822
    %v2159 = vpack.c.b16 %v1827, %v1823
    %v2160 = vpack.c.b16 %v1828, %v1824
    %v2161 = vpack.c.b16 %v1833, %v1829
    %v2162 = vpack.c.b16 %v1834, %v1830
    %v2163 = vpack.c.b16 %v1835, %v1831
    %v2164 = vpack.c.b16 %v1836, %v1832
    %v2165 = vpack.c.b16 %v1841, %v1837
    %v2166 = vpack.c.b16 %v1842, %v1838
    %v2167 = vpack.c.b16 %v1843, %v1839
    %v2168 = vpack.c.b16 %v1844, %v1840
    %v2169 = vpack.c.b16 %v1849, %v1845
    %v2170 = vpack.c.b16 %v1850, %v1846
    %v2171 = vpack.c.b16 %v1851, %v1847
    %v2172 = vpack.c.b16 %v1852, %v1848
    %2493 = vmatprep.subr.bf16.mxu0 %v1854
    %2494 = vmatpush1.bf16.msra.mxu0 %v1853
    %2495 = vmatprep.subr.bf16.mxu0 %v1858
    %2496 = vmatpush1.bf16.msra.mxu0 %v1857
    %2497 = vmatprep.subr.bf16.mxu0 %v1862
    %2498 = vmatpush1.bf16.msra.mxu0 %v1861
    %2499 = vmatprep.subr.bf16.mxu0 %v1866
    %2500 = vmatpush1.bf16.msra.mxu0 %v1865
    %2501 = vmatprep.subr.bf16.mxu0 %v1870
    %2502 = vmatpush1.bf16.msra.mxu0 %v1869
    %2503 = vmatprep.subr.bf16.mxu0 %v1874
    %2504 = vmatpush1.bf16.msra.mxu0 %v1873
    %2505 = vmatprep.subr.bf16.mxu0 %v1878
    %2506 = vmatpush1.bf16.msra.mxu0 %v1877
    %2507 = vmatprep.subr.bf16.mxu0 %v1882
    %2508 = vmatpush1.bf16.msra.mxu0 %v1881
    %2509 = vmatprep.subr.bf16.mxu0 %v1886
    %2510 = vmatpush1.bf16.msra.mxu0 %v1885
    %2511 = vmatprep.subr.bf16.mxu0 %v1890
    %2512 = vmatpush1.bf16.msra.mxu0 %v1889
    %2513 = vmatprep.subr.bf16.mxu0 %v1894
    %2514 = vmatpush1.bf16.msra.mxu0 %v1893
    %2515 = vmatprep.subr.bf16.mxu0 %v1898
    %2516 = vmatpush1.bf16.msra.mxu0 %v1897
    %2517 = vmatprep.subr.bf16.mxu0 %v1902
    %2518 = vmatpush1.bf16.msra.mxu0 %v1901
    %2519 = vmatprep.subr.bf16.mxu0 %v1906
    %2520 = vmatpush1.bf16.msra.mxu0 %v1905
    %2521 = vmatprep.subr.bf16.mxu0 %v1910
    %2522 = vmatpush1.bf16.msra.mxu0 %v1909
    %2523 = vmatprep.subr.bf16.mxu0 %v1914
    %2524 = vmatpush1.bf16.msra.mxu0 %v1913
    %2525 = vmatprep.mubr.bf16.mxu0 %v542
    %2526 = vmatmul.mubr.bf16.gmra.mrb[0].mxu0 %v541
    %v2527 = vpop.f32.mrb[0].mxu0
    %v2528 = vadd.f32 %v876, %v2527
    %v2529 = vpop.f32.mrb[0].mxu0
    %v2530 = vadd.f32 %v880, %v2529
    %v2531 = vpop.f32.mrb[0].mxu0
    %v2532 = vpop.f32.mrb[0].mxu0
    %2533 = vdwg.mxu0
    %2534 = vmatprep.subr.bf16.mxu0 %v1918
    %2535 = vmatpush1.bf16.msra.mxu0 %v1917
    %2536 = vmatprep.subr.bf16.mxu0 %v1922
    %2537 = vmatpush1.bf16.msra.mxu0 %v1921
    %2538 = vmatprep.subr.bf16.mxu0 %v1926
    %2539 = vmatpush1.bf16.msra.mxu0 %v1925
    %2540 = vmatprep.subr.bf16.mxu0 %v1930
    %2541 = vmatpush1.bf16.msra.mxu0 %v1929
    %2542 = vmatprep.subr.bf16.mxu0 %v1934
    %2543 = vmatpush1.bf16.msra.mxu0 %v1933
    %2544 = vmatprep.subr.bf16.mxu0 %v1938
    %2545 = vmatpush1.bf16.msra.mxu0 %v1937
    %2546 = vmatprep.subr.bf16.mxu0 %v1942
    %2547 = vmatpush1.bf16.msra.mxu0 %v1941
    %2548 = vmatprep.subr.bf16.mxu0 %v1946
    %2549 = vmatpush1.bf16.msra.mxu0 %v1945
    %2550 = vmatprep.subr.bf16.mxu0 %v1950
    %2551 = vmatpush1.bf16.msra.mxu0 %v1949
    %2552 = vmatprep.subr.bf16.mxu0 %v1954
    %2553 = vmatpush1.bf16.msra.mxu0 %v1953
    %2554 = vmatprep.subr.bf16.mxu0 %v1958
    %2555 = vmatpush1.bf16.msra.mxu0 %v1957
    %2556 = vmatprep.subr.bf16.mxu0 %v1962
    %2557 = vmatpush1.bf16.msra.mxu0 %v1961
    %2558 = vmatprep.subr.bf16.mxu0 %v1966
    %2559 = vmatpush1.bf16.msra.mxu0 %v1965
    %2560 = vmatprep.subr.bf16.mxu0 %v1970
    %2561 = vmatpush1.bf16.msra.mxu0 %v1969
    %2562 = vmatprep.subr.bf16.mxu0 %v1974
    %2563 = vmatpush1.bf16.msra.mxu0 %v1973
    %2564 = vmatprep.subr.bf16.mxu0 %v1978
    %2565 = vmatpush1.bf16.msra.mxu0 %v1977
    %2566 = vmatprep.mubr.bf16.mxu0 %v544
    %2567 = vmatmul.mubr.bf16.gmra.mrb[0].mxu0 %v543
    %v2568 = vpop.f32.mrb[0].mxu0
    %v2569 = vadd.f32 %v2528, %v2568
    %v2570 = vpop.f32.mrb[0].mxu0
    %v2571 = vadd.f32 %v2530, %v2570
    %v2572 = vpop.f32.mrb[0].mxu0
    %v2573 = vpop.f32.mrb[0].mxu0
    %2574 = vdwg.mxu0
    %2575 = vmatprep.subr.bf16.mxu0 %v1982
    %2576 = vmatpush1.bf16.msra.mxu0 %v1981
    %2577 = vmatprep.subr.bf16.mxu0 %v1986
    %2578 = vmatpush1.bf16.msra.mxu0 %v1985
    %2579 = vmatprep.subr.bf16.mxu0 %v1990
    %2580 = vmatpush1.bf16.msra.mxu0 %v1989
    %2581 = vmatprep.subr.bf16.mxu0 %v1994
    %2582 = vmatpush1.bf16.msra.mxu0 %v1993
    %2583 = vmatprep.subr.bf16.mxu0 %v1998
    %2584 = vmatpush1.bf16.msra.mxu0 %v1997
    %2585 = vmatprep.subr.bf16.mxu0 %v2002
    %2586 = vmatpush1.bf16.msra.mxu0 %v2001
    %2587 = vmatprep.subr.bf16.mxu0 %v2006
    %2588 = vmatpush1.bf16.msra.mxu0 %v2005
    %2589 = vmatprep.subr.bf16.mxu0 %v2010
    %2590 = vmatpush1.bf16.msra.mxu0 %v2009
    %2591 = vmatprep.subr.bf16.mxu0 %v2014
    %2592 = vmatpush1.bf16.msra.mxu0 %v2013
    %2593 = vmatprep.subr.bf16.mxu0 %v2018
    %2594 = vmatpush1.bf16.msra.mxu0 %v2017
    %2595 = vmatprep.subr.bf16.mxu0 %v2022
    %2596 = vmatpush1.bf16.msra.mxu0 %v2021
    %2597 = vmatprep.subr.bf16.mxu0 %v2026
    %2598 = vmatpush1.bf16.msra.mxu0 %v2025
    %2599 = vmatprep.subr.bf16.mxu0 %v2030
    %2600 = vmatpush1.bf16.msra.mxu0 %v2029
    %2601 = vmatprep.subr.bf16.mxu0 %v2034
    %2602 = vmatpush1.bf16.msra.mxu0 %v2033
    %2603 = vmatprep.subr.bf16.mxu0 %v2038
    %2604 = vmatpush1.bf16.msra.mxu0 %v2037
    %2605 = vmatprep.subr.bf16.mxu0 %v2042
    %2606 = vmatpush1.bf16.msra.mxu0 %v2041
    %2607 = vmatprep.mubr.bf16.mxu0 %v546
    %2608 = vmatmul.mubr.bf16.gmra.mrb[0].mxu0 %v545
    %v2609 = vpop.f32.mrb[0].mxu0
    %v2610 = vadd.f32 %v2569, %v2609
    %v2611 = vpop.f32.mrb[0].mxu0
    %v2612 = vadd.f32 %v2571, %v2611
    %v2613 = vpop.f32.mrb[0].mxu0
    %v2614 = vpop.f32.mrb[0].mxu0
    %2615 = vdwg.mxu0
    %2616 = vmatprep.subr.bf16.mxu0 %v2046
    %2617 = vmatpush1.bf16.msra.mxu0 %v2045
    %2618 = vmatprep.subr.bf16.mxu0 %v2050
    %2619 = vmatpush1.bf16.msra.mxu0 %v2049
    %2620 = vmatprep.subr.bf16.mxu0 %v2054
    %2621 = vmatpush1.bf16.msra.mxu0 %v2053
    %2622 = vmatprep.subr.bf16.mxu0 %v2058
    %2623 = vmatpush1.bf16.msra.mxu0 %v2057
    %2624 = vmatprep.subr.bf16.mxu0 %v2062
    %2625 = vmatpush1.bf16.msra.mxu0 %v2061
    %2626 = vmatprep.subr.bf16.mxu0 %v2066
    %2627 = vmatpush1.bf16.msra.mxu0 %v2065
    %2628 = vmatprep.subr.bf16.mxu0 %v2070
    %2629 = vmatpush1.bf16.msra.mxu0 %v2069
    %2630 = vmatprep.subr.bf16.mxu0 %v2074
    %2631 = vmatpush1.bf16.msra.mxu0 %v2073
    %2632 = vmatprep.subr.bf16.mxu0 %v2078
    %2633 = vmatpush1.bf16.msra.mxu0 %v2077
    %2634 = vmatprep.subr.bf16.mxu0 %v2082
    %2635 = vmatpush1.bf16.msra.mxu0 %v2081
    %2636 = vmatprep.subr.bf16.mxu0 %v2086
    %2637 = vmatpush1.bf16.msra.mxu0 %v2085
    %2638 = vmatprep.subr.bf16.mxu0 %v2090
    %2639 = vmatpush1.bf16.msra.mxu0 %v2089
    %2640 = vmatprep.subr.bf16.mxu0 %v2094
    %2641 = vmatpush1.bf16.msra.mxu0 %v2093
    %2642 = vmatprep.subr.bf16.mxu0 %v2098
    %2643 = vmatpush1.bf16.msra.mxu0 %v2097
    %2644 = vmatprep.subr.bf16.mxu0 %v2102
    %2645 = vmatpush1.bf16.msra.mxu0 %v2101
    %2646 = vmatprep.subr.bf16.mxu0 %v2106
    %2647 = vmatpush1.bf16.msra.mxu0 %v2105
    %2648 = vmatprep.mubr.bf16.mxu0 %v548
    %2649 = vmatmul.mubr.bf16.gmra.mrb[0].mxu0 %v547
    %v2650 = vpop.f32.mrb[0].mxu0
    %v2651 = vadd.f32 %v2610, %v2650
    %v2652 = vpop.f32.mrb[0].mxu0
    %v2653 = vadd.f32 %v2612, %v2652
    %v2654 = vpop.f32.mrb[0].mxu0
    %v2655 = vpop.f32.mrb[0].mxu0
    %2656 = vdwg.mxu0
    %2657 = vmatprep.subr.bf16.mxu0 %v2110
    %2658 = vmatpush1.bf16.msra.mxu0 %v2109
    %2659 = vmatprep.subr.bf16.mxu0 %v2114
    %2660 = vmatpush1.bf16.msra.mxu0 %v2113
    %2661 = vmatprep.subr.bf16.mxu0 %v2118
    %2662 = vmatpush1.bf16.msra.mxu0 %v2117
    %2663 = vmatprep.subr.bf16.mxu0 %v2122
    %2664 = vmatpush1.bf16.msra.mxu0 %v2121
    %2665 = vmatprep.subr.bf16.mxu0 %v2126
    %2666 = vmatpush1.bf16.msra.mxu0 %v2125
    %2667 = vmatprep.subr.bf16.mxu0 %v2130
    %2668 = vmatpush1.bf16.msra.mxu0 %v2129
    %2669 = vmatprep.subr.bf16.mxu0 %v2134
    %2670 = vmatpush1.bf16.msra.mxu0 %v2133
    %2671 = vmatprep.subr.bf16.mxu0 %v2138
    %2672 = vmatpush1.bf16.msra.mxu0 %v2137
    %2673 = vmatprep.subr.bf16.mxu0 %v2142
    %2674 = vmatpush1.bf16.msra.mxu0 %v2141
    %2675 = vmatprep.subr.bf16.mxu0 %v2146
    %2676 = vmatpush1.bf16.msra.mxu0 %v2145
    %2677 = vmatprep.subr.bf16.mxu0 %v2150
    %2678 = vmatpush1.bf16.msra.mxu0 %v2149
    %2679 = vmatprep.subr.bf16.mxu0 %v2154
    %2680 = vmatpush1.bf16.msra.mxu0 %v2153
    %2681 = vmatprep.subr.bf16.mxu0 %v2158
    %2682 = vmatpush1.bf16.msra.mxu0 %v2157
    %2683 = vmatprep.subr.bf16.mxu0 %v2162
    %2684 = vmatpush1.bf16.msra.mxu0 %v2161
    %2685 = vmatprep.subr.bf16.mxu0 %v2166
    %2686 = vmatpush1.bf16.msra.mxu0 %v2165
    %2687 = vmatprep.subr.bf16.mxu0 %v2170
    %2688 = vmatpush1.bf16.msra.mxu0 %v2169
    %2689 = vmatprep.mubr.bf16.mxu0 %v550
    %2690 = vmatmul.mubr.bf16.gmra.mrb[0].mxu0 %v549
    %v2691 = vpop.f32.mrb[0].mxu0
    %v2692 = vadd.f32 %v2651, %v2691
    %v2693 = vpop.f32.mrb[0].mxu0
    %v2694 = vadd.f32 %v2653, %v2693
    %v2695 = vpop.f32.mrb[0].mxu0
    %v2696 = vpop.f32.mrb[0].mxu0
    %2697 = vdwg.mxu0
    %2698 = vmatprep.subr.bf16.mxu0 %v1856
    %2699 = vmatpush1.bf16.msra.mxu0 %v1855
    %2700 = vmatprep.subr.bf16.mxu0 %v1860
    %2701 = vmatpush1.bf16.msra.mxu0 %v1859
    %2702 = vmatprep.subr.bf16.mxu0 %v1864
    %2703 = vmatpush1.bf16.msra.mxu0 %v1863
    %2704 = vmatprep.subr.bf16.mxu0 %v1868
    %2705 = vmatpush1.bf16.msra.mxu0 %v1867
    %2706 = vmatprep.subr.bf16.mxu0 %v1872
    %2707 = vmatpush1.bf16.msra.mxu0 %v1871
    %2708 = vmatprep.subr.bf16.mxu0 %v1876
    %2709 = vmatpush1.bf16.msra.mxu0 %v1875
    %2710 = vmatprep.subr.bf16.mxu0 %v1880
    %2711 = vmatpush1.bf16.msra.mxu0 %v1879
    %2712 = vmatprep.subr.bf16.mxu0 %v1884
    %2713 = vmatpush1.bf16.msra.mxu0 %v1883
    %2714 = vmatprep.subr.bf16.mxu0 %v1888
    %2715 = vmatpush1.bf16.msra.mxu0 %v1887
    %2716 = vmatprep.subr.bf16.mxu0 %v1892
    %2717 = vmatpush1.bf16.msra.mxu0 %v1891
    %2718 = vmatprep.subr.bf16.mxu0 %v1896
    %2719 = vmatpush1.bf16.msra.mxu0 %v1895
    %2720 = vmatprep.subr.bf16.mxu0 %v1900
    %2721 = vmatpush1.bf16.msra.mxu0 %v1899
    %2722 = vmatprep.subr.bf16.mxu0 %v1904
    %2723 = vmatpush1.bf16.msra.mxu0 %v1903
    %2724 = vmatprep.subr.bf16.mxu0 %v1908
    %2725 = vmatpush1.bf16.msra.mxu0 %v1907
    %2726 = vmatprep.subr.bf16.mxu0 %v1912
    %2727 = vmatpush1.bf16.msra.mxu0 %v1911
    %2728 = vmatprep.subr.bf16.mxu0 %v1916
    %2729 = vmatpush1.bf16.msra.mxu0 %v1915
    %2730 = vmatprep.mubr.bf16.mxu0 %v542
    %2731 = vmatmul.mubr.bf16.gmra.mrb[0].mxu0 %v541
    %v2732 = vpop.f32.mrb[0].mxu0
    %v2733 = vadd.f32 %v884, %v2732
    %v2734 = vpop.f32.mrb[0].mxu0
    %v2735 = vadd.f32 %v888, %v2734
    %v2736 = vpop.f32.mrb[0].mxu0
    %v2737 = vpop.f32.mrb[0].mxu0
    %2738 = vdwg.mxu0
    %2739 = vmatprep.subr.bf16.mxu0 %v1920
    %2740 = vmatpush1.bf16.msra.mxu0 %v1919
    %2741 = vmatprep.subr.bf16.mxu0 %v1924
    %2742 = vmatpush1.bf16.msra.mxu0 %v1923
    %2743 = vmatprep.subr.bf16.mxu0 %v1928
    %2744 = vmatpush1.bf16.msra.mxu0 %v1927
    %2745 = vmatprep.subr.bf16.mxu0 %v1932
    %2746 = vmatpush1.bf16.msra.mxu0 %v1931
    %2747 = vmatprep.subr.bf16.mxu0 %v1936
    %2748 = vmatpush1.bf16.msra.mxu0 %v1935
    %2749 = vmatprep.subr.bf16.mxu0 %v1940
    %2750 = vmatpush1.bf16.msra.mxu0 %v1939
    %2751 = vmatprep.subr.bf16.mxu0 %v1944
    %2752 = vmatpush1.bf16.msra.mxu0 %v1943
    %2753 = vmatprep.subr.bf16.mxu0 %v1948
    %2754 = vmatpush1.bf16.msra.mxu0 %v1947
    %2755 = vmatprep.subr.bf16.mxu0 %v1952
    %2756 = vmatpush1.bf16.msra.mxu0 %v1951
    %2757 = vmatprep.subr.bf16.mxu0 %v1956
    %2758 = vmatpush1.bf16.msra.mxu0 %v1955
    %2759 = vmatprep.subr.bf16.mxu0 %v1960
    %2760 = vmatpush1.bf16.msra.mxu0 %v1959
    %2761 = vmatprep.subr.bf16.mxu0 %v1964
    %2762 = vmatpush1.bf16.msra.mxu0 %v1963
    %2763 = vmatprep.subr.bf16.mxu0 %v1968
    %2764 = vmatpush1.bf16.msra.mxu0 %v1967
    %2765 = vmatprep.subr.bf16.mxu0 %v1972
    %2766 = vmatpush1.bf16.msra.mxu0 %v1971
    %2767 = vmatprep.subr.bf16.mxu0 %v1976
    %2768 = vmatpush1.bf16.msra.mxu0 %v1975
    %2769 = vmatprep.subr.bf16.mxu0 %v1980
    %2770 = vmatpush1.bf16.msra.mxu0 %v1979
    %2771 = vmatprep.mubr.bf16.mxu0 %v544
    %2772 = vmatmul.mubr.bf16.gmra.mrb[0].mxu0 %v543
    %v2773 = vpop.f32.mrb[0].mxu0
    %v2774 = vadd.f32 %v2733, %v2773
    %v2775 = vpop.f32.mrb[0].mxu0
    %v2776 = vadd.f32 %v2735, %v2775
    %v2777 = vpop.f32.mrb[0].mxu0
    %v2778 = vpop.f32.mrb[0].mxu0
    %2779 = vdwg.mxu0
    %2780 = vmatprep.subr.bf16.mxu0 %v1984
    %2781 = vmatpush1.bf16.msra.mxu0 %v1983
    %2782 = vmatprep.subr.bf16.mxu0 %v1988
    %2783 = vmatpush1.bf16.msra.mxu0 %v1987
    %2784 = vmatprep.subr.bf16.mxu0 %v1992
    %2785 = vmatpush1.bf16.msra.mxu0 %v1991
    %2786 = vmatprep.subr.bf16.mxu0 %v1996
    %2787 = vmatpush1.bf16.msra.mxu0 %v1995
    %2788 = vmatprep.subr.bf16.mxu0 %v2000
    %2789 = vmatpush1.bf16.msra.mxu0 %v1999
    %2790 = vmatprep.subr.bf16.mxu0 %v2004
    %2791 = vmatpush1.bf16.msra.mxu0 %v2003
    %2792 = vmatprep.subr.bf16.mxu0 %v2008
    %2793 = vmatpush1.bf16.msra.mxu0 %v2007
    %2794 = vmatprep.subr.bf16.mxu0 %v2012
    %2795 = vmatpush1.bf16.msra.mxu0 %v2011
    %2796 = vmatprep.subr.bf16.mxu0 %v2016
    %2797 = vmatpush1.bf16.msra.mxu0 %v2015
    %2798 = vmatprep.subr.bf16.mxu0 %v2020
    %2799 = vmatpush1.bf16.msra.mxu0 %v2019
    %2800 = vmatprep.subr.bf16.mxu0 %v2024
    %2801 = vmatpush1.bf16.msra.mxu0 %v2023
    %2802 = vmatprep.subr.bf16.mxu0 %v2028
    %2803 = vmatpush1.bf16.msra.mxu0 %v2027
    %2804 = vmatprep.subr.bf16.mxu0 %v2032
    %2805 = vmatpush1.bf16.msra.mxu0 %v2031
    %2806 = vmatprep.subr.bf16.mxu0 %v2036
    %2807 = vmatpush1.bf16.msra.mxu0 %v2035
    %2808 = vmatprep.subr.bf16.mxu0 %v2040
    %2809 = vmatpush1.bf16.msra.mxu0 %v2039
    %2810 = vmatprep.subr.bf16.mxu0 %v2044
    %2811 = vmatpush1.bf16.msra.mxu0 %v2043
    %2812 = vmatprep.mubr.bf16.mxu0 %v546
    %2813 = vmatmul.mubr.bf16.gmra.mrb[0].mxu0 %v545
    %v2814 = vpop.f32.mrb[0].mxu0
    %v2815 = vadd.f32 %v2774, %v2814
    %v2816 = vpop.f32.mrb[0].mxu0
    %v2817 = vadd.f32 %v2776, %v2816
    %v2818 = vpop.f32.mrb[0].mxu0
    %v2819 = vpop.f32.mrb[0].mxu0
    %2820 = vdwg.mxu0
    %2821 = vmatprep.subr.bf16.mxu0 %v2048
    %2822 = vmatpush1.bf16.msra.mxu0 %v2047
    %2823 = vmatprep.subr.bf16.mxu0 %v2052
    %2824 = vmatpush1.bf16.msra.mxu0 %v2051
    %2825 = vmatprep.subr.bf16.mxu0 %v2056
    %2826 = vmatpush1.bf16.msra.mxu0 %v2055
    %2827 = vmatprep.subr.bf16.mxu0 %v2060
    %2828 = vmatpush1.bf16.msra.mxu0 %v2059
    %2829 = vmatprep.subr.bf16.mxu0 %v2064
    %2830 = vmatpush1.bf16.msra.mxu0 %v2063
    %2831 = vmatprep.subr.bf16.mxu0 %v2068
    %2832 = vmatpush1.bf16.msra.mxu0 %v2067
    %2833 = vmatprep.subr.bf16.mxu0 %v2072
    %2834 = vmatpush1.bf16.msra.mxu0 %v2071
    %2835 = vmatprep.subr.bf16.mxu0 %v2076
    %2836 = vmatpush1.bf16.msra.mxu0 %v2075
    %2837 = vmatprep.subr.bf16.mxu0 %v2080
    %2838 = vmatpush1.bf16.msra.mxu0 %v2079
    %2839 = vmatprep.subr.bf16.mxu0 %v2084
    %2840 = vmatpush1.bf16.msra.mxu0 %v2083
    %2841 = vmatprep.subr.bf16.mxu0 %v2088
    %2842 = vmatpush1.bf16.msra.mxu0 %v2087
    %2843 = vmatprep.subr.bf16.mxu0 %v2092
    %2844 = vmatpush1.bf16.msra.mxu0 %v2091
    %2845 = vmatprep.subr.bf16.mxu0 %v2096
    %2846 = vmatpush1.bf16.msra.mxu0 %v2095
    %2847 = vmatprep.subr.bf16.mxu0 %v2100
    %2848 = vmatpush1.bf16.msra.mxu0 %v2099
    %2849 = vmatprep.subr.bf16.mxu0 %v2104
    %2850 = vmatpush1.bf16.msra.mxu0 %v2103
    %2851 = vmatprep.subr.bf16.mxu0 %v2108
    %2852 = vmatpush1.bf16.msra.mxu0 %v2107
    %2853 = vmatprep.mubr.bf16.mxu0 %v548
    %2854 = vmatmul.mubr.bf16.gmra.mrb[0].mxu0 %v547
    %v2855 = vpop.f32.mrb[0].mxu0
    %v2856 = vadd.f32 %v2815, %v2855
    %v2857 = vpop.f32.mrb[0].mxu0
    %v2858 = vadd.f32 %v2817, %v2857
    %v2859 = vpop.f32.mrb[0].mxu0
    %v2860 = vpop.f32.mrb[0].mxu0
    %2861 = vdwg.mxu0
    %2862 = vmatprep.subr.bf16.mxu0 %v2112
    %2863 = vmatpush1.bf16.msra.mxu0 %v2111
    %2864 = vmatprep.subr.bf16.mxu0 %v2116
    %2865 = vmatpush1.bf16.msra.mxu0 %v2115
    %2866 = vmatprep.subr.bf16.mxu0 %v2120
    %2867 = vmatpush1.bf16.msra.mxu0 %v2119
    %2868 = vmatprep.subr.bf16.mxu0 %v2124
    %2869 = vmatpush1.bf16.msra.mxu0 %v2123
    %2870 = vmatprep.subr.bf16.mxu0 %v2128
    %2871 = vmatpush1.bf16.msra.mxu0 %v2127
    %2872 = vmatprep.subr.bf16.mxu0 %v2132
    %2873 = vmatpush1.bf16.msra.mxu0 %v2131
    %2874 = vmatprep.subr.bf16.mxu0 %v2136
    %2875 = vmatpush1.bf16.msra.mxu0 %v2135
    %2876 = vmatprep.subr.bf16.mxu0 %v2140
    %2877 = vmatpush1.bf16.msra.mxu0 %v2139
    %2878 = vmatprep.subr.bf16.mxu0 %v2144
    %2879 = vmatpush1.bf16.msra.mxu0 %v2143
    %2880 = vmatprep.subr.bf16.mxu0 %v2148
    %2881 = vmatpush1.bf16.msra.mxu0 %v2147
    %2882 = vmatprep.subr.bf16.mxu0 %v2152
    %2883 = vmatpush1.bf16.msra.mxu0 %v2151
    %2884 = vmatprep.subr.bf16.mxu0 %v2156
    %2885 = vmatpush1.bf16.msra.mxu0 %v2155
    %2886 = vmatprep.subr.bf16.mxu0 %v2160
    %2887 = vmatpush1.bf16.msra.mxu0 %v2159
    %2888 = vmatprep.subr.bf16.mxu0 %v2164
    %2889 = vmatpush1.bf16.msra.mxu0 %v2163
    %2890 = vmatprep.subr.bf16.mxu0 %v2168
    %2891 = vmatpush1.bf16.msra.mxu0 %v2167
    %2892 = vmatprep.subr.bf16.mxu0 %v2172
    %2893 = vmatpush1.bf16.msra.mxu0 %v2171
    %2894 = vmatprep.mubr.bf16.mxu0 %v550
    %2895 = vmatmul.mubr.bf16.gmra.mrb[0].mxu0 %v549
    %v2896 = vpop.f32.mrb[0].mxu0
    %v2897 = vadd.f32 %v2856, %v2896
    %v2898 = vpop.f32.mrb[0].mxu0
    %v2899 = vadd.f32 %v2858, %v2898
    %v2900 = vpop.f32.mrb[0].mxu0
    %v2901 = vpop.f32.mrb[0].mxu0
    %2902 = vdwg.mxu0
    %v2903 = vmax.f32 %v2692, 0.0
    %v2904 = vmax.f32 %v2694, 0.0
    %v2905 = vmax.f32 %v2897, 0.0
    %v2906 = vmax.f32 %v2899, 0.0
    %v2907 = vpack.c.bf16 %v2903, %v2903
    %v2908 = vpack.c.bf16 %v2904, %v2904
    %v2909 = vpack.c.bf16 %v2905, %v2905
    %v2910 = vpack.c.bf16 %v2906, %v2906
    %v2911 = vld [vmem:[#allocation11] sm:$0xff]
    %v2912 = vld [vmem:[#allocation11 + $0x8] sm:$0xff]
    %v2913 = vld [vmem:[#allocation11 + $0x10] sm:$0xff]
    %v2914 = vld [vmem:[#allocation11 + $0x18] sm:$0xff]
    %v2915 = vld [vmem:[#allocation11 + $0x20] sm:$0xff]
    %v2916 = vld [vmem:[#allocation11 + $0x28] sm:$0xff]
    %v2917 = vld [vmem:[#allocation11 + $0x30] sm:$0xff]
    %v2918 = vld [vmem:[#allocation11 + $0x38] sm:$0xff]
    %v2919 = vld [vmem:[#allocation11 + $0x40] sm:$0xff]
    %v2920 = vld [vmem:[#allocation11 + $0x48] sm:$0xff]
    %v2921 = vld [vmem:[#allocation11 + $0x50] sm:$0xff]
    %v2922 = vld [vmem:[#allocation11 + $0x58] sm:$0xff]
    %v2923 = vld [vmem:[#allocation11 + $0x60] sm:$0xff]
    %v2924 = vld [vmem:[#allocation11 + $0x68] sm:$0xff]
    %v2925 = vld [vmem:[#allocation11 + $0x70] sm:$0xff]
    %v2926 = vld [vmem:[#allocation11 + $0x78] sm:$0xff]
    %v2927 = vld [vmem:[#allocation11 + $0x80] sm:$0xff]
    %v2928 = vld [vmem:[#allocation11 + $0x88] sm:$0xff]
    %v2929 = vld [vmem:[#allocation11 + $0x90] sm:$0xff]
    %v2930 = vld [vmem:[#allocation11 + $0x98] sm:$0xff]
    %v2931 = vld [vmem:[#allocation11 + $0xa0] sm:$0xff]
    %v2932 = vld [vmem:[#allocation11 + $0xa8] sm:$0xff]
    %v2933 = vld [vmem:[#allocation11 + $0xb0] sm:$0xff]
    %v2934 = vld [vmem:[#allocation11 + $0xb8] sm:$0xff]
    %v2935 = vld [vmem:[#allocation11 + $0xc0] sm:$0xff]
    %v2936 = vld [vmem:[#allocation11 + $0xc8] sm:$0xff]
    %v2937 = vld [vmem:[#allocation11 + $0xd0] sm:$0xff]
    %v2938 = vld [vmem:[#allocation11 + $0xd8] sm:$0xff]
    %v2939 = vld [vmem:[#allocation11 + $0xe0] sm:$0xff]
    %v2940 = vld [vmem:[#allocation11 + $0xe8] sm:$0xff]
    %v2941 = vld [vmem:[#allocation11 + $0xf0] sm:$0xff]
    %v2942 = vld [vmem:[#allocation11 + $0xf8] sm:$0xff]
    %v2943 = vld [vmem:[#allocation11 + $0x100] sm:$0xff]
    %v2944 = vld [vmem:[#allocation11 + $0x108] sm:$0xff]
    %v2945 = vld [vmem:[#allocation11 + $0x110] sm:$0xff]
    %v2946 = vld [vmem:[#allocation11 + $0x118] sm:$0xff]
    %v2947 = vld [vmem:[#allocation11 + $0x120] sm:$0xff]
    %v2948 = vld [vmem:[#allocation11 + $0x128] sm:$0xff]
    %v2949 = vld [vmem:[#allocation11 + $0x130] sm:$0xff]
    %v2950 = vld [vmem:[#allocation11 + $0x138] sm:$0xff]
    %v2951 = vld [vmem:[#allocation11 + $0x140] sm:$0xff]
    %v2952 = vld [vmem:[#allocation11 + $0x148] sm:$0xff]
    %v2953 = vld [vmem:[#allocation11 + $0x150] sm:$0xff]
    %v2954 = vld [vmem:[#allocation11 + $0x158] sm:$0xff]
    %v2955 = vld [vmem:[#allocation11 + $0x160] sm:$0xff]
    %v2956 = vld [vmem:[#allocation11 + $0x168] sm:$0xff]
    %v2957 = vld [vmem:[#allocation11 + $0x170] sm:$0xff]
    %v2958 = vld [vmem:[#allocation11 + $0x178] sm:$0xff]
    %v2959 = vld [vmem:[#allocation11 + $0x180] sm:$0xff]
    %v2960 = vld [vmem:[#allocation11 + $0x188] sm:$0xff]
    %v2961 = vld [vmem:[#allocation11 + $0x190] sm:$0xff]
    %v2962 = vld [vmem:[#allocation11 + $0x198] sm:$0xff]
    %v2963 = vld [vmem:[#allocation11 + $0x1a0] sm:$0xff]
    %v2964 = vld [vmem:[#allocation11 + $0x1a8] sm:$0xff]
    %v2965 = vld [vmem:[#allocation11 + $0x1b0] sm:$0xff]
    %v2966 = vld [vmem:[#allocation11 + $0x1b8] sm:$0xff]
    %v2967 = vld [vmem:[#allocation11 + $0x1c0] sm:$0xff]
    %v2968 = vld [vmem:[#allocation11 + $0x1c8] sm:$0xff]
    %v2969 = vld [vmem:[#allocation11 + $0x1d0] sm:$0xff]
    %v2970 = vld [vmem:[#allocation11 + $0x1d8] sm:$0xff]
    %v2971 = vld [vmem:[#allocation11 + $0x1e0] sm:$0xff]
    %v2972 = vld [vmem:[#allocation11 + $0x1e8] sm:$0xff]
    %v2973 = vld [vmem:[#allocation11 + $0x1f0] sm:$0xff]
    %v2974 = vld [vmem:[#allocation11 + $0x1f8] sm:$0xff]
    %v2975 = vld [vmem:[#allocation13] sm:$0x3]
    %v2977 = vlaneseq
    %v2978 = vshrl.u32 %v2977, 7
    %v2979 = vsub.s32 0, %v2978
    %v2980 = vrot.slane %v2975, %v2979
    %v2981 = vlaneseq
    %v2982 = vshrl.u32 %v2981, 7
    %v2983 = vsub.s32 1, %v2982
    %v2984 = vrot.slane %v2975, %v2983
    %v3051 = vunpack.c.l.b16 %v2911
    %v3052 = vunpack.c.h.b16 %v2911
    %v3053 = vunpack.c.l.b16 %v2912
    %v3054 = vunpack.c.h.b16 %v2912
    %v3055 = vunpack.c.l.b16 %v2913
    %v3056 = vunpack.c.h.b16 %v2913
    %v3057 = vunpack.c.l.b16 %v2914
    %v3058 = vunpack.c.h.b16 %v2914
    %v3059 = vunpack.c.l.b16 %v2915
    %v3060 = vunpack.c.h.b16 %v2915
    %v3061 = vunpack.c.l.b16 %v2916
    %v3062 = vunpack.c.h.b16 %v2916
    %v3063 = vunpack.c.l.b16 %v2917
    %v3064 = vunpack.c.h.b16 %v2917
    %v3065 = vunpack.c.l.b16 %v2918
    %v3066 = vunpack.c.h.b16 %v2918
    %v3067 = vunpack.c.l.b16 %v2919
    %v3068 = vunpack.c.h.b16 %v2919
    %v3069 = vunpack.c.l.b16 %v2920
    %v3070 = vunpack.c.h.b16 %v2920
    %v3071 = vunpack.c.l.b16 %v2921
    %v3072 = vunpack.c.h.b16 %v2921
    %v3073 = vunpack.c.l.b16 %v2922
    %v3074 = vunpack.c.h.b16 %v2922
    %v3075 = vunpack.c.l.b16 %v2923
    %v3076 = vunpack.c.h.b16 %v2923
    %v3077 = vunpack.c.l.b16 %v2924
    %v3078 = vunpack.c.h.b16 %v2924
    %v3079 = vunpack.c.l.b16 %v2925
    %v3080 = vunpack.c.h.b16 %v2925
    %v3081 = vunpack.c.l.b16 %v2926
    %v3082 = vunpack.c.h.b16 %v2926
    %v3083 = vunpack.c.l.b16 %v2927
    %v3084 = vunpack.c.h.b16 %v2927
    %v3085 = vunpack.c.l.b16 %v2928
    %v3086 = vunpack.c.h.b16 %v2928
    %v3087 = vunpack.c.l.b16 %v2929
    %v3088 = vunpack.c.h.b16 %v2929
    %v3089 = vunpack.c.l.b16 %v2930
    %v3090 = vunpack.c.h.b16 %v2930
    %v3091 = vunpack.c.l.b16 %v2931
    %v3092 = vunpack.c.h.b16 %v2931
    %v3093 = vunpack.c.l.b16 %v2932
    %v3094 = vunpack.c.h.b16 %v2932
    %v3095 = vunpack.c.l.b16 %v2933
    %v3096 = vunpack.c.h.b16 %v2933
    %v3097 = vunpack.c.l.b16 %v2934
    %v3098 = vunpack.c.h.b16 %v2934
    %v3099 = vunpack.c.l.b16 %v2935
    %v3100 = vunpack.c.h.b16 %v2935
    %v3101 = vunpack.c.l.b16 %v2936
    %v3102 = vunpack.c.h.b16 %v2936
    %v3103 = vunpack.c.l.b16 %v2937
    %v3104 = vunpack.c.h.b16 %v2937
    %v3105 = vunpack.c.l.b16 %v2938
    %v3106 = vunpack.c.h.b16 %v2938
    %v3107 = vunpack.c.l.b16 %v2939
    %v3108 = vunpack.c.h.b16 %v2939
    %v3109 = vunpack.c.l.b16 %v2940
    %v3110 = vunpack.c.h.b16 %v2940
    %v3111 = vunpack.c.l.b16 %v2941
    %v3112 = vunpack.c.h.b16 %v2941
    %v3113 = vunpack.c.l.b16 %v2942
    %v3114 = vunpack.c.h.b16 %v2942
    %v3115 = vunpack.c.l.b16 %v2943
    %v3116 = vunpack.c.h.b16 %v2943
    %v3117 = vunpack.c.l.b16 %v2944
    %v3118 = vunpack.c.h.b16 %v2944
    %v3119 = vunpack.c.l.b16 %v2945
    %v3120 = vunpack.c.h.b16 %v2945
    %v3121 = vunpack.c.l.b16 %v2946
    %v3122 = vunpack.c.h.b16 %v2946
    %v3123 = vunpack.c.l.b16 %v2947
    %v3124 = vunpack.c.h.b16 %v2947
    %v3125 = vunpack.c.l.b16 %v2948
    %v3126 = vunpack.c.h.b16 %v2948
    %v3127 = vunpack.c.l.b16 %v2949
    %v3128 = vunpack.c.h.b16 %v2949
    %v3129 = vunpack.c.l.b16 %v2950
    %v3130 = vunpack.c.h.b16 %v2950
    %v3131 = vunpack.c.l.b16 %v2951
    %v3132 = vunpack.c.h.b16 %v2951
    %v3133 = vunpack.c.l.b16 %v2952
    %v3134 = vunpack.c.h.b16 %v2952
    %v3135 = vunpack.c.l.b16 %v2953
    %v3136 = vunpack.c.h.b16 %v2953
    %v3137 = vunpack.c.l.b16 %v2954
    %v3138 = vunpack.c.h.b16 %v2954
    %v3139 = vunpack.c.l.b16 %v2955
    %v3140 = vunpack.c.h.b16 %v2955
    %v3141 = vunpack.c.l.b16 %v2956
    %v3142 = vunpack.c.h.b16 %v2956
    %v3143 = vunpack.c.l.b16 %v2957
    %v3144 = vunpack.c.h.b16 %v2957
    %v3145 = vunpack.c.l.b16 %v2958
    %v3146 = vunpack.c.h.b16 %v2958
    %v3147 = vunpack.c.l.b16 %v2959
    %v3148 = vunpack.c.h.b16 %v2959
    %v3149 = vunpack.c.l.b16 %v2960
    %v3150 = vunpack.c.h.b16 %v2960
    %v3151 = vunpack.c.l.b16 %v2961
    %v3152 = vunpack.c.h.b16 %v2961
    %v3153 = vunpack.c.l.b16 %v2962
    %v3154 = vunpack.c.h.b16 %v2962
    %v3155 = vunpack.c.l.b16 %v2963
    %v3156 = vunpack.c.h.b16 %v2963
    %v3157 = vunpack.c.l.b16 %v2964
    %v3158 = vunpack.c.h.b16 %v2964
    %v3159 = vunpack.c.l.b16 %v2965
    %v3160 = vunpack.c.h.b16 %v2965
    %v3161 = vunpack.c.l.b16 %v2966
    %v3162 = vunpack.c.h.b16 %v2966
    %v3163 = vunpack.c.l.b16 %v2967
    %v3164 = vunpack.c.h.b16 %v2967
    %v3165 = vunpack.c.l.b16 %v2968
    %v3166 = vunpack.c.h.b16 %v2968
    %v3167 = vunpack.c.l.b16 %v2969
    %v3168 = vunpack.c.h.b16 %v2969
    %v3169 = vunpack.c.l.b16 %v2970
    %v3170 = vunpack.c.h.b16 %v2970
    %v3171 = vunpack.c.l.b16 %v2971
    %v3172 = vunpack.c.h.b16 %v2971
    %v3173 = vunpack.c.l.b16 %v2972
    %v3174 = vunpack.c.h.b16 %v2972
    %v3175 = vunpack.c.l.b16 %v2973
    %v3176 = vunpack.c.h.b16 %v2973
    %v3177 = vunpack.c.l.b16 %v2974
    %v3178 = vunpack.c.h.b16 %v2974
    %v3179 = vpack.c.b16 %v3053, %v3051
    %v3180 = vpack.c.b16 %v3054, %v3052
    %v3181 = vpack.c.b16 %v3057, %v3055
    %v3182 = vpack.c.b16 %v3058, %v3056
    %v3183 = vpack.c.b16 %v3061, %v3059
    %v3184 = vpack.c.b16 %v3062, %v3060
    %v3185 = vpack.c.b16 %v3065, %v3063
    %v3186 = vpack.c.b16 %v3066, %v3064
    %v3187 = vpack.c.b16 %v3069, %v3067
    %v3188 = vpack.c.b16 %v3070, %v3068
    %v3189 = vpack.c.b16 %v3073, %v3071
    %v3190 = vpack.c.b16 %v3074, %v3072
    %v3191 = vpack.c.b16 %v3077, %v3075
    %v3192 = vpack.c.b16 %v3078, %v3076
    %v3193 = vpack.c.b16 %v3081, %v3079
    %v3194 = vpack.c.b16 %v3082, %v3080
    %v3195 = vpack.c.b16 %v3085, %v3083
    %v3196 = vpack.c.b16 %v3086, %v3084
    %v3197 = vpack.c.b16 %v3089, %v3087
    %v3198 = vpack.c.b16 %v3090, %v3088
    %v3199 = vpack.c.b16 %v3093, %v3091
    %v3200 = vpack.c.b16 %v3094, %v3092
    %v3201 = vpack.c.b16 %v3097, %v3095
    %v3202 = vpack.c.b16 %v3098, %v3096
    %v3203 = vpack.c.b16 %v3101, %v3099
    %v3204 = vpack.c.b16 %v3102, %v3100
    %v3205 = vpack.c.b16 %v3105, %v3103
    %v3206 = vpack.c.b16 %v3106, %v3104
    %v3207 = vpack.c.b16 %v3109, %v3107
    %v3208 = vpack.c.b16 %v3110, %v3108
    %v3209 = vpack.c.b16 %v3113, %v3111
    %v3210 = vpack.c.b16 %v3114, %v3112
    %v3211 = vpack.c.b16 %v3117, %v3115
    %v3212 = vpack.c.b16 %v3118, %v3116
    %v3213 = vpack.c.b16 %v3121, %v3119
    %v3214 = vpack.c.b16 %v3122, %v3120
    %v3215 = vpack.c.b16 %v3125, %v3123
    %v3216 = vpack.c.b16 %v3126, %v3124
    %v3217 = vpack.c.b16 %v3129, %v3127
    %v3218 = vpack.c.b16 %v3130, %v3128
    %v3219 = vpack.c.b16 %v3133, %v3131
    %v3220 = vpack.c.b16 %v3134, %v3132
    %v3221 = vpack.c.b16 %v3137, %v3135
    %v3222 = vpack.c.b16 %v3138, %v3136
    %v3223 = vpack.c.b16 %v3141, %v3139
    %v3224 = vpack.c.b16 %v3142, %v3140
    %v3225 = vpack.c.b16 %v3145, %v3143
    %v3226 = vpack.c.b16 %v3146, %v3144
    %v3227 = vpack.c.b16 %v3149, %v3147
    %v3228 = vpack.c.b16 %v3150, %v3148
    %v3229 = vpack.c.b16 %v3153, %v3151
    %v3230 = vpack.c.b16 %v3154, %v3152
    %v3231 = vpack.c.b16 %v3157, %v3155
    %v3232 = vpack.c.b16 %v3158, %v3156
    %v3233 = vpack.c.b16 %v3161, %v3159
    %v3234 = vpack.c.b16 %v3162, %v3160
    %v3235 = vpack.c.b16 %v3165, %v3163
    %v3236 = vpack.c.b16 %v3166, %v3164
    %v3237 = vpack.c.b16 %v3169, %v3167
    %v3238 = vpack.c.b16 %v3170, %v3168
    %v3239 = vpack.c.b16 %v3173, %v3171
    %v3240 = vpack.c.b16 %v3174, %v3172
    %v3241 = vpack.c.b16 %v3177, %v3175
    %v3242 = vpack.c.b16 %v3178, %v3176
    %3307 = vmatprep.subr.bf16.mxu0 %v3180
    %3308 = vmatpush1.bf16.msra.mxu0 %v3179
    %3309 = vmatprep.subr.bf16.mxu0 %v3182
    %3310 = vmatpush1.bf16.msra.mxu0 %v3181
    %3311 = vmatprep.subr.bf16.mxu0 %v3184
    %3312 = vmatpush1.bf16.msra.mxu0 %v3183
    %3313 = vmatprep.subr.bf16.mxu0 %v3186
    %3314 = vmatpush1.bf16.msra.mxu0 %v3185
    %3315 = vmatprep.subr.bf16.mxu0 %v3188
    %3316 = vmatpush1.bf16.msra.mxu0 %v3187
    %3317 = vmatprep.subr.bf16.mxu0 %v3190
    %3318 = vmatpush1.bf16.msra.mxu0 %v3189
    %3319 = vmatprep.subr.bf16.mxu0 %v3192
    %3320 = vmatpush1.bf16.msra.mxu0 %v3191
    %3321 = vmatprep.subr.bf16.mxu0 %v3194
    %3322 = vmatpush1.bf16.msra.mxu0 %v3193
    %3323 = vmatprep.subr.bf16.mxu0 %v3196
    %3324 = vmatpush1.bf16.msra.mxu0 %v3195
    %3325 = vmatprep.subr.bf16.mxu0 %v3198
    %3326 = vmatpush1.bf16.msra.mxu0 %v3197
    %3327 = vmatprep.subr.bf16.mxu0 %v3200
    %3328 = vmatpush1.bf16.msra.mxu0 %v3199
    %3329 = vmatprep.subr.bf16.mxu0 %v3202
    %3330 = vmatpush1.bf16.msra.mxu0 %v3201
    %3331 = vmatprep.subr.bf16.mxu0 %v3204
    %3332 = vmatpush1.bf16.msra.mxu0 %v3203
    %3333 = vmatprep.subr.bf16.mxu0 %v3206
    %3334 = vmatpush1.bf16.msra.mxu0 %v3205
    %3335 = vmatprep.subr.bf16.mxu0 %v3208
    %3336 = vmatpush1.bf16.msra.mxu0 %v3207
    %3337 = vmatprep.subr.bf16.mxu0 %v3210
    %3338 = vmatpush1.bf16.msra.mxu0 %v3209
    %3339 = vmatprep.mubr.bf16.mxu0 %v2908
    %3340 = vmatmul.mubr.bf16.gmra.mrb[0].mxu0 %v2907
    %v3341 = vpop.f32.mrb[0].mxu0
    %v3342 = vadd.f32 %v2980, %v3341
    %v3343 = vpop.f32.mrb[0].mxu0
    %v3344 = vadd.f32 %v2984, %v3343
    %v3345 = vpop.f32.mrb[0].mxu0
    %v3346 = vpop.f32.mrb[0].mxu0
    %3347 = vdwg.mxu0
    %3348 = vmatprep.subr.bf16.mxu0 %v3212
    %3349 = vmatpush1.bf16.msra.mxu0 %v3211
    %3350 = vmatprep.subr.bf16.mxu0 %v3214
    %3351 = vmatpush1.bf16.msra.mxu0 %v3213
    %3352 = vmatprep.subr.bf16.mxu0 %v3216
    %3353 = vmatpush1.bf16.msra.mxu0 %v3215
    %3354 = vmatprep.subr.bf16.mxu0 %v3218
    %3355 = vmatpush1.bf16.msra.mxu0 %v3217
    %3356 = vmatprep.subr.bf16.mxu0 %v3220
    %3357 = vmatpush1.bf16.msra.mxu0 %v3219
    %3358 = vmatprep.subr.bf16.mxu0 %v3222
    %3359 = vmatpush1.bf16.msra.mxu0 %v3221
    %3360 = vmatprep.subr.bf16.mxu0 %v3224
    %3361 = vmatpush1.bf16.msra.mxu0 %v3223
    %3362 = vmatprep.subr.bf16.mxu0 %v3226
    %3363 = vmatpush1.bf16.msra.mxu0 %v3225
    %3364 = vmatprep.subr.bf16.mxu0 %v3228
    %3365 = vmatpush1.bf16.msra.mxu0 %v3227
    %3366 = vmatprep.subr.bf16.mxu0 %v3230
    %3367 = vmatpush1.bf16.msra.mxu0 %v3229
    %3368 = vmatprep.subr.bf16.mxu0 %v3232
    %3369 = vmatpush1.bf16.msra.mxu0 %v3231
    %3370 = vmatprep.subr.bf16.mxu0 %v3234
    %3371 = vmatpush1.bf16.msra.mxu0 %v3233
    %3372 = vmatprep.subr.bf16.mxu0 %v3236
    %3373 = vmatpush1.bf16.msra.mxu0 %v3235
    %3374 = vmatprep.subr.bf16.mxu0 %v3238
    %3375 = vmatpush1.bf16.msra.mxu0 %v3237
    %3376 = vmatprep.subr.bf16.mxu0 %v3240
    %3377 = vmatpush1.bf16.msra.mxu0 %v3239
    %3378 = vmatprep.subr.bf16.mxu0 %v3242
    %3379 = vmatpush1.bf16.msra.mxu0 %v3241
    %3380 = vmatprep.mubr.bf16.mxu0 %v2910
    %3381 = vmatmul.mubr.bf16.gmra.mrb[0].mxu0 %v2909
    %v3382 = vpop.f32.mrb[0].mxu0
    %v3383 = vadd.f32 %v3342, %v3382
    %v3384 = vpop.f32.mrb[0].mxu0
    %v3385 = vadd.f32 %v3344, %v3384
    %v3386 = vpop.f32.mrb[0].mxu0
    %v3387 = vpop.f32.mrb[0].mxu0
    %3388 = vdwg.mxu0
    %v3389 = vmax.f32 %v3383, 0.0
    %v3390 = vmax.f32 %v3385, 0.0
    %v3391 = vpack.c.bf16 %v3389, %v3389
    %v3392 = vpack.c.bf16 %v3390, %v3390
    %v3393 = vld [vmem:[#allocation14] sm:$0xf]
    %v3394 = vld [vmem:[#allocation14 + $0x4] sm:$0xf]
    %v3395 = vld [vmem:[#allocation14 + $0x8] sm:$0xf]
    %v3396 = vld [vmem:[#allocation14 + $0xc] sm:$0xf]
    %v3397 = vld [vmem:[#allocation14 + $0x10] sm:$0xf]
    %v3398 = vld [vmem:[#allocation14 + $0x14] sm:$0xf]
    %v3399 = vld [vmem:[#allocation14 + $0x18] sm:$0xf]
    %v3400 = vld [vmem:[#allocation14 + $0x1c] sm:$0xf]
    %v3401 = vld [vmem:[#allocation14 + $0x20] sm:$0xf]
    %v3402 = vld [vmem:[#allocation14 + $0x24] sm:$0xf]
    %v3403 = vld [vmem:[#allocation14 + $0x28] sm:$0xf]
    %v3404 = vld [vmem:[#allocation14 + $0x2c] sm:$0xf]
    %v3405 = vld [vmem:[#allocation14 + $0x30] sm:$0xf]
    %v3406 = vld [vmem:[#allocation14 + $0x34] sm:$0xf]
    %v3407 = vld [vmem:[#allocation14 + $0x38] sm:$0xf]
    %v3408 = vld [vmem:[#allocation14 + $0x3c] sm:$0xf]
    %v3409 = vld [vmem:[#allocation14 + $0x40] sm:$0xf]
    %v3410 = vld [vmem:[#allocation14 + $0x44] sm:$0xf]
    %v3411 = vld [vmem:[#allocation14 + $0x48] sm:$0xf]
    %v3412 = vld [vmem:[#allocation14 + $0x4c] sm:$0xf]
    %v3413 = vld [vmem:[#allocation14 + $0x50] sm:$0xf]
    %v3414 = vld [vmem:[#allocation14 + $0x54] sm:$0xf]
    %v3415 = vld [vmem:[#allocation14 + $0x58] sm:$0xf]
    %v3416 = vld [vmem:[#allocation14 + $0x5c] sm:$0xf]
    %v3417 = vld [vmem:[#allocation14 + $0x60] sm:$0xf]
    %v3418 = vld [vmem:[#allocation14 + $0x64] sm:$0xf]
    %v3419 = vld [vmem:[#allocation14 + $0x68] sm:$0xf]
    %v3420 = vld [vmem:[#allocation14 + $0x6c] sm:$0xf]
    %v3421 = vld [vmem:[#allocation14 + $0x70] sm:$0xf]
    %v3422 = vld [vmem:[#allocation14 + $0x74] sm:$0xf]
    %v3423 = vld [vmem:[#allocation14 + $0x78] sm:$0xf]
    %v3424 = vld [vmem:[#allocation14 + $0x7c] sm:$0xf]
    %v3425 = vld [vmem:[#allocation16] sm:$0x1]
    %v3427 = vlaneseq
    %v3428 = vshrl.u32 %v3427, 7
    %v3429 = vsub.s32 0, %v3428
    %v3430 = vrot.slane %v3425, %v3429
    %v3464 = vunpack.c.l.b16 %v3393
    %v3465 = vunpack.c.l.b16 %v3394
    %v3466 = vunpack.c.l.b16 %v3395
    %v3467 = vunpack.c.l.b16 %v3396
    %v3468 = vunpack.c.l.b16 %v3397
    %v3469 = vunpack.c.l.b16 %v3398
    %v3470 = vunpack.c.l.b16 %v3399
    %v3471 = vunpack.c.l.b16 %v3400
    %v3472 = vunpack.c.l.b16 %v3401
    %v3473 = vunpack.c.l.b16 %v3402
    %v3474 = vunpack.c.l.b16 %v3403
    %v3475 = vunpack.c.l.b16 %v3404
    %v3476 = vunpack.c.l.b16 %v3405
    %v3477 = vunpack.c.l.b16 %v3406
    %v3478 = vunpack.c.l.b16 %v3407
    %v3479 = vunpack.c.l.b16 %v3408
    %v3480 = vunpack.c.l.b16 %v3409
    %v3481 = vunpack.c.l.b16 %v3410
    %v3482 = vunpack.c.l.b16 %v3411
    %v3483 = vunpack.c.l.b16 %v3412
    %v3484 = vunpack.c.l.b16 %v3413
    %v3485 = vunpack.c.l.b16 %v3414
    %v3486 = vunpack.c.l.b16 %v3415
    %v3487 = vunpack.c.l.b16 %v3416
    %v3488 = vunpack.c.l.b16 %v3417
    %v3489 = vunpack.c.l.b16 %v3418
    %v3490 = vunpack.c.l.b16 %v3419
    %v3491 = vunpack.c.l.b16 %v3420
    %v3492 = vunpack.c.l.b16 %v3421
    %v3493 = vunpack.c.l.b16 %v3422
    %v3494 = vunpack.c.l.b16 %v3423
    %v3495 = vunpack.c.l.b16 %v3424
    %v3496 = vpack.c.b16 %v3465, %v3464
    %v3497 = vpack.c.b16 %v3467, %v3466
    %v3498 = vpack.c.b16 %v3469, %v3468
    %v3499 = vpack.c.b16 %v3471, %v3470
    %v3500 = vpack.c.b16 %v3473, %v3472
    %v3501 = vpack.c.b16 %v3475, %v3474
    %v3502 = vpack.c.b16 %v3477, %v3476
    %v3503 = vpack.c.b16 %v3479, %v3478
    %v3504 = vpack.c.b16 %v3481, %v3480
    %v3505 = vpack.c.b16 %v3483, %v3482
    %v3506 = vpack.c.b16 %v3485, %v3484
    %v3507 = vpack.c.b16 %v3487, %v3486
    %v3508 = vpack.c.b16 %v3489, %v3488
    %v3509 = vpack.c.b16 %v3491, %v3490
    %v3510 = vpack.c.b16 %v3493, %v3492
    %v3511 = vpack.c.b16 %v3495, %v3494
    %3528 = vmatprep.subr.bf16.mxu0 0
    %3529 = vmatpush1.bf16.msra.mxu0 %v3496
    %3530 = vmatprep.subr.bf16.mxu0 0
    %3531 = vmatpush1.bf16.msra.mxu0 %v3497
    %3532 = vmatprep.subr.bf16.mxu0 0
    %3533 = vmatpush1.bf16.msra.mxu0 %v3498
    %3534 = vmatprep.subr.bf16.mxu0 0
    %3535 = vmatpush1.bf16.msra.mxu0 %v3499
    %3536 = vmatprep.subr.bf16.mxu0 0
    %3537 = vmatpush1.bf16.msra.mxu0 %v3500
    %3538 = vmatprep.subr.bf16.mxu0 0
    %3539 = vmatpush1.bf16.msra.mxu0 %v3501
    %3540 = vmatprep.subr.bf16.mxu0 0
    %3541 = vmatpush1.bf16.msra.mxu0 %v3502
    %3542 = vmatprep.subr.bf16.mxu0 0
    %3543 = vmatpush1.bf16.msra.mxu0 %v3503
    %3544 = vmatprep.subr.bf16.mxu0 0
    %3545 = vmatpush1.bf16.msra.mxu0 %v3504
    %3546 = vmatprep.subr.bf16.mxu0 0
    %3547 = vmatpush1.bf16.msra.mxu0 %v3505
    %3548 = vmatprep.subr.bf16.mxu0 0
    %3549 = vmatpush1.bf16.msra.mxu0 %v3506
    %3550 = vmatprep.subr.bf16.mxu0 0
    %3551 = vmatpush1.bf16.msra.mxu0 %v3507
    %3552 = vmatprep.subr.bf16.mxu0 0
    %3553 = vmatpush1.bf16.msra.mxu0 %v3508
    %3554 = vmatprep.subr.bf16.mxu0 0
    %3555 = vmatpush1.bf16.msra.mxu0 %v3509
    %3556 = vmatprep.subr.bf16.mxu0 0
    %3557 = vmatpush1.bf16.msra.mxu0 %v3510
    %3558 = vmatprep.subr.bf16.mxu0 0
    %3559 = vmatpush1.bf16.msra.mxu0 %v3511
    %3560 = vmatprep.mubr.bf16.mxu0 %v3392
    %3561 = vmatmul.mubr.bf16.gmra.mrb[0].mxu0 %v3391
    %v3562 = vpop.f32.mrb[0].mxu0
    %v3563 = vadd.f32 %v3430, %v3562
    %v3564 = vpop.f32.mrb[0].mxu0
    %v3565 = vpop.f32.mrb[0].mxu0
    %v3566 = vpop.f32.mrb[0].mxu0
    %3567 = vdwg.mxu0
    %3568 = vst [vmem:[#allocation17] sm:$0xff] %v3563
    // Predicated region
    $region74: #{tpu_custom_call.1} parent=1 // pred_check
      _
    $region75: #{tpu_custom_call.1} parent=1 // pred_check_branch
      %3570 = sbr.rel (0) target = $region77
    $region76: #{tpu_custom_call.1} parent=1 // pred_region
      %s3572 = ssub.s32 128, 128
      %3573 = vsyncadd [#allocation4], %s3572
      %s3575 = sshll.u32 [#allocation17], 4
      %s3576 = int_to_ptr.vmem [resolvable:$true] %s3575
      %3578 = dma.vmem_to_hbm [thread:$0]  %s3576, 128, %s9, [#allocation4]
    $region77: #{tpu_custom_call.1} parent=1 // pred_fallthru
      _
    // Predicated region
    $region78: #{tpu_custom_call.1} parent=1 // pred_check
      _
    $region79: #{tpu_custom_call.1} parent=1 // pred_check_branch
      %3580 = sbr.rel (0) target = $region81
    $region80: #{tpu_custom_call.1} parent=1 // pred_region
      %3581 = dma.done [#allocation4], 128
    $region81: #{tpu_custom_call.1} parent=1 // pred_fallthru
      _
    %3582 = vsyncpa [#allocation3], 1
    %3583 = vsyncpa [#allocation6], 1
    %3584 = vsyncpa [#allocation9], 1
    %3585 = vsyncpa [#allocation12], 1
    %3586 = vsyncpa [#allocation15], 1
    %3587 = vsyncpa [#allocation4], 1

// kernel: tpu_custom_call.1
$region0: #{tpu_custom_call.1}
  #allocation0 [shape = 'u32[]', space=smem, size = 0x4, offset = 0x4, fixed_abs, tag = 'smem constant byte address 0x4 - core index']
  #allocation1 [shape = 'u32[144,128]{1,0:T(1,128)}', space=vmem, size = 0x12000, scoped, tag = 'internal scratch']
  %s0 = inlined_call_operand.hbm [shape: f32[8,32], index: 0, kind: input, shape index: {}]
  %s1 = inlined_call_operand.hbm [shape: bf16[32,1280], index: 1, kind: input, shape index: {}]
  %s2 = inlined_call_operand.hbm [shape: f32[1,1280], index: 2, kind: input, shape index: {}]
  %s3 = inlined_call_operand.hbm [shape: bf16[1280,512], index: 3, kind: input, shape index: {}]
  %s4 = inlined_call_operand.hbm [shape: f32[1,512], index: 4, kind: input, shape index: {}]
  %s5 = inlined_call_operand.hbm [shape: bf16[512,256], index: 5, kind: input, shape index: {}]
  %s6 = inlined_call_operand.hbm [shape: f32[1,256], index: 6, kind: input, shape index: {}]
  %s7 = inlined_call_operand.hbm [shape: bf16[256,128], index: 7, kind: input, shape index: {}]
  %s8 = inlined_call_operand.hbm [shape: f32[1,128], index: 8, kind: input, shape index: {}]
  %s9 = inlined_call_operand.hbm [shape: f32[8,128], index: 9, kind: output, shape index: {}]
  %s10 = sld [smem:[#allocation0]]
  $region82: #{tpu_custom_call.1} parent=0
    _
  %s12 = ssub.s32 1, %s10
  %s13 = scalar_select 0, %s12, %s10
  $region1: #{tpu_custom_call.1} parent=0
    #allocation2 [shape = 'u8[4096]{0}', space=vmem, size = 0x1000, scoped, tag = 'input window, operand 0, single buffered']
    #allocation3 [shape = 's32[1]{0}', space=sflag, size = 0x4, scoped, tag = 'scoped memory for tpu_custom_call.1']
    #allocation4 [shape = 's32[1]{0}', space=sflag, size = 0x4, scoped, tag = 'scoped memory for tpu_custom_call.1']
    #allocation5 [shape = 'u8[81920]{0}', space=vmem, size = 0x14000, scoped, tag = 'input window, operand 1, single buffered']
    #allocation6 [shape = 's32[1]{0}', space=sflag, size = 0x4, scoped, tag = 'scoped memory for tpu_custom_call.1']
    #allocation7 [shape = 'u8[5120]{0}', space=vmem, size = 0x1400, scoped, tag = 'input window, operand 2, single buffered']
    #allocation8 [shape = 'u8[1310720]{0}', space=vmem, size = 0x140000, scoped, tag = 'input window, operand 3, single buffered']
    #allocation9 [shape = 's32[1]{0}', space=sflag, size = 0x4, scoped, tag = 'scoped memory for tpu_custom_call.1']
    #allocation10 [shape = 'u8[2048]{0}', space=vmem, size = 0x800, scoped, tag = 'input window, operand 4, single buffered']
    #allocation11 [shape = 'u8[262144]{0}', space=vmem, size = 0x40000, scoped, tag = 'input window, operand 5, single buffered']
    #allocation12 [shape = 's32[1]{0}', space=sflag, size = 0x4, scoped, tag = 'scoped memory for tpu_custom_call.1']
    #allocation13 [shape = 'u8[1024]{0}', space=vmem, size = 0x400, scoped, tag = 'input window, operand 6, single buffered']
    #allocation14 [shape = 'u8[65536]{0}', space=vmem, size = 0x10000, scoped, tag = 'input window, operand 7, single buffered']
    #allocation15 [shape = 's32[1]{0}', space=sflag, size = 0x4, scoped, tag = 'scoped memory for tpu_custom_call.1']
    #allocation16 [shape = 'u8[512]{0}', space=vmem, size = 0x400, scoped, tag = 'input window, operand 8, single buffered']
    #allocation17 [shape = 'u8[4096]{0}', space=vmem, size = 0x1000, scoped, tag = 'output window, operand 0, single buffered']
    %14 = vsyncpa [#allocation3], 0
    %15 = vsyncpa [#allocation6], 0
    %16 = vsyncpa [#allocation9], 0
    %17 = vsyncpa [#allocation12], 0
    %18 = vsyncpa [#allocation15], 0
    %19 = vsyncpa [#allocation4], 0
    // Predicated region
    $region2: #{tpu_custom_call.1} parent=1 // pred_check
      _
    $region3: #{tpu_custom_call.1} parent=1 // pred_check_branch
      %21 = sbr.rel (0) target = $region5
    $region4: #{tpu_custom_call.1} parent=1 // pred_region
      %s23 = ssub.s32 128, 128
      %24 = vsyncadd [#allocation3], %s23
      %s26 = sshll.u32 [#allocation2], 4
      %s27 = int_to_ptr.vmem [resolvable:$true] %s26
      %29 = dma.hbm_to_vmem [thread:$0]  %s0, 128, %s27, [#allocation3]
    $region5: #{tpu_custom_call.1} parent=1 // pred_fallthru
      _
    // Predicated region
    $region6: #{tpu_custom_call.1} parent=1 // pred_check
      _
    $region7: #{tpu_custom_call.1} parent=1 // pred_check_branch
      %31 = sbr.rel (0) target = $region9
    $region8: #{tpu_custom_call.1} parent=1 // pred_region
      %s33 = ssub.s32 2560, 2560
      %34 = vsyncadd [#allocation6], %s33
      %s35 = sshll.u32 [#allocation5], 4
      %s36 = int_to_ptr.vmem [resolvable:$true] %s35
      %41 = dma.hbm_to_vmem [thread:$0]  %s1, 2560, %s36, [#allocation6], 640, 640, 40
    $region9: #{tpu_custom_call.1} parent=1 // pred_fallthru
      _
    // Predicated region
    $region10: #{tpu_custom_call.1} parent=1 // pred_check
      _
    $region11: #{tpu_custom_call.1} parent=1 // pred_check_branch
      %43 = sbr.rel (0) target = $region13
    $region12: #{tpu_custom_call.1} parent=1 // pred_region
      %s45 = ssub.s32 160, 160
      %46 = vsyncadd [#allocation6], %s45
      %s48 = sshll.u32 [#allocation7], 4
      %s49 = int_to_ptr.vmem [resolvable:$true] %s48
      %51 = dma.hbm_to_vmem [thread:$0]  %s2, 160, %s49, [#allocation6]
    $region13: #{tpu_custom_call.1} parent=1 // pred_fallthru
      _
    // Predicated region
    $region14: #{tpu_custom_call.1} parent=1 // pred_check
      _
    $region15: #{tpu_custom_call.1} parent=1 // pred_check_branch
      %53 = sbr.rel (0) target = $region17
    $region16: #{tpu_custom_call.1} parent=1 // pred_region
      %s55 = ssub.s32 40960, 40960
      %56 = vsyncadd [#allocation9], %s55
      %s57 = sshll.u32 [#allocation8], 4
      %s58 = int_to_ptr.vmem [resolvable:$true] %s57
      %63 = dma.hbm_to_vmem [thread:$0]  %s3, 40960, %s58, [#allocation9], 256, 256, 16
    $region17: #{tpu_custom_call.1} parent=1 // pred_fallthru
      _
    // Predicated region
    $region18: #{tpu_custom_call.1} parent=1 // pred_check
      _
    $region19: #{tpu_custom_call.1} parent=1 // pred_check_branch
      %65 = sbr.rel (0) target = $region21
    $region20: #{tpu_custom_call.1} parent=1 // pred_region
      %s67 = ssub.s32 64, 64
      %68 = vsyncadd [#allocation9], %s67
      %s70 = sshll.u32 [#allocation10], 4
      %s71 = int_to_ptr.vmem [resolvable:$true] %s70
      %73 = dma.hbm_to_vmem [thread:$0]  %s4, 64, %s71, [#allocation9]
    $region21: #{tpu_custom_call.1} parent=1 // pred_fallthru
      _
    // Predicated region
    $region22: #{tpu_custom_call.1} parent=1 // pred_check
      _
    $region23: #{tpu_custom_call.1} parent=1 // pred_check_branch
      %75 = sbr.rel (0) target = $region25
    $region24: #{tpu_custom_call.1} parent=1 // pred_region
      %s77 = ssub.s32 8192, 8192
      %78 = vsyncadd [#allocation12], %s77
      %s79 = sshll.u32 [#allocation11], 4
      %s80 = int_to_ptr.vmem [resolvable:$true] %s79
      %85 = dma.hbm_to_vmem [thread:$0]  %s5, 8192, %s80, [#allocation12], 128, 128, 8
    $region25: #{tpu_custom_call.1} parent=1 // pred_fallthru
      _
    // Predicated region
    $region26: #{tpu_custom_call.1} parent=1 // pred_check
      _
    $region27: #{tpu_custom_call.1} parent=1 // pred_check_branch
      %87 = sbr.rel (0) target = $region29
    $region28: #{tpu_custom_call.1} parent=1 // pred_region
      %s89 = ssub.s32 32, 32
      %90 = vsyncadd [#allocation12], %s89
      %s92 = sshll.u32 [#allocation13], 4
      %s93 = int_to_ptr.vmem [resolvable:$true] %s92
      %95 = dma.hbm_to_vmem [thread:$0]  %s6, 32, %s93, [#allocation12]
    $region29: #{tpu_custom_call.1} parent=1 // pred_fallthru
      _
    // Predicated region
    $region30: #{tpu_custom_call.1} parent=1 // pred_check
      _
    $region31: #{tpu_custom_call.1} parent=1 // pred_check_branch
      %97 = sbr.rel (0) target = $region33
    $region32: #{tpu_custom_call.1} parent=1 // pred_region
      %s99 = ssub.s32 2048, 2048
      %100 = vsyncadd [#allocation15], %s99
      %s101 = sshll.u32 [#allocation14], 4
      %s102 = int_to_ptr.vmem [resolvable:$true] %s101
      %107 = dma.hbm_to_vmem [thread:$0]  %s7, 2048, %s102, [#allocation15], 64, 64, 4
    $region33: #{tpu_custom_call.1} parent=1 // pred_fallthru
      _
    // Predicated region
    $region34: #{tpu_custom_call.1} parent=1 // pred_check
      _
    $region35: #{tpu_custom_call.1} parent=1 // pred_check_branch
      %109 = sbr.rel (0) target = $region37
    $region36: #{tpu_custom_call.1} parent=1 // pred_region
      %s111 = ssub.s32 16, 16
      %112 = vsyncadd [#allocation15], %s111
      %s114 = sshll.u32 [#allocation16], 4
      %s115 = int_to_ptr.vmem [resolvable:$true] %s114
      %117 = dma.hbm_to_vmem [thread:$0]  %s8, 16, %s115, [#allocation15]
    $region37: #{tpu_custom_call.1} parent=1 // pred_fallthru
      _
    // Predicated region
    $region38: #{tpu_custom_call.1} parent=1 // pred_check
      _
    $region39: #{tpu_custom_call.1} parent=1 // pred_check_branch
      %119 = sbr.rel (0) target = $region41
    $region40: #{tpu_custom_call.1} parent=1 // pred_region
      %120 = dma.done [#allocation3], 128
    $region41: #{tpu_custom_call.1} parent=1 // pred_fallthru
      _
    // Predicated region
    $region42: #{tpu_custom_call.1} parent=1 // pred_check
      _
    $region43: #{tpu_custom_call.1} parent=1 // pred_check_branch
      %122 = sbr.rel (0) target = $region45
    $region44: #{tpu_custom_call.1} parent=1 // pred_region
      %123 = dma.done [#allocation6], 2560
    $region45: #{tpu_custom_call.1} parent=1 // pred_fallthru
      _
    // Predicated region
    $region46: #{tpu_custom_call.1} parent=1 // pred_check
      _
    $region47: #{tpu_custom_call.1} parent=1 // pred_check_branch
      %125 = sbr.rel (0) target = $region49
    $region48: #{tpu_custom_call.1} parent=1 // pred_region
      %126 = dma.done [#allocation6], 160
    $region49: #{tpu_custom_call.1} parent=1 // pred_fallthru
      _
    // Predicated region
    $region50: #{tpu_custom_call.1} parent=1 // pred_check
      _
    $region51: #{tpu_custom_call.1} parent=1 // pred_check_branch
      %128 = sbr.rel (0) target = $region53
    $region52: #{tpu_custom_call.1} parent=1 // pred_region
      %129 = dma.done [#allocation9], 40960
    $region53: #{tpu_custom_call.1} parent=1 // pred_fallthru
      _
    // Predicated region
    $region54: #{tpu_custom_call.1} parent=1 // pred_check
      _
    $region55: #{tpu_custom_call.1} parent=1 // pred_check_branch
      %131 = sbr.rel (0) target = $region57
    $region56: #{tpu_custom_call.1} parent=1 // pred_region
      %132 = dma.done [#allocation9], 64
    $region57: #{tpu_custom_call.1} parent=1 // pred_fallthru
      _
    // Predicated region
    $region58: #{tpu_custom_call.1} parent=1 // pred_check
      _
    $region59: #{tpu_custom_call.1} parent=1 // pred_check_branch
      %134 = sbr.rel (0) target = $region61
    $region60: #{tpu_custom_call.1} parent=1 // pred_region
      %135 = dma.done [#allocation12], 8192
    $region61: #{tpu_custom_call.1} parent=1 // pred_fallthru
      _
    // Predicated region
    $region62: #{tpu_custom_call.1} parent=1 // pred_check
      _
    $region63: #{tpu_custom_call.1} parent=1 // pred_check_branch
      %137 = sbr.rel (0) target = $region65
    $region64: #{tpu_custom_call.1} parent=1 // pred_region
      %138 = dma.done [#allocation12], 32
    $region65: #{tpu_custom_call.1} parent=1 // pred_fallthru
      _
    // Predicated region
    $region66: #{tpu_custom_call.1} parent=1 // pred_check
      _
    $region67: #{tpu_custom_call.1} parent=1 // pred_check_branch
      %140 = sbr.rel (0) target = $region69
    $region68: #{tpu_custom_call.1} parent=1 // pred_region
      %141 = dma.done [#allocation15], 2048
    $region69: #{tpu_custom_call.1} parent=1 // pred_fallthru
      _
    // Predicated region
    $region70: #{tpu_custom_call.1} parent=1 // pred_check
      _
    $region71: #{tpu_custom_call.1} parent=1 // pred_check_branch
      %143 = sbr.rel (0) target = $region73
    $region72: #{tpu_custom_call.1} parent=1 // pred_region
      %144 = dma.done [#allocation15], 16
    $region73: #{tpu_custom_call.1} parent=1 // pred_fallthru
      _
    %v146 = vld [vmem:[#allocation2] sm:$0xff]
    %v147 = vpack.c.bf16 %v146, %v146
    %v148 = vld [vmem:[#allocation5] sm:$0xff]
    %v149 = vld [vmem:[#allocation5 + $0x8] sm:$0xff]
    %v150 = vld [vmem:[#allocation5 + $0x10] sm:$0xff]
    %v151 = vld [vmem:[#allocation5 + $0x18] sm:$0xff]
    %v152 = vld [vmem:[#allocation5 + $0x20] sm:$0xff]
    %v153 = vld [vmem:[#allocation5 + $0x28] sm:$0xff]
    %v154 = vld [vmem:[#allocation5 + $0x30] sm:$0xff]
    %v155 = vld [vmem:[#allocation5 + $0x38] sm:$0xff]
    %v156 = vld [vmem:[#allocation5 + $0x40] sm:$0xff]
    %v157 = vld [vmem:[#allocation5 + $0x48] sm:$0xff]
    %v158 = vld [vmem:[#allocation5 + $0x50] sm:$0xff]
    %v159 = vld [vmem:[#allocation5 + $0x58] sm:$0xff]
    %v160 = vld [vmem:[#allocation5 + $0x60] sm:$0xff]
    %v161 = vld [vmem:[#allocation5 + $0x68] sm:$0xff]
    %v162 = vld [vmem:[#allocation5 + $0x70] sm:$0xff]
    %v163 = vld [vmem:[#allocation5 + $0x78] sm:$0xff]
    %v164 = vld [vmem:[#allocation5 + $0x80] sm:$0xff]
    %v165 = vld [vmem:[#allocation5 + $0x88] sm:$0xff]
    %v166 = vld [vmem:[#allocation5 + $0x90] sm:$0xff]
    %v167 = vld [vmem:[#allocation5 + $0x98] sm:$0xff]
    %v168 = vld [vmem:[#allocation7] sm:$0xff]
    %v169 = vld [vmem:[#allocation7 + $0x8] sm:$0x3]
    %v172 = vlaneseq
    %v173 = vshrl.u32 %v172, 7
    %v174 = vsub.s32 0, %v173
    %v175 = vrot.slane %v168, %v174
    %v176 = vlaneseq
    %v177 = vshrl.u32 %v176, 7
    %v178 = vsub.s32 1, %v177
    %v179 = vrot.slane %v168, %v178
    %v180 = vlaneseq
    %v181 = vshrl.u32 %v180, 7
    %v182 = vsub.s32 2, %v181
    %v183 = vrot.slane %v168, %v182
    %v184 = vlaneseq
    %v185 = vshrl.u32 %v184, 7
    %v186 = vsub.s32 3, %v185
    %v187 = vrot.slane %v168, %v186
    %v188 = vlaneseq
    %v189 = vshrl.u32 %v188, 7
    %v190 = vsub.s32 4, %v189
    %v191 = vrot.slane %v168, %v190
    %v192 = vlaneseq
    %v193 = vshrl.u32 %v192, 7
    %v194 = vsub.s32 5, %v193
    %v195 = vrot.slane %v168, %v194
    %v196 = vlaneseq
    %v197 = vshrl.u32 %v196, 7
    %v198 = vsub.s32 6, %v197
    %v199 = vrot.slane %v168, %v198
    %v200 = vlaneseq
    %v201 = vshrl.u32 %v200, 7
    %v202 = vsub.s32 7, %v201
    %v203 = vrot.slane %v168, %v202
    %v204 = vlaneseq
    %v205 = vshrl.u32 %v204, 7
    %v206 = vsub.s32 0, %v205
    %v207 = vrot.slane %v169, %v206
    %v208 = vlaneseq
    %v209 = vshrl.u32 %v208, 7
    %v210 = vsub.s32 1, %v209
    %v211 = vrot.slane %v169, %v210
    %v242 = vunpack.c.l.b16 %v148
    %v243 = vunpack.c.h.b16 %v148
    %v244 = vunpack.c.l.b16 %v149
    %v245 = vunpack.c.h.b16 %v149
    %v246 = vunpack.c.l.b16 %v150
    %v247 = vunpack.c.h.b16 %v150
    %v248 = vunpack.c.l.b16 %v151
    %v249 = vunpack.c.h.b16 %v151
    %v250 = vunpack.c.l.b16 %v152
    %v251 = vunpack.c.h.b16 %v152
    %v252 = vunpack.c.l.b16 %v153
    %v253 = vunpack.c.h.b16 %v153
    %v254 = vunpack.c.l.b16 %v154
    %v255 = vunpack.c.h.b16 %v154
    %v256 = vunpack.c.l.b16 %v155
    %v257 = vunpack.c.h.b16 %v155
    %v258 = vunpack.c.l.b16 %v156
    %v259 = vunpack.c.h.b16 %v156
    %v260 = vunpack.c.l.b16 %v157
    %v261 = vunpack.c.h.b16 %v157
    %v262 = vunpack.c.l.b16 %v158
    %v263 = vunpack.c.h.b16 %v158
    %v264 = vunpack.c.l.b16 %v159
    %v265 = vunpack.c.h.b16 %v159
    %v266 = vunpack.c.l.b16 %v160
    %v267 = vunpack.c.h.b16 %v160
    %v268 = vunpack.c.l.b16 %v161
    %v269 = vunpack.c.h.b16 %v161
    %v270 = vunpack.c.l.b16 %v162
    %v271 = vunpack.c.h.b16 %v162
    %v272 = vunpack.c.l.b16 %v163
    %v273 = vunpack.c.h.b16 %v163
    %v274 = vunpack.c.l.b16 %v164
    %v275 = vunpack.c.h.b16 %v164
    %v276 = vunpack.c.l.b16 %v165
    %v277 = vunpack.c.h.b16 %v165
    %v278 = vunpack.c.l.b16 %v166
    %v279 = vunpack.c.h.b16 %v166
    %v280 = vunpack.c.l.b16 %v167
    %v281 = vunpack.c.h.b16 %v167
    %v282 = vpack.c.b16 %v252, %v242
    %v283 = vpack.c.b16 %v253, %v243
    %v284 = vpack.c.b16 %v254, %v244
    %v285 = vpack.c.b16 %v255, %v245
    %v286 = vpack.c.b16 %v256, %v246
    %v287 = vpack.c.b16 %v257, %v247
    %v288 = vpack.c.b16 %v258, %v248
    %v289 = vpack.c.b16 %v259, %v249
    %v290 = vpack.c.b16 %v260, %v250
    %v291 = vpack.c.b16 %v261, %v251
    %v292 = vpack.c.b16 %v272, %v262
    %v293 = vpack.c.b16 %v273, %v263
    %v294 = vpack.c.b16 %v274, %v264
    %v295 = vpack.c.b16 %v275, %v265
    %v296 = vpack.c.b16 %v276, %v266
    %v297 = vpack.c.b16 %v277, %v267
    %v298 = vpack.c.b16 %v278, %v268
    %v299 = vpack.c.b16 %v279, %v269
    %v300 = vpack.c.b16 %v280, %v270
    %v301 = vpack.c.b16 %v281, %v271
    %vm322 = vcmask 261120
    %v324 = vsel %vm322, %v147, 0
    %326 = vmatprep.subr.bf16.mxu0 %v283
    %327 = vmatpush1.bf16.msra.mxu0 %v282
    %328 = vmatprep.subr.bf16.mxu0 %v293
    %329 = vmatpush1.bf16.msra.mxu0 %v292
    %330 = vmatprep.subr.bf16.mxu0 0
    %331 = vmatpush1.bf16.msra.mxu0 0
    %332 = vmatprep.subr.bf16.mxu0 0
    %333 = vmatpush1.bf16.msra.mxu0 0
    %334 = vmatprep.subr.bf16.mxu0 0
    %335 = vmatpush1.bf16.msra.mxu0 0
    %336 = vmatprep.subr.bf16.mxu0 0
    %337 = vmatpush1.bf16.msra.mxu0 0
    %338 = vmatprep.subr.bf16.mxu0 0
    %339 = vmatpush1.bf16.msra.mxu0 0
    %340 = vmatprep.subr.bf16.mxu0 0
    %341 = vmatpush1.bf16.msra.mxu0 0
    %342 = vmatprep.subr.bf16.mxu0 0
    %343 = vmatpush1.bf16.msra.mxu0 0
    %344 = vmatprep.subr.bf16.mxu0 0
    %345 = vmatpush1.bf16.msra.mxu0 0
    %346 = vmatprep.subr.bf16.mxu0 0
    %347 = vmatpush1.bf16.msra.mxu0 0
    %348 = vmatprep.subr.bf16.mxu0 0
    %349 = vmatpush1.bf16.msra.mxu0 0
    %350 = vmatprep.subr.bf16.mxu0 0
    %351 = vmatpush1.bf16.msra.mxu0 0
    %352 = vmatprep.subr.bf16.mxu0 0
    %353 = vmatpush1.bf16.msra.mxu0 0
    %354 = vmatprep.subr.bf16.mxu0 0
    %355 = vmatpush1.bf16.msra.mxu0 0
    %356 = vmatprep.subr.bf16.mxu0 0
    %357 = vmatpush1.bf16.msra.mxu0 0
    %358 = vmatprep.mubr.bf16.mxu0 0
    %359 = vmatmul.mubr.bf16.gmra.mrb[0].mxu0 %v324
    %v360 = vpop.f32.mrb[0].mxu0
    %v361 = vadd.f32 %v175, %v360
    %v362 = vpop.f32.mrb[0].mxu0
    %v363 = vadd.f32 %v179, %v362
    %v364 = vpop.f32.mrb[0].mxu0
    %v365 = vpop.f32.mrb[0].mxu0
    %366 = vdwg.mxu0
    %367 = vmatprep.subr.bf16.mxu0 %v285
    %368 = vmatpush1.bf16.msra.mxu0 %v284
    %369 = vmatprep.subr.bf16.mxu0 %v295
    %370 = vmatpush1.bf16.msra.mxu0 %v294
    %371 = vmatprep.subr.bf16.mxu0 0
    %372 = vmatpush1.bf16.msra.mxu0 0
    %373 = vmatprep.subr.bf16.mxu0 0
    %374 = vmatpush1.bf16.msra.mxu0 0
    %375 = vmatprep.subr.bf16.mxu0 0
    %376 = vmatpush1.bf16.msra.mxu0 0
    %377 = vmatprep.subr.bf16.mxu0 0
    %378 = vmatpush1.bf16.msra.mxu0 0
    %379 = vmatprep.subr.bf16.mxu0 0
    %380 = vmatpush1.bf16.msra.mxu0 0
    %381 = vmatprep.subr.bf16.mxu0 0
    %382 = vmatpush1.bf16.msra.mxu0 0
    %383 = vmatprep.subr.bf16.mxu0 0
    %384 = vmatpush1.bf16.msra.mxu0 0
    %385 = vmatprep.subr.bf16.mxu0 0
    %386 = vmatpush1.bf16.msra.mxu0 0
    %387 = vmatprep.subr.bf16.mxu0 0
    %388 = vmatpush1.bf16.msra.mxu0 0
    %389 = vmatprep.subr.bf16.mxu0 0
    %390 = vmatpush1.bf16.msra.mxu0 0
    %391 = vmatprep.subr.bf16.mxu0 0
    %392 = vmatpush1.bf16.msra.mxu0 0
    %393 = vmatprep.subr.bf16.mxu0 0
    %394 = vmatpush1.bf16.msra.mxu0 0
    %395 = vmatprep.subr.bf16.mxu0 0
    %396 = vmatpush1.bf16.msra.mxu0 0
    %397 = vmatprep.subr.bf16.mxu0 0
    %398 = vmatpush1.bf16.msra.mxu0 0
    %399 = vmatprep.mubr.bf16.mxu0 0
    %400 = vmatmul.mubr.bf16.gmra.mrb[0].mxu0 %v324
    %v401 = vpop.f32.mrb[0].mxu0
    %v402 = vadd.f32 %v183, %v401
    %v403 = vpop.f32.mrb[0].mxu0
    %v404 = vadd.f32 %v187, %v403
    %v405 = vpop.f32.mrb[0].mxu0
    %v406 = vpop.f32.mrb[0].mxu0
    %407 = vdwg.mxu0
    %408 = vmatprep.subr.bf16.mxu0 %v287
    %409 = vmatpush1.bf16.msra.mxu0 %v286
    %410 = vmatprep.subr.bf16.mxu0 %v297
    %411 = vmatpush1.bf16.msra.mxu0 %v296
    %412 = vmatprep.subr.bf16.mxu0 0
    %413 = vmatpush1.bf16.msra.mxu0 0
    %414 = vmatprep.subr.bf16.mxu0 0
    %415 = vmatpush1.bf16.msra.mxu0 0
    %416 = vmatprep.subr.bf16.mxu0 0
    %417 = vmatpush1.bf16.msra.mxu0 0
    %418 = vmatprep.subr.bf16.mxu0 0
    %419 = vmatpush1.bf16.msra.mxu0 0
    %420 = vmatprep.subr.bf16.mxu0 0
    %421 = vmatpush1.bf16.msra.mxu0 0
    %422 = vmatprep.subr.bf16.mxu0 0
    %423 = vmatpush1.bf16.msra.mxu0 0
    %424 = vmatprep.subr.bf16.mxu0 0
    %425 = vmatpush1.bf16.msra.mxu0 0
    %426 = vmatprep.subr.bf16.mxu0 0
    %427 = vmatpush1.bf16.msra.mxu0 0
    %428 = vmatprep.subr.bf16.mxu0 0
    %429 = vmatpush1.bf16.msra.mxu0 0
    %430 = vmatprep.subr.bf16.mxu0 0
    %431 = vmatpush1.bf16.msra.mxu0 0
    %432 = vmatprep.subr.bf16.mxu0 0
    %433 = vmatpush1.bf16.msra.mxu0 0
    %434 = vmatprep.subr.bf16.mxu0 0
    %435 = vmatpush1.bf16.msra.mxu0 0
    %436 = vmatprep.subr.bf16.mxu0 0
    %437 = vmatpush1.bf16.msra.mxu0 0
    %438 = vmatprep.subr.bf16.mxu0 0
    %439 = vmatpush1.bf16.msra.mxu0 0
    %440 = vmatprep.mubr.bf16.mxu0 0
    %441 = vmatmul.mubr.bf16.gmra.mrb[0].mxu0 %v324
    %v442 = vpop.f32.mrb[0].mxu0
    %v443 = vadd.f32 %v191, %v442
    %v444 = vpop.f32.mrb[0].mxu0
    %v445 = vadd.f32 %v195, %v444
    %v446 = vpop.f32.mrb[0].mxu0
    %v447 = vpop.f32.mrb[0].mxu0
    %448 = vdwg.mxu0
    %449 = vmatprep.subr.bf16.mxu0 %v289
    %450 = vmatpush1.bf16.msra.mxu0 %v288
    %451 = vmatprep.subr.bf16.mxu0 %v299
    %452 = vmatpush1.bf16.msra.mxu0 %v298
    %453 = vmatprep.subr.bf16.mxu0 0
    %454 = vmatpush1.bf16.msra.mxu0 0
    %455 = vmatprep.subr.bf16.mxu0 0
    %456 = vmatpush1.bf16.msra.mxu0 0
    %457 = vmatprep.subr.bf16.mxu0 0
    %458 = vmatpush1.bf16.msra.mxu0 0
    %459 = vmatprep.subr.bf16.mxu0 0
    %460 = vmatpush1.bf16.msra.mxu0 0
    %461 = vmatprep.subr.bf16.mxu0 0
    %462 = vmatpush1.bf16.msra.mxu0 0
    %463 = vmatprep.subr.bf16.mxu0 0
    %464 = vmatpush1.bf16.msra.mxu0 0
    %465 = vmatprep.subr.bf16.mxu0 0
    %466 = vmatpush1.bf16.msra.mxu0 0
    %467 = vmatprep.subr.bf16.mxu0 0
    %468 = vmatpush1.bf16.msra.mxu0 0
    %469 = vmatprep.subr.bf16.mxu0 0
    %470 = vmatpush1.bf16.msra.mxu0 0
    %471 = vmatprep.subr.bf16.mxu0 0
    %472 = vmatpush1.bf16.msra.mxu0 0
    %473 = vmatprep.subr.bf16.mxu0 0
    %474 = vmatpush1.bf16.msra.mxu0 0
    %475 = vmatprep.subr.bf16.mxu0 0
    %476 = vmatpush1.bf16.msra.mxu0 0
    %477 = vmatprep.subr.bf16.mxu0 0
    %478 = vmatpush1.bf16.msra.mxu0 0
    %479 = vmatprep.subr.bf16.mxu0 0
    %480 = vmatpush1.bf16.msra.mxu0 0
    %481 = vmatprep.mubr.bf16.mxu0 0
    %482 = vmatmul.mubr.bf16.gmra.mrb[0].mxu0 %v324
    %v483 = vpop.f32.mrb[0].mxu0
    %v484 = vadd.f32 %v199, %v483
    %v485 = vpop.f32.mrb[0].mxu0
    %v486 = vadd.f32 %v203, %v485
    %v487 = vpop.f32.mrb[0].mxu0
    %v488 = vpop.f32.mrb[0].mxu0
    %489 = vdwg.mxu0
    %490 = vmatprep.subr.bf16.mxu0 %v291
    %491 = vmatpush1.bf16.msra.mxu0 %v290
    %492 = vmatprep.subr.bf16.mxu0 %v301
    %493 = vmatpush1.bf16.msra.mxu0 %v300
    %494 = vmatprep.subr.bf16.mxu0 0
    %495 = vmatpush1.bf16.msra.mxu0 0
    %496 = vmatprep.subr.bf16.mxu0 0
    %497 = vmatpush1.bf16.msra.mxu0 0
    %498 = vmatprep.subr.bf16.mxu0 0
    %499 = vmatpush1.bf16.msra.mxu0 0
    %500 = vmatprep.subr.bf16.mxu0 0
    %501 = vmatpush1.bf16.msra.mxu0 0
    %502 = vmatprep.subr.bf16.mxu0 0
    %503 = vmatpush1.bf16.msra.mxu0 0
    %504 = vmatprep.subr.bf16.mxu0 0
    %505 = vmatpush1.bf16.msra.mxu0 0
    %506 = vmatprep.subr.bf16.mxu0 0
    %507 = vmatpush1.bf16.msra.mxu0 0
    %508 = vmatprep.subr.bf16.mxu0 0
    %509 = vmatpush1.bf16.msra.mxu0 0
    %510 = vmatprep.subr.bf16.mxu0 0
    %511 = vmatpush1.bf16.msra.mxu0 0
    %512 = vmatprep.subr.bf16.mxu0 0
    %513 = vmatpush1.bf16.msra.mxu0 0
    %514 = vmatprep.subr.bf16.mxu0 0
    %515 = vmatpush1.bf16.msra.mxu0 0
    %516 = vmatprep.subr.bf16.mxu0 0
    %517 = vmatpush1.bf16.msra.mxu0 0
    %518 = vmatprep.subr.bf16.mxu0 0
    %519 = vmatpush1.bf16.msra.mxu0 0
    %520 = vmatprep.subr.bf16.mxu0 0
    %521 = vmatpush1.bf16.msra.mxu0 0
    %522 = vmatprep.mubr.bf16.mxu0 0
    %523 = vmatmul.mubr.bf16.gmra.mrb[0].mxu0 %v324
    %v524 = vpop.f32.mrb[0].mxu0
    %v525 = vadd.f32 %v207, %v524
    %v526 = vpop.f32.mrb[0].mxu0
    %v527 = vadd.f32 %v211, %v526
    %v528 = vpop.f32.mrb[0].mxu0
    %v529 = vpop.f32.mrb[0].mxu0
    %530 = vdwg.mxu0
    %v531 = vmax.f32 %v361, 0.0
    %v532 = vmax.f32 %v363, 0.0
    %v533 = vmax.f32 %v402, 0.0
    %v534 = vmax.f32 %v404, 0.0
    %v535 = vmax.f32 %v443, 0.0
    %v536 = vmax.f32 %v445, 0.0
    %v537 = vmax.f32 %v484, 0.0
    %v538 = vmax.f32 %v486, 0.0
    %v539 = vmax.f32 %v525, 0.0
    %v540 = vmax.f32 %v527, 0.0
    %v541 = vpack.c.bf16 %v531, %v531
    %v542 = vpack.c.bf16 %v532, %v532
    %v543 = vpack.c.bf16 %v533, %v533
    %v544 = vpack.c.bf16 %v534, %v534
    %v545 = vpack.c.bf16 %v535, %v535
    %v546 = vpack.c.bf16 %v536, %v536
    %v547 = vpack.c.bf16 %v537, %v537
    %v548 = vpack.c.bf16 %v538, %v538
    %v549 = vpack.c.bf16 %v539, %v539
    %v550 = vpack.c.bf16 %v540, %v540
    %v551 = vld [vmem:[#allocation8] sm:$0xff]
    %v552 = vld [vmem:[#allocation8 + $0x8] sm:$0xff]
    %v553 = vld [vmem:[#allocation8 + $0x10] sm:$0xff]
    %v554 = vld [vmem:[#allocation8 + $0x18] sm:$0xff]
    %v555 = vld [vmem:[#allocation8 + $0x20] sm:$0xff]
    %v556 = vld [vmem:[#allocation8 + $0x28] sm:$0xff]
    %v557 = vld [vmem:[#allocation8 + $0x30] sm:$0xff]
    %v558 = vld [vmem:[#allocation8 + $0x38] sm:$0xff]
    %v559 = vld [vmem:[#allocation8 + $0x40] sm:$0xff]
    %v560 = vld [vmem:[#allocation8 + $0x48] sm:$0xff]
    %v561 = vld [vmem:[#allocation8 + $0x50] sm:$0xff]
    %v562 = vld [vmem:[#allocation8 + $0x58] sm:$0xff]
    %v563 = vld [vmem:[#allocation8 + $0x60] sm:$0xff]
    %v564 = vld [vmem:[#allocation8 + $0x68] sm:$0xff]
    %v565 = vld [vmem:[#allocation8 + $0x70] sm:$0xff]
    %v566 = vld [vmem:[#allocation8 + $0x78] sm:$0xff]
    %v567 = vld [vmem:[#allocation8 + $0x80] sm:$0xff]
    %v568 = vld [vmem:[#allocation8 + $0x88] sm:$0xff]
    %v569 = vld [vmem:[#allocation8 + $0x90] sm:$0xff]
    %v570 = vld [vmem:[#allocation8 + $0x98] sm:$0xff]
    %v571 = vld [vmem:[#allocation8 + $0xa0] sm:$0xff]
    %v572 = vld [vmem:[#allocation8 + $0xa8] sm:$0xff]
    %v573 = vld [vmem:[#allocation8 + $0xb0] sm:$0xff]
    %v574 = vld [vmem:[#allocation8 + $0xb8] sm:$0xff]
    %v575 = vld [vmem:[#allocation8 + $0xc0] sm:$0xff]
    %v576 = vld [vmem:[#allocation8 + $0xc8] sm:$0xff]
    %v577 = vld [vmem:[#allocation8 + $0xd0] sm:$0xff]
    %v578 = vld [vmem:[#allocation8 + $0xd8] sm:$0xff]
    %v579 = vld [vmem:[#allocation8 + $0xe0] sm:$0xff]
    %v580 = vld [vmem:[#allocation8 + $0xe8] sm:$0xff]
    %v581 = vld [vmem:[#allocation8 + $0xf0] sm:$0xff]
    %v582 = vld [vmem:[#allocation8 + $0xf8] sm:$0xff]
    %v583 = vld [vmem:[#allocation8 + $0x100] sm:$0xff]
    %v584 = vld [vmem:[#allocation8 + $0x108] sm:$0xff]
    %v585 = vld [vmem:[#allocation8 + $0x110] sm:$0xff]
    %v586 = vld [vmem:[#allocation8 + $0x118] sm:$0xff]
    %v587 = vld [vmem:[#allocation8 + $0x120] sm:$0xff]
    %v588 = vld [vmem:[#allocation8 + $0x128] sm:$0xff]
    %v589 = vld [vmem:[#allocation8 + $0x130] sm:$0xff]
    %v590 = vld [vmem:[#allocation8 + $0x138] sm:$0xff]
    %v591 = vld [vmem:[#allocation8 + $0x140] sm:$0xff]
    %v592 = vld [vmem:[#allocation8 + $0x148] sm:$0xff]
    %v593 = vld [vmem:[#allocation8 + $0x150] sm:$0xff]
    %v594 = vld [vmem:[#allocation8 + $0x158] sm:$0xff]
    %v595 = vld [vmem:[#allocation8 + $0x160] sm:$0xff]
    %v596 = vld [vmem:[#allocation8 + $0x168] sm:$0xff]
    %v597 = vld [vmem:[#allocation8 + $0x170] sm:$0xff]
    %v598 = vld [vmem:[#allocation8 + $0x178] sm:$0xff]
    %v599 = vld [vmem:[#allocation8 + $0x180] sm:$0xff]
    %v600 = vld [vmem:[#allocation8 + $0x188] sm:$0xff]
    %v601 = vld [vmem:[#allocation8 + $0x190] sm:$0xff]
    %v602 = vld [vmem:[#allocation8 + $0x198] sm:$0xff]
    %v603 = vld [vmem:[#allocation8 + $0x1a0] sm:$0xff]
    %v604 = vld [vmem:[#allocation8 + $0x1a8] sm:$0xff]
    %v605 = vld [vmem:[#allocation8 + $0x1b0] sm:$0xff]
    %v606 = vld [vmem:[#allocation8 + $0x1b8] sm:$0xff]
    %v607 = vld [vmem:[#allocation8 + $0x1c0] sm:$0xff]
    %v608 = vld [vmem:[#allocation8 + $0x1c8] sm:$0xff]
    %v609 = vld [vmem:[#allocation8 + $0x1d0] sm:$0xff]
    %v610 = vld [vmem:[#allocation8 + $0x1d8] sm:$0xff]
    %v611 = vld [vmem:[#allocation8 + $0x1e0] sm:$0xff]
    %v612 = vld [vmem:[#allocation8 + $0x1e8] sm:$0xff]
    %v613 = vld [vmem:[#allocation8 + $0x1f0] sm:$0xff]
    %v614 = vld [vmem:[#allocation8 + $0x1f8] sm:$0xff]
    %v615 = vld [vmem:[#allocation8 + $0x200] sm:$0xff]
    %v616 = vld [vmem:[#allocation8 + $0x208] sm:$0xff]
    %v617 = vld [vmem:[#allocation8 + $0x210] sm:$0xff]
    %v618 = vld [vmem:[#allocation8 + $0x218] sm:$0xff]
    %v619 = vld [vmem:[#allocation8 + $0x220] sm:$0xff]
    %v620 = vld [vmem:[#allocation8 + $0x228] sm:$0xff]
    %v621 = vld [vmem:[#allocation8 + $0x230] sm:$0xff]
    %v622 = vld [vmem:[#allocation8 + $0x238] sm:$0xff]
    %v623 = vld [vmem:[#allocation8 + $0x240] sm:$0xff]
    %v624 = vld [vmem:[#allocation8 + $0x248] sm:$0xff]
    %v625 = vld [vmem:[#allocation8 + $0x250] sm:$0xff]
    %v626 = vld [vmem:[#allocation8 + $0x258] sm:$0xff]
    %v627 = vld [vmem:[#allocation8 + $0x260] sm:$0xff]
    %v628 = vld [vmem:[#allocation8 + $0x268] sm:$0xff]
    %v629 = vld [vmem:[#allocation8 + $0x270] sm:$0xff]
    %v630 = vld [vmem:[#allocation8 + $0x278] sm:$0xff]
    %v631 = vld [vmem:[#allocation8 + $0x280] sm:$0xff]
    %v632 = vld [vmem:[#allocation8 + $0x288] sm:$0xff]
    %v633 = vld [vmem:[#allocation8 + $0x290] sm:$0xff]
    %v634 = vld [vmem:[#allocation8 + $0x298] sm:$0xff]
    %v635 = vld [vmem:[#allocation8 + $0x2a0] sm:$0xff]
    %v636 = vld [vmem:[#allocation8 + $0x2a8] sm:$0xff]
    %v637 = vld [vmem:[#allocation8 + $0x2b0] sm:$0xff]
    %v638 = vld [vmem:[#allocation8 + $0x2b8] sm:$0xff]
    %v639 = vld [vmem:[#allocation8 + $0x2c0] sm:$0xff]
    %v640 = vld [vmem:[#allocation8 + $0x2c8] sm:$0xff]
    %v641 = vld [vmem:[#allocation8 + $0x2d0] sm:$0xff]
    %v642 = vld [vmem:[#allocation8 + $0x2d8] sm:$0xff]
    %v643 = vld [vmem:[#allocation8 + $0x2e0] sm:$0xff]
    %v644 = vld [vmem:[#allocation8 + $0x2e8] sm:$0xff]
    %v645 = vld [vmem:[#allocation8 + $0x2f0] sm:$0xff]
    %v646 = vld [vmem:[#allocation8 + $0x2f8] sm:$0xff]
    %v647 = vld [vmem:[#allocation8 + $0x300] sm:$0xff]
    %v648 = vld [vmem:[#allocation8 + $0x308] sm:$0xff]
    %v649 = vld [vmem:[#allocation8 + $0x310] sm:$0xff]
    %v650 = vld [vmem:[#allocation8 + $0x318] sm:$0xff]
    %v651 = vld [vmem:[#allocation8 + $0x320] sm:$0xff]
    %v652 = vld [vmem:[#allocation8 + $0x328] sm:$0xff]
    %v653 = vld [vmem:[#allocation8 + $0x330] sm:$0xff]
    %v654 = vld [vmem:[#allocation8 + $0x338] sm:$0xff]
    %v655 = vld [vmem:[#allocation8 + $0x340] sm:$0xff]
    %v656 = vld [vmem:[#allocation8 + $0x348] sm:$0xff]
    %v657 = vld [vmem:[#allocation8 + $0x350] sm:$0xff]
    %v658 = vld [vmem:[#allocation8 + $0x358] sm:$0xff]
    %v659 = vld [vmem:[#allocation8 + $0x360] sm:$0xff]
    %v660 = vld [vmem:[#allocation8 + $0x368] sm:$0xff]
    %v661 = vld [vmem:[#allocation8 + $0x370] sm:$0xff]
    %v662 = vld [vmem:[#allocation8 + $0x378] sm:$0xff]
    %v663 = vld [vmem:[#allocation8 + $0x380] sm:$0xff]
    %v664 = vld [vmem:[#allocation8 + $0x388] sm:$0xff]
    %v665 = vld [vmem:[#allocation8 + $0x390] sm:$0xff]
    %v666 = vld [vmem:[#allocation8 + $0x398] sm:$0xff]
    %v667 = vld [vmem:[#allocation8 + $0x3a0] sm:$0xff]
    %v668 = vld [vmem:[#allocation8 + $0x3a8] sm:$0xff]
    %v669 = vld [vmem:[#allocation8 + $0x3b0] sm:$0xff]
    %v670 = vld [vmem:[#allocation8 + $0x3b8] sm:$0xff]
    %v671 = vld [vmem:[#allocation8 + $0x3c0] sm:$0xff]
    %v672 = vld [vmem:[#allocation8 + $0x3c8] sm:$0xff]
    %v673 = vld [vmem:[#allocation8 + $0x3d0] sm:$0xff]
    %v674 = vld [vmem:[#allocation8 + $0x3d8] sm:$0xff]
    %v675 = vld [vmem:[#allocation8 + $0x3e0] sm:$0xff]
    %v676 = vld [vmem:[#allocation8 + $0x3e8] sm:$0xff]
    %v677 = vld [vmem:[#allocation8 + $0x3f0] sm:$0xff]
    %v678 = vld [vmem:[#allocation8 + $0x3f8] sm:$0xff]
    %v679 = vld [vmem:[#allocation8 + $0x400] sm:$0xff]
    %v680 = vld [vmem:[#allocation8 + $0x408] sm:$0xff]
    %v681 = vld [vmem:[#allocation8 + $0x410] sm:$0xff]
    %v682 = vld [vmem:[#allocation8 + $0x418] sm:$0xff]
    %v683 = vld [vmem:[#allocation8 + $0x420] sm:$0xff]
    %v684 = vld [vmem:[#allocation8 + $0x428] sm:$0xff]
    %v685 = vld [vmem:[#allocation8 + $0x430] sm:$0xff]
    %v686 = vld [vmem:[#allocation8 + $0x438] sm:$0xff]
    %v687 = vld [vmem:[#allocation8 + $0x440] sm:$0xff]
    %v688 = vld [vmem:[#allocation8 + $0x448] sm:$0xff]
    %v689 = vld [vmem:[#allocation8 + $0x450] sm:$0xff]
    %v690 = vld [vmem:[#allocation8 + $0x458] sm:$0xff]
    %v691 = vld [vmem:[#allocation8 + $0x460] sm:$0xff]
    %v692 = vld [vmem:[#allocation8 + $0x468] sm:$0xff]
    %v693 = vld [vmem:[#allocation8 + $0x470] sm:$0xff]
    %v694 = vld [vmem:[#allocation8 + $0x478] sm:$0xff]
    %v695 = vld [vmem:[#allocation8 + $0x480] sm:$0xff]
    %v696 = vld [vmem:[#allocation8 + $0x488] sm:$0xff]
    %v697 = vld [vmem:[#allocation8 + $0x490] sm:$0xff]
    %v698 = vld [vmem:[#allocation8 + $0x498] sm:$0xff]
    %v699 = vld [vmem:[#allocation8 + $0x4a0] sm:$0xff]
    %v700 = vld [vmem:[#allocation8 + $0x4a8] sm:$0xff]
    %v701 = vld [vmem:[#allocation8 + $0x4b0] sm:$0xff]
    %v702 = vld [vmem:[#allocation8 + $0x4b8] sm:$0xff]
    %v703 = vld [vmem:[#allocation8 + $0x4c0] sm:$0xff]
    %v704 = vld [vmem:[#allocation8 + $0x4c8] sm:$0xff]
    %v705 = vld [vmem:[#allocation8 + $0x4d0] sm:$0xff]
    %v706 = vld [vmem:[#allocation8 + $0x4d8] sm:$0xff]
    %v707 = vld [vmem:[#allocation8 + $0x4e0] sm:$0xff]
    %v708 = vld [vmem:[#allocation8 + $0x4e8] sm:$0xff]
    %v709 = vld [vmem:[#allocation8 + $0x4f0] sm:$0xff]
    %v710 = vld [vmem:[#allocation8 + $0x4f8] sm:$0xff]
    %v711 = vld [vmem:[#allocation8 + $0x500] sm:$0xff]
    %v712 = vld [vmem:[#allocation8 + $0x508] sm:$0xff]
    %v713 = vld [vmem:[#allocation8 + $0x510] sm:$0xff]
    %v714 = vld [vmem:[#allocation8 + $0x518] sm:$0xff]
    %v715 = vld [vmem:[#allocation8 + $0x520] sm:$0xff]
    %v716 = vld [vmem:[#allocation8 + $0x528] sm:$0xff]
    %v717 = vld [vmem:[#allocation8 + $0x530] sm:$0xff]
    %v718 = vld [vmem:[#allocation8 + $0x538] sm:$0xff]
    %v719 = vld [vmem:[#allocation8 + $0x540] sm:$0xff]
    %v720 = vld [vmem:[#allocation8 + $0x548] sm:$0xff]
    %v721 = vld [vmem:[#allocation8 + $0x550] sm:$0xff]
    %v722 = vld [vmem:[#allocation8 + $0x558] sm:$0xff]
    %v723 = vld [vmem:[#allocation8 + $0x560] sm:$0xff]
    %v724 = vld [vmem:[#allocation8 + $0x568] sm:$0xff]
    %v725 = vld [vmem:[#allocation8 + $0x570] sm:$0xff]
    %v726 = vld [vmem:[#allocation8 + $0x578] sm:$0xff]
    %v727 = vld [vmem:[#allocation8 + $0x580] sm:$0xff]
    %v728 = vld [vmem:[#allocation8 + $0x588] sm:$0xff]
    %v729 = vld [vmem:[#allocation8 + $0x590] sm:$0xff]
    %v730 = vld [vmem:[#allocation8 + $0x598] sm:$0xff]
    %v731 = vld [vmem:[#allocation8 + $0x5a0] sm:$0xff]
    %v732 = vld [vmem:[#allocation8 + $0x5a8] sm:$0xff]
    %v733 = vld [vmem:[#allocation8 + $0x5b0] sm:$0xff]
    %v734 = vld [vmem:[#allocation8 + $0x5b8] sm:$0xff]
    %v735 = vld [vmem:[#allocation8 + $0x5c0] sm:$0xff]
    %v736 = vld [vmem:[#allocation8 + $0x5c8] sm:$0xff]
    %v737 = vld [vmem:[#allocation8 + $0x5d0] sm:$0xff]
    %v738 = vld [vmem:[#allocation8 + $0x5d8] sm:$0xff]
    %v739 = vld [vmem:[#allocation8 + $0x5e0] sm:$0xff]
    %v740 = vld [vmem:[#allocation8 + $0x5e8] sm:$0xff]
    %v741 = vld [vmem:[#allocation8 + $0x5f0] sm:$0xff]
    %v742 = vld [vmem:[#allocation8 + $0x5f8] sm:$0xff]
    %v743 = vld [vmem:[#allocation8 + $0x600] sm:$0xff]
    %v744 = vld [vmem:[#allocation8 + $0x608] sm:$0xff]
    %v745 = vld [vmem:[#allocation8 + $0x610] sm:$0xff]
    %v746 = vld [vmem:[#allocation8 + $0x618] sm:$0xff]
    %v747 = vld [vmem:[#allocation8 + $0x620] sm:$0xff]
    %v748 = vld [vmem:[#allocation8 + $0x628] sm:$0xff]
    %v749 = vld [vmem:[#allocation8 + $0x630] sm:$0xff]
    %v750 = vld [vmem:[#allocation8 + $0x638] sm:$0xff]
    %v751 = vld [vmem:[#allocation8 + $0x640] sm:$0xff]
    %v752 = vld [vmem:[#allocation8 + $0x648] sm:$0xff]
    %v753 = vld [vmem:[#allocation8 + $0x650] sm:$0xff]
    %v754 = vld [vmem:[#allocation8 + $0x658] sm:$0xff]
    %v755 = vld [vmem:[#allocation8 + $0x660] sm:$0xff]
    %v756 = vld [vmem:[#allocation8 + $0x668] sm:$0xff]
    %v757 = vld [vmem:[#allocation8 + $0x670] sm:$0xff]
    %v758 = vld [vmem:[#allocation8 + $0x678] sm:$0xff]
    %v759 = vld [vmem:[#allocation8 + $0x680] sm:$0xff]
    %v760 = vld [vmem:[#allocation8 + $0x688] sm:$0xff]
    %v761 = vld [vmem:[#allocation8 + $0x690] sm:$0xff]
    %v762 = vld [vmem:[#allocation8 + $0x698] sm:$0xff]
    %v763 = vld [vmem:[#allocation8 + $0x6a0] sm:$0xff]
    %v764 = vld [vmem:[#allocation8 + $0x6a8] sm:$0xff]
    %v765 = vld [vmem:[#allocation8 + $0x6b0] sm:$0xff]
    %v766 = vld [vmem:[#allocation8 + $0x6b8] sm:$0xff]
    %v767 = vld [vmem:[#allocation8 + $0x6c0] sm:$0xff]
    %v768 = vld [vmem:[#allocation8 + $0x6c8] sm:$0xff]
    %v769 = vld [vmem:[#allocation8 + $0x6d0] sm:$0xff]
    %v770 = vld [vmem:[#allocation8 + $0x6d8] sm:$0xff]
    %v771 = vld [vmem:[#allocation8 + $0x6e0] sm:$0xff]
    %v772 = vld [vmem:[#allocation8 + $0x6e8] sm:$0xff]
    %v773 = vld [vmem:[#allocation8 + $0x6f0] sm:$0xff]
    %v774 = vld [vmem:[#allocation8 + $0x6f8] sm:$0xff]
    %v775 = vld [vmem:[#allocation8 + $0x700] sm:$0xff]
    %v776 = vld [vmem:[#allocation8 + $0x708] sm:$0xff]
    %v777 = vld [vmem:[#allocation8 + $0x710] sm:$0xff]
    %v778 = vld [vmem:[#allocation8 + $0x718] sm:$0xff]
    %v779 = vld [vmem:[#allocation8 + $0x720] sm:$0xff]
    %v780 = vld [vmem:[#allocation8 + $0x728] sm:$0xff]
    %v781 = vld [vmem:[#allocation8 + $0x730] sm:$0xff]
    %v782 = vld [vmem:[#allocation8 + $0x738] sm:$0xff]
    %v783 = vld [vmem:[#allocation8 + $0x740] sm:$0xff]
    %v784 = vld [vmem:[#allocation8 + $0x748] sm:$0xff]
    %v785 = vld [vmem:[#allocation8 + $0x750] sm:$0xff]
    %v786 = vld [vmem:[#allocation8 + $0x758] sm:$0xff]
    %v787 = vld [vmem:[#allocation8 + $0x760] sm:$0xff]
    %v788 = vld [vmem:[#allocation8 + $0x768] sm:$0xff]
    %v789 = vld [vmem:[#allocation8 + $0x770] sm:$0xff]
    %v790 = vld [vmem:[#allocation8 + $0x778] sm:$0xff]
    %v791 = vld [vmem:[#allocation8 + $0x780] sm:$0xff]
    %v792 = vld [vmem:[#allocation8 + $0x788] sm:$0xff]
    %v793 = vld [vmem:[#allocation8 + $0x790] sm:$0xff]
    %v794 = vld [vmem:[#allocation8 + $0x798] sm:$0xff]
    %v795 = vld [vmem:[#allocation8 + $0x7a0] sm:$0xff]
    %v796 = vld [vmem:[#allocation8 + $0x7a8] sm:$0xff]
    %v797 = vld [vmem:[#allocation8 + $0x7b0] sm:$0xff]
    %v798 = vld [vmem:[#allocation8 + $0x7b8] sm:$0xff]
    %v799 = vld [vmem:[#allocation8 + $0x7c0] sm:$0xff]
    %v800 = vld [vmem:[#allocation8 + $0x7c8] sm:$0xff]
    %v801 = vld [vmem:[#allocation8 + $0x7d0] sm:$0xff]
    %v802 = vld [vmem:[#allocation8 + $0x7d8] sm:$0xff]
    %v803 = vld [vmem:[#allocation8 + $0x7e0] sm:$0xff]
    %v804 = vld [vmem:[#allocation8 + $0x7e8] sm:$0xff]
    %v805 = vld [vmem:[#allocation8 + $0x7f0] sm:$0xff]
    %v806 = vld [vmem:[#allocation8 + $0x7f8] sm:$0xff]
    %v807 = vld [vmem:[#allocation8 + $0x800] sm:$0xff]
    %v808 = vld [vmem:[#allocation8 + $0x808] sm:$0xff]
    %v809 = vld [vmem:[#allocation8 + $0x810] sm:$0xff]
    %v810 = vld [vmem:[#allocation8 + $0x818] sm:$0xff]
    %v811 = vld [vmem:[#allocation8 + $0x820] sm:$0xff]
    %v812 = vld [vmem:[#allocation8 + $0x828] sm:$0xff]
    %v813 = vld [vmem:[#allocation8 + $0x830] sm:$0xff]
    %v814 = vld [vmem:[#allocation8 + $0x838] sm:$0xff]
    %v815 = vld [vmem:[#allocation8 + $0x840] sm:$0xff]
    %v816 = vld [vmem:[#allocation8 + $0x848] sm:$0xff]
    %v817 = vld [vmem:[#allocation8 + $0x850] sm:$0xff]
    %v818 = vld [vmem:[#allocation8 + $0x858] sm:$0xff]
    %v819 = vld [vmem:[#allocation8 + $0x860] sm:$0xff]
    %v820 = vld [vmem:[#allocation8 + $0x868] sm:$0xff]
    %v821 = vld [vmem:[#allocation8 + $0x870] sm:$0xff]
    %v822 = vld [vmem:[#allocation8 + $0x878] sm:$0xff]
    %v823 = vld [vmem:[#allocation8 + $0x880] sm:$0xff]
    %v824 = vld [vmem:[#allocation8 + $0x888] sm:$0xff]
    %v825 = vld [vmem:[#allocation8 + $0x890] sm:$0xff]
    %v826 = vld [vmem:[#allocation8 + $0x898] sm:$0xff]
    %v827 = vld [vmem:[#allocation8 + $0x8a0] sm:$0xff]
    %v828 = vld [vmem:[#allocation8 + $0x8a8] sm:$0xff]
    %v829 = vld [vmem:[#allocation8 + $0x8b0] sm:$0xff]
    %v830 = vld [vmem:[#allocation8 + $0x8b8] sm:$0xff]
    %v831 = vld [vmem:[#allocation8 + $0x8c0] sm:$0xff]
    %v832 = vld [vmem:[#allocation8 + $0x8c8] sm:$0xff]
    %v833 = vld [vmem:[#allocation8 + $0x8d0] sm:$0xff]
    %v834 = vld [vmem:[#allocation8 + $0x8d8] sm:$0xff]
    %v835 = vld [vmem:[#allocation8 + $0x8e0] sm:$0xff]
    %v836 = vld [vmem:[#allocation8 + $0x8e8] sm:$0xff]
    %v837 = vld [vmem:[#allocation8 + $0x8f0] sm:$0xff]
    %v838 = vld [vmem:[#allocation8 + $0x8f8] sm:$0xff]
    %v839 = vld [vmem:[#allocation8 + $0x900] sm:$0xff]
    %v840 = vld [vmem:[#allocation8 + $0x908] sm:$0xff]
    %v841 = vld [vmem:[#allocation8 + $0x910] sm:$0xff]
    %v842 = vld [vmem:[#allocation8 + $0x918] sm:$0xff]
    %v843 = vld [vmem:[#allocation8 + $0x920] sm:$0xff]
    %v844 = vld [vmem:[#allocation8 + $0x928] sm:$0xff]
    %v845 = vld [vmem:[#allocation8 + $0x930] sm:$0xff]
    %v846 = vld [vmem:[#allocation8 + $0x938] sm:$0xff]
    %v847 = vld [vmem:[#allocation8 + $0x940] sm:$0xff]
    %v848 = vld [vmem:[#allocation8 + $0x948] sm:$0xff]
    %v849 = vld [vmem:[#allocation8 + $0x950] sm:$0xff]
    %v850 = vld [vmem:[#allocation8 + $0x958] sm:$0xff]
    %v851 = vld [vmem:[#allocation8 + $0x960] sm:$0xff]
    %v852 = vld [vmem:[#allocation8 + $0x968] sm:$0xff]
    %v853 = vld [vmem:[#allocation8 + $0x970] sm:$0xff]
    %v854 = vld [vmem:[#allocation8 + $0x978] sm:$0xff]
    %v855 = vld [vmem:[#allocation8 + $0x980] sm:$0xff]
    %v856 = vld [vmem:[#allocation8 + $0x988] sm:$0xff]
    %v857 = vld [vmem:[#allocation8 + $0x990] sm:$0xff]
    %v858 = vld [vmem:[#allocation8 + $0x998] sm:$0xff]
    %v859 = vld [vmem:[#allocation8 + $0x9a0] sm:$0xff]
    %v860 = vld [vmem:[#allocation8 + $0x9a8] sm:$0xff]
    %v861 = vld [vmem:[#allocation8 + $0x9b0] sm:$0xff]
    %v862 = vld [vmem:[#allocation8 + $0x9b8] sm:$0xff]
    %v863 = vld [vmem:[#allocation8 + $0x9c0] sm:$0xff]
    %v864 = vld [vmem:[#allocation8 + $0x9c8] sm:$0xff]
    %v865 = vld [vmem:[#allocation8 + $0x9d0] sm:$0xff]
    %v866 = vld [vmem:[#allocation8 + $0x9d8] sm:$0xff]
    %v867 = vld [vmem:[#allocation8 + $0x9e0] sm:$0xff]
    %v868 = vld [vmem:[#allocation8 + $0x9e8] sm:$0xff]
    %v869 = vld [vmem:[#allocation8 + $0x9f0] sm:$0xff]
    %v870 = vld [vmem:[#allocation8 + $0x9f8] sm:$0xff]
    %v871 = vld [vmem:[#allocation10] sm:$0xf]
    %v873 = vlaneseq
    %v874 = vshrl.u32 %v873, 7
    %v875 = vsub.s32 0, %v874
    %v876 = vrot.slane %v871, %v875
    %v877 = vlaneseq
    %v878 = vshrl.u32 %v877, 7
    %v879 = vsub.s32 1, %v878
    %v880 = vrot.slane %v871, %v879
    %v881 = vlaneseq
    %v882 = vshrl.u32 %v881, 7
    %v883 = vsub.s32 2, %v882
    %v884 = vrot.slane %v871, %v883
    %v885 = vlaneseq
    %v886 = vshrl.u32 %v885, 7
    %v887 = vsub.s32 3, %v886
    %v888 = vrot.slane %v871, %v887
    %v1213 = vunpack.c.l.b16 %v551
    %v1214 = vunpack.c.h.b16 %v551
    %v1215 = vunpack.c.l.b16 %v552
    %v1216 = vunpack.c.h.b16 %v552
    %v1217 = vunpack.c.l.b16 %v553
    %v1218 = vunpack.c.h.b16 %v553
    %v1219 = vunpack.c.l.b16 %v554
    %v1220 = vunpack.c.h.b16 %v554
    %v1221 = vunpack.c.l.b16 %v555
    %v1222 = vunpack.c.h.b16 %v555
    %v1223 = vunpack.c.l.b16 %v556
    %v1224 = vunpack.c.h.b16 %v556
    %v1225 = vunpack.c.l.b16 %v557
    %v1226 = vunpack.c.h.b16 %v557
    %v1227 = vunpack.c.l.b16 %v558
    %v1228 = vunpack.c.h.b16 %v558
    %v1229 = vunpack.c.l.b16 %v559
    %v1230 = vunpack.c.h.b16 %v559
    %v1231 = vunpack.c.l.b16 %v560
    %v1232 = vunpack.c.h.b16 %v560
    %v1233 = vunpack.c.l.b16 %v561
    %v1234 = vunpack.c.h.b16 %v561
    %v1235 = vunpack.c.l.b16 %v562
    %v1236 = vunpack.c.h.b16 %v562
    %v1237 = vunpack.c.l.b16 %v563
    %v1238 = vunpack.c.h.b16 %v563
    %v1239 = vunpack.c.l.b16 %v564
    %v1240 = vunpack.c.h.b16 %v564
    %v1241 = vunpack.c.l.b16 %v565
    %v1242 = vunpack.c.h.b16 %v565
    %v1243 = vunpack.c.l.b16 %v566
    %v1244 = vunpack.c.h.b16 %v566
    %v1245 = vunpack.c.l.b16 %v567
    %v1246 = vunpack.c.h.b16 %v567
    %v1247 = vunpack.c.l.b16 %v568
    %v1248 = vunpack.c.h.b16 %v568
    %v1249 = vunpack.c.l.b16 %v569
    %v1250 = vunpack.c.h.b16 %v569
    %v1251 = vunpack.c.l.b16 %v570
    %v1252 = vunpack.c.h.b16 %v570
    %v1253 = vunpack.c.l.b16 %v571
    %v1254 = vunpack.c.h.b16 %v571
    %v1255 = vunpack.c.l.b16 %v572
    %v1256 = vunpack.c.h.b16 %v572
    %v1257 = vunpack.c.l.b16 %v573
    %v1258 = vunpack.c.h.b16 %v573
    %v1259 = vunpack.c.l.b16 %v574
    %v1260 = vunpack.c.h.b16 %v574
    %v1261 = vunpack.c.l.b16 %v575
    %v1262 = vunpack.c.h.b16 %v575
    %v1263 = vunpack.c.l.b16 %v576
    %v1264 = vunpack.c.h.b16 %v576
    %v1265 = vunpack.c.l.b16 %v577
    %v1266 = vunpack.c.h.b16 %v577
    %v1267 = vunpack.c.l.b16 %v578
    %v1268 = vunpack.c.h.b16 %v578
    %v1269 = vunpack.c.l.b16 %v579
    %v1270 = vunpack.c.h.b16 %v579
    %v1271 = vunpack.c.l.b16 %v580
    %v1272 = vunpack.c.h.b16 %v580
    %v1273 = vunpack.c.l.b16 %v581
    %v1274 = vunpack.c.h.b16 %v581
    %v1275 = vunpack.c.l.b16 %v582
    %v1276 = vunpack.c.h.b16 %v582
    %v1277 = vunpack.c.l.b16 %v583
    %v1278 = vunpack.c.h.b16 %v583
    %v1279 = vunpack.c.l.b16 %v584
    %v1280 = vunpack.c.h.b16 %v584
    %v1281 = vunpack.c.l.b16 %v585
    %v1282 = vunpack.c.h.b16 %v585
    %v1283 = vunpack.c.l.b16 %v586
    %v1284 = vunpack.c.h.b16 %v586
    %v1285 = vunpack.c.l.b16 %v587
    %v1286 = vunpack.c.h.b16 %v587
    %v1287 = vunpack.c.l.b16 %v588
    %v1288 = vunpack.c.h.b16 %v588
    %v1289 = vunpack.c.l.b16 %v589
    %v1290 = vunpack.c.h.b16 %v589
    %v1291 = vunpack.c.l.b16 %v590
    %v1292 = vunpack.c.h.b16 %v590
    %v1293 = vunpack.c.l.b16 %v591
    %v1294 = vunpack.c.h.b16 %v591
    %v1295 = vunpack.c.l.b16 %v592
    %v1296 = vunpack.c.h.b16 %v592
    %v1297 = vunpack.c.l.b16 %v593
    %v1298 = vunpack.c.h.b16 %v593
    %v1299 = vunpack.c.l.b16 %v594
    %v1300 = vunpack.c.h.b16 %v594
    %v1301 = vunpack.c.l.b16 %v595
    %v1302 = vunpack.c.h.b16 %v595
    %v1303 = vunpack.c.l.b16 %v596
    %v1304 = vunpack.c.h.b16 %v596
    %v1305 = vunpack.c.l.b16 %v597
    %v1306 = vunpack.c.h.b16 %v597
    %v1307 = vunpack.c.l.b16 %v598
    %v1308 = vunpack.c.h.b16 %v598
    %v1309 = vunpack.c.l.b16 %v599
    %v1310 = vunpack.c.h.b16 %v599
    %v1311 = vunpack.c.l.b16 %v600
    %v1312 = vunpack.c.h.b16 %v600
    %v1313 = vunpack.c.l.b16 %v601
    %v1314 = vunpack.c.h.b16 %v601
    %v1315 = vunpack.c.l.b16 %v602
    %v1316 = vunpack.c.h.b16 %v602
    %v1317 = vunpack.c.l.b16 %v603
    %v1318 = vunpack.c.h.b16 %v603
    %v1319 = vunpack.c.l.b16 %v604
    %v1320 = vunpack.c.h.b16 %v604
    %v1321 = vunpack.c.l.b16 %v605
    %v1322 = vunpack.c.h.b16 %v605
    %v1323 = vunpack.c.l.b16 %v606
    %v1324 = vunpack.c.h.b16 %v606
    %v1325 = vunpack.c.l.b16 %v607
    %v1326 = vunpack.c.h.b16 %v607
    %v1327 = vunpack.c.l.b16 %v608
    %v1328 = vunpack.c.h.b16 %v608
    %v1329 = vunpack.c.l.b16 %v609
    %v1330 = vunpack.c.h.b16 %v609
    %v1331 = vunpack.c.l.b16 %v610
    %v1332 = vunpack.c.h.b16 %v610
    %v1333 = vunpack.c.l.b16 %v611
    %v1334 = vunpack.c.h.b16 %v611
    %v1335 = vunpack.c.l.b16 %v612
    %v1336 = vunpack.c.h.b16 %v612
    %v1337 = vunpack.c.l.b16 %v613
    %v1338 = vunpack.c.h.b16 %v613
    %v1339 = vunpack.c.l.b16 %v614
    %v1340 = vunpack.c.h.b16 %v614
    %v1341 = vunpack.c.l.b16 %v615
    %v1342 = vunpack.c.h.b16 %v615
    %v1343 = vunpack.c.l.b16 %v616
    %v1344 = vunpack.c.h.b16 %v616
    %v1345 = vunpack.c.l.b16 %v617
    %v1346 = vunpack.c.h.b16 %v617
    %v1347 = vunpack.c.l.b16 %v618
    %v1348 = vunpack.c.h.b16 %v618
    %v1349 = vunpack.c.l.b16 %v619
    %v1350 = vunpack.c.h.b16 %v619
    %v1351 = vunpack.c.l.b16 %v620
    %v1352 = vunpack.c.h.b16 %v620
    %v1353 = vunpack.c.l.b16 %v621
    %v1354 = vunpack.c.h.b16 %v621
    %v1355 = vunpack.c.l.b16 %v622
    %v1356 = vunpack.c.h.b16 %v622
    %v1357 = vunpack.c.l.b16 %v623
    %v1358 = vunpack.c.h.b16 %v623
    %v1359 = vunpack.c.l.b16 %v624
    %v1360 = vunpack.c.h.b16 %v624
    %v1361 = vunpack.c.l.b16 %v625
    %v1362 = vunpack.c.h.b16 %v625
    %v1363 = vunpack.c.l.b16 %v626
    %v1364 = vunpack.c.h.b16 %v626
    %v1365 = vunpack.c.l.b16 %v627
    %v1366 = vunpack.c.h.b16 %v627
    %v1367 = vunpack.c.l.b16 %v628
    %v1368 = vunpack.c.h.b16 %v628
    %v1369 = vunpack.c.l.b16 %v629
    %v1370 = vunpack.c.h.b16 %v629
    %v1371 = vunpack.c.l.b16 %v630
    %v1372 = vunpack.c.h.b16 %v630
    %v1373 = vunpack.c.l.b16 %v631
    %v1374 = vunpack.c.h.b16 %v631
    %v1375 = vunpack.c.l.b16 %v632
    %v1376 = vunpack.c.h.b16 %v632
    %v1377 = vunpack.c.l.b16 %v633
    %v1378 = vunpack.c.h.b16 %v633
    %v1379 = vunpack.c.l.b16 %v634
    %v1380 = vunpack.c.h.b16 %v634
    %v1381 = vunpack.c.l.b16 %v635
    %v1382 = vunpack.c.h.b16 %v635
    %v1383 = vunpack.c.l.b16 %v636
    %v1384 = vunpack.c.h.b16 %v636
    %v1385 = vunpack.c.l.b16 %v637
    %v1386 = vunpack.c.h.b16 %v637
    %v1387 = vunpack.c.l.b16 %v638
    %v1388 = vunpack.c.h.b16 %v638
    %v1389 = vunpack.c.l.b16 %v639
    %v1390 = vunpack.c.h.b16 %v639
    %v1391 = vunpack.c.l.b16 %v640
    %v1392 = vunpack.c.h.b16 %v640
    %v1393 = vunpack.c.l.b16 %v641
    %v1394 = vunpack.c.h.b16 %v641
    %v1395 = vunpack.c.l.b16 %v642
    %v1396 = vunpack.c.h.b16 %v642
    %v1397 = vunpack.c.l.b16 %v643
    %v1398 = vunpack.c.h.b16 %v643
    %v1399 = vunpack.c.l.b16 %v644
    %v1400 = vunpack.c.h.b16 %v644
    %v1401 = vunpack.c.l.b16 %v645
    %v1402 = vunpack.c.h.b16 %v645
    %v1403 = vunpack.c.l.b16 %v646
    %v1404 = vunpack.c.h.b16 %v646
    %v1405 = vunpack.c.l.b16 %v647
    %v1406 = vunpack.c.h.b16 %v647
    %v1407 = vunpack.c.l.b16 %v648
    %v1408 = vunpack.c.h.b16 %v648
    %v1409 = vunpack.c.l.b16 %v649
    %v1410 = vunpack.c.h.b16 %v649
    %v1411 = vunpack.c.l.b16 %v650
    %v1412 = vunpack.c.h.b16 %v650
    %v1413 = vunpack.c.l.b16 %v651
    %v1414 = vunpack.c.h.b16 %v651
    %v1415 = vunpack.c.l.b16 %v652
    %v1416 = vunpack.c.h.b16 %v652
    %v1417 = vunpack.c.l.b16 %v653
    %v1418 = vunpack.c.h.b16 %v653
    %v1419 = vunpack.c.l.b16 %v654
    %v1420 = vunpack.c.h.b16 %v654
    %v1421 = vunpack.c.l.b16 %v655
    %v1422 = vunpack.c.h.b16 %v655
    %v1423 = vunpack.c.l.b16 %v656
    %v1424 = vunpack.c.h.b16 %v656
    %v1425 = vunpack.c.l.b16 %v657
    %v1426 = vunpack.c.h.b16 %v657
    %v1427 = vunpack.c.l.b16 %v658
    %v1428 = vunpack.c.h.b16 %v658
    %v1429 = vunpack.c.l.b16 %v659
    %v1430 = vunpack.c.h.b16 %v659
    %v1431 = vunpack.c.l.b16 %v660
    %v1432 = vunpack.c.h.b16 %v660
    %v1433 = vunpack.c.l.b16 %v661
    %v1434 = vunpack.c.h.b16 %v661
    %v1435 = vunpack.c.l.b16 %v662
    %v1436 = vunpack.c.h.b16 %v662
    %v1437 = vunpack.c.l.b16 %v663
    %v1438 = vunpack.c.h.b16 %v663
    %v1439 = vunpack.c.l.b16 %v664
    %v1440 = vunpack.c.h.b16 %v664
    %v1441 = vunpack.c.l.b16 %v665
    %v1442 = vunpack.c.h.b16 %v665
    %v1443 = vunpack.c.l.b16 %v666
    %v1444 = vunpack.c.h.b16 %v666
    %v1445 = vunpack.c.l.b16 %v667
    %v1446 = vunpack.c.h.b16 %v667
    %v1447 = vunpack.c.l.b16 %v668
    %v1448 = vunpack.c.h.b16 %v668
    %v1449 = vunpack.c.l.b16 %v669
    %v1450 = vunpack.c.h.b16 %v669
    %v1451 = vunpack.c.l.b16 %v670
    %v1452 = vunpack.c.h.b16 %v670
    %v1453 = vunpack.c.l.b16 %v671
    %v1454 = vunpack.c.h.b16 %v671
    %v1455 = vunpack.c.l.b16 %v672
    %v1456 = vunpack.c.h.b16 %v672
    %v1457 = vunpack.c.l.b16 %v673
    %v1458 = vunpack.c.h.b16 %v673
    %v1459 = vunpack.c.l.b16 %v674
    %v1460 = vunpack.c.h.b16 %v674
    %v1461 = vunpack.c.l.b16 %v675
    %v1462 = vunpack.c.h.b16 %v675
    %v1463 = vunpack.c.l.b16 %v676
    %v1464 = vunpack.c.h.b16 %v676
    %v1465 = vunpack.c.l.b16 %v677
    %v1466 = vunpack.c.h.b16 %v677
    %v1467 = vunpack.c.l.b16 %v678
    %v1468 = vunpack.c.h.b16 %v678
    %v1469 = vunpack.c.l.b16 %v679
    %v1470 = vunpack.c.h.b16 %v679
    %v1471 = vunpack.c.l.b16 %v680
    %v1472 = vunpack.c.h.b16 %v680
    %v1473 = vunpack.c.l.b16 %v681
    %v1474 = vunpack.c.h.b16 %v681
    %v1475 = vunpack.c.l.b16 %v682
    %v1476 = vunpack.c.h.b16 %v682
    %v1477 = vunpack.c.l.b16 %v683
    %v1478 = vunpack.c.h.b16 %v683
    %v1479 = vunpack.c.l.b16 %v684
    %v1480 = vunpack.c.h.b16 %v684
    %v1481 = vunpack.c.l.b16 %v685
    %v1482 = vunpack.c.h.b16 %v685
    %v1483 = vunpack.c.l.b16 %v686
    %v1484 = vunpack.c.h.b16 %v686
    %v1485 = vunpack.c.l.b16 %v687
    %v1486 = vunpack.c.h.b16 %v687
    %v1487 = vunpack.c.l.b16 %v688
    %v1488 = vunpack.c.h.b16 %v688
    %v1489 = vunpack.c.l.b16 %v689
    %v1490 = vunpack.c.h.b16 %v689
    %v1491 = vunpack.c.l.b16 %v690
    %v1492 = vunpack.c.h.b16 %v690
    %v1493 = vunpack.c.l.b16 %v691
    %v1494 = vunpack.c.h.b16 %v691
    %v1495 = vunpack.c.l.b16 %v692
    %v1496 = vunpack.c.h.b16 %v692
    %v1497 = vunpack.c.l.b16 %v693
    %v1498 = vunpack.c.h.b16 %v693
    %v1499 = vunpack.c.l.b16 %v694
    %v1500 = vunpack.c.h.b16 %v694
    %v1501 = vunpack.c.l.b16 %v695
    %v1502 = vunpack.c.h.b16 %v695
    %v1503 = vunpack.c.l.b16 %v696
    %v1504 = vunpack.c.h.b16 %v696
    %v1505 = vunpack.c.l.b16 %v697
    %v1506 = vunpack.c.h.b16 %v697
    %v1507 = vunpack.c.l.b16 %v698
    %v1508 = vunpack.c.h.b16 %v698
    %v1509 = vunpack.c.l.b16 %v699
    %v1510 = vunpack.c.h.b16 %v699
    %v1511 = vunpack.c.l.b16 %v700
    %v1512 = vunpack.c.h.b16 %v700
    %v1513 = vunpack.c.l.b16 %v701
    %v1514 = vunpack.c.h.b16 %v701
    %v1515 = vunpack.c.l.b16 %v702
    %v1516 = vunpack.c.h.b16 %v702
    %v1517 = vunpack.c.l.b16 %v703
    %v1518 = vunpack.c.h.b16 %v703
    %v1519 = vunpack.c.l.b16 %v704
    %v1520 = vunpack.c.h.b16 %v704
    %v1521 = vunpack.c.l.b16 %v705
    %v1522 = vunpack.c.h.b16 %v705
    %v1523 = vunpack.c.l.b16 %v706
    %v1524 = vunpack.c.h.b16 %v706
    %v1525 = vunpack.c.l.b16 %v707
    %v1526 = vunpack.c.h.b16 %v707
    %v1527 = vunpack.c.l.b16 %v708
    %v1528 = vunpack.c.h.b16 %v708
    %v1529 = vunpack.c.l.b16 %v709
    %v1530 = vunpack.c.h.b16 %v709
    %v1531 = vunpack.c.l.b16 %v710
    %v1532 = vunpack.c.h.b16 %v710
    %v1533 = vunpack.c.l.b16 %v711
    %v1534 = vunpack.c.h.b16 %v711
    %v1535 = vunpack.c.l.b16 %v712
    %v1536 = vunpack.c.h.b16 %v712
    %v1537 = vunpack.c.l.b16 %v713
    %v1538 = vunpack.c.h.b16 %v713
    %v1539 = vunpack.c.l.b16 %v714
    %v1540 = vunpack.c.h.b16 %v714
    %v1541 = vunpack.c.l.b16 %v715
    %v1542 = vunpack.c.h.b16 %v715
    %v1543 = vunpack.c.l.b16 %v716
    %v1544 = vunpack.c.h.b16 %v716
    %v1545 = vunpack.c.l.b16 %v717
    %v1546 = vunpack.c.h.b16 %v717
    %v1547 = vunpack.c.l.b16 %v718
    %v1548 = vunpack.c.h.b16 %v718
    %v1549 = vunpack.c.l.b16 %v719
    %v1550 = vunpack.c.h.b16 %v719
    %v1551 = vunpack.c.l.b16 %v720
    %v1552 = vunpack.c.h.b16 %v720
    %v1553 = vunpack.c.l.b16 %v721
    %v1554 = vunpack.c.h.b16 %v721
    %v1555 = vunpack.c.l.b16 %v722
    %v1556 = vunpack.c.h.b16 %v722
    %v1557 = vunpack.c.l.b16 %v723
    %v1558 = vunpack.c.h.b16 %v723
    %v1559 = vunpack.c.l.b16 %v724
    %v1560 = vunpack.c.h.b16 %v724
    %v1561 = vunpack.c.l.b16 %v725
    %v1562 = vunpack.c.h.b16 %v725
    %v1563 = vunpack.c.l.b16 %v726
    %v1564 = vunpack.c.h.b16 %v726
    %v1565 = vunpack.c.l.b16 %v727
    %v1566 = vunpack.c.h.b16 %v727
    %v1567 = vunpack.c.l.b16 %v728
    %v1568 = vunpack.c.h.b16 %v728
    %v1569 = vunpack.c.l.b16 %v729
    %v1570 = vunpack.c.h.b16 %v729
    %v1571 = vunpack.c.l.b16 %v730
    %v1572 = vunpack.c.h.b16 %v730
    %v1573 = vunpack.c.l.b16 %v731
    %v1574 = vunpack.c.h.b16 %v731
    %v1575 = vunpack.c.l.b16 %v732
    %v1576 = vunpack.c.h.b16 %v732
    %v1577 = vunpack.c.l.b16 %v733
    %v1578 = vunpack.c.h.b16 %v733
    %v1579 = vunpack.c.l.b16 %v734
    %v1580 = vunpack.c.h.b16 %v734
    %v1581 = vunpack.c.l.b16 %v735
    %v1582 = vunpack.c.h.b16 %v735
    %v1583 = vunpack.c.l.b16 %v736
    %v1584 = vunpack.c.h.b16 %v736
    %v1585 = vunpack.c.l.b16 %v737
    %v1586 = vunpack.c.h.b16 %v737
    %v1587 = vunpack.c.l.b16 %v738
    %v1588 = vunpack.c.h.b16 %v738
    %v1589 = vunpack.c.l.b16 %v739
    %v1590 = vunpack.c.h.b16 %v739
    %v1591 = vunpack.c.l.b16 %v740
    %v1592 = vunpack.c.h.b16 %v740
    %v1593 = vunpack.c.l.b16 %v741
    %v1594 = vunpack.c.h.b16 %v741
    %v1595 = vunpack.c.l.b16 %v742
    %v1596 = vunpack.c.h.b16 %v742
    %v1597 = vunpack.c.l.b16 %v743
    %v1598 = vunpack.c.h.b16 %v743
    %v1599 = vunpack.c.l.b16 %v744
    %v1600 = vunpack.c.h.b16 %v744
    %v1601 = vunpack.c.l.b16 %v745
    %v1602 = vunpack.c.h.b16 %v745
    %v1603 = vunpack.c.l.b16 %v746
    %v1604 = vunpack.c.h.b16 %v746
    %v1605 = vunpack.c.l.b16 %v747
    %v1606 = vunpack.c.h.b16 %v747
    %v1607 = vunpack.c.l.b16 %v748
    %v1608 = vunpack.c.h.b16 %v748
    %v1609 = vunpack.c.l.b16 %v749
    %v1610 = vunpack.c.h.b16 %v749
    %v1611 = vunpack.c.l.b16 %v750
    %v1612 = vunpack.c.h.b16 %v750
    %v1613 = vunpack.c.l.b16 %v751
    %v1614 = vunpack.c.h.b16 %v751
    %v1615 = vunpack.c.l.b16 %v752
    %v1616 = vunpack.c.h.b16 %v752
    %v1617 = vunpack.c.l.b16 %v753
    %v1618 = vunpack.c.h.b16 %v753
    %v1619 = vunpack.c.l.b16 %v754
    %v1620 = vunpack.c.h.b16 %v754
    %v1621 = vunpack.c.l.b16 %v755
    %v1622 = vunpack.c.h.b16 %v755
    %v1623 = vunpack.c.l.b16 %v756
    %v1624 = vunpack.c.h.b16 %v756
    %v1625 = vunpack.c.l.b16 %v757
    %v1626 = vunpack.c.h.b16 %v757
    %v1627 = vunpack.c.l.b16 %v758
    %v1628 = vunpack.c.h.b16 %v758
    %v1629 = vunpack.c.l.b16 %v759
    %v1630 = vunpack.c.h.b16 %v759
    %v1631 = vunpack.c.l.b16 %v760
    %v1632 = vunpack.c.h.b16 %v760
    %v1633 = vunpack.c.l.b16 %v761
    %v1634 = vunpack.c.h.b16 %v761
    %v1635 = vunpack.c.l.b16 %v762
    %v1636 = vunpack.c.h.b16 %v762
    %v1637 = vunpack.c.l.b16 %v763
    %v1638 = vunpack.c.h.b16 %v763
    %v1639 = vunpack.c.l.b16 %v764
    %v1640 = vunpack.c.h.b16 %v764
    %v1641 = vunpack.c.l.b16 %v765
    %v1642 = vunpack.c.h.b16 %v765
    %v1643 = vunpack.c.l.b16 %v766
    %v1644 = vunpack.c.h.b16 %v766
    %v1645 = vunpack.c.l.b16 %v767
    %v1646 = vunpack.c.h.b16 %v767
    %v1647 = vunpack.c.l.b16 %v768
    %v1648 = vunpack.c.h.b16 %v768
    %v1649 = vunpack.c.l.b16 %v769
    %v1650 = vunpack.c.h.b16 %v769
    %v1651 = vunpack.c.l.b16 %v770
    %v1652 = vunpack.c.h.b16 %v770
    %v1653 = vunpack.c.l.b16 %v771
    %v1654 = vunpack.c.h.b16 %v771
    %v1655 = vunpack.c.l.b16 %v772
    %v1656 = vunpack.c.h.b16 %v772
    %v1657 = vunpack.c.l.b16 %v773
    %v1658 = vunpack.c.h.b16 %v773
    %v1659 = vunpack.c.l.b16 %v774
    %v1660 = vunpack.c.h.b16 %v774
    %v1661 = vunpack.c.l.b16 %v775
    %v1662 = vunpack.c.h.b16 %v775
    %v1663 = vunpack.c.l.b16 %v776
    %v1664 = vunpack.c.h.b16 %v776
    %v1665 = vunpack.c.l.b16 %v777
    %v1666 = vunpack.c.h.b16 %v777
    %v1667 = vunpack.c.l.b16 %v778
    %v1668 = vunpack.c.h.b16 %v778
    %v1669 = vunpack.c.l.b16 %v779
    %v1670 = vunpack.c.h.b16 %v779
    %v1671 = vunpack.c.l.b16 %v780
    %v1672 = vunpack.c.h.b16 %v780
    %v1673 = vunpack.c.l.b16 %v781
    %v1674 = vunpack.c.h.b16 %v781
    %v1675 = vunpack.c.l.b16 %v782
    %v1676 = vunpack.c.h.b16 %v782
    %v1677 = vunpack.c.l.b16 %v783
    %v1678 = vunpack.c.h.b16 %v783
    %v1679 = vunpack.c.l.b16 %v784
    %v1680 = vunpack.c.h.b16 %v784
    %v1681 = vunpack.c.l.b16 %v785
    %v1682 = vunpack.c.h.b16 %v785
    %v1683 = vunpack.c.l.b16 %v786
    %v1684 = vunpack.c.h.b16 %v786
    %v1685 = vunpack.c.l.b16 %v787
    %v1686 = vunpack.c.h.b16 %v787
    %v1687 = vunpack.c.l.b16 %v788
    %v1688 = vunpack.c.h.b16 %v788
    %v1689 = vunpack.c.l.b16 %v789
    %v1690 = vunpack.c.h.b16 %v789
    %v1691 = vunpack.c.l.b16 %v790
    %v1692 = vunpack.c.h.b16 %v790
    %v1693 = vunpack.c.l.b16 %v791
    %v1694 = vunpack.c.h.b16 %v791
    %v1695 = vunpack.c.l.b16 %v792
    %v1696 = vunpack.c.h.b16 %v792
    %v1697 = vunpack.c.l.b16 %v793
    %v1698 = vunpack.c.h.b16 %v793
    %v1699 = vunpack.c.l.b16 %v794
    %v1700 = vunpack.c.h.b16 %v794
    %v1701 = vunpack.c.l.b16 %v795
    %v1702 = vunpack.c.h.b16 %v795
    %v1703 = vunpack.c.l.b16 %v796
    %v1704 = vunpack.c.h.b16 %v796
    %v1705 = vunpack.c.l.b16 %v797
    %v1706 = vunpack.c.h.b16 %v797
    %v1707 = vunpack.c.l.b16 %v798
    %v1708 = vunpack.c.h.b16 %v798
    %v1709 = vunpack.c.l.b16 %v799
    %v1710 = vunpack.c.h.b16 %v799
    %v1711 = vunpack.c.l.b16 %v800
    %v1712 = vunpack.c.h.b16 %v800
    %v1713 = vunpack.c.l.b16 %v801
    %v1714 = vunpack.c.h.b16 %v801
    %v1715 = vunpack.c.l.b16 %v802
    %v1716 = vunpack.c.h.b16 %v802
    %v1717 = vunpack.c.l.b16 %v803
    %v1718 = vunpack.c.h.b16 %v803
    %v1719 = vunpack.c.l.b16 %v804
    %v1720 = vunpack.c.h.b16 %v804
    %v1721 = vunpack.c.l.b16 %v805
    %v1722 = vunpack.c.h.b16 %v805
    %v1723 = vunpack.c.l.b16 %v806
    %v1724 = vunpack.c.h.b16 %v806
    %v1725 = vunpack.c.l.b16 %v807
    %v1726 = vunpack.c.h.b16 %v807
    %v1727 = vunpack.c.l.b16 %v808
    %v1728 = vunpack.c.h.b16 %v808
    %v1729 = vunpack.c.l.b16 %v809
    %v1730 = vunpack.c.h.b16 %v809
    %v1731 = vunpack.c.l.b16 %v810
    %v1732 = vunpack.c.h.b16 %v810
    %v1733 = vunpack.c.l.b16 %v811
    %v1734 = vunpack.c.h.b16 %v811
    %v1735 = vunpack.c.l.b16 %v812
    %v1736 = vunpack.c.h.b16 %v812
    %v1737 = vunpack.c.l.b16 %v813
    %v1738 = vunpack.c.h.b16 %v813
    %v1739 = vunpack.c.l.b16 %v814
    %v1740 = vunpack.c.h.b16 %v814
    %v1741 = vunpack.c.l.b16 %v815
    %v1742 = vunpack.c.h.b16 %v815
    %v1743 = vunpack.c.l.b16 %v816
    %v1744 = vunpack.c.h.b16 %v816
    %v1745 = vunpack.c.l.b16 %v817
    %v1746 = vunpack.c.h.b16 %v817
    %v1747 = vunpack.c.l.b16 %v818
    %v1748 = vunpack.c.h.b16 %v818
    %v1749 = vunpack.c.l.b16 %v819
    %v1750 = vunpack.c.h.b16 %v819
    %v1751 = vunpack.c.l.b16 %v820
    %v1752 = vunpack.c.h.b16 %v820
    %v1753 = vunpack.c.l.b16 %v821
    %v1754 = vunpack.c.h.b16 %v821
    %v1755 = vunpack.c.l.b16 %v822
    %v1756 = vunpack.c.h.b16 %v822
    %v1757 = vunpack.c.l.b16 %v823
    %v1758 = vunpack.c.h.b16 %v823
    %v1759 = vunpack.c.l.b16 %v824
    %v1760 = vunpack.c.h.b16 %v824
    %v1761 = vunpack.c.l.b16 %v825
    %v1762 = vunpack.c.h.b16 %v825
    %v1763 = vunpack.c.l.b16 %v826
    %v1764 = vunpack.c.h.b16 %v826
    %v1765 = vunpack.c.l.b16 %v827
    %v1766 = vunpack.c.h.b16 %v827
    %v1767 = vunpack.c.l.b16 %v828
    %v1768 = vunpack.c.h.b16 %v828
    %v1769 = vunpack.c.l.b16 %v829
    %v1770 = vunpack.c.h.b16 %v829
    %v1771 = vunpack.c.l.b16 %v830
    %v1772 = vunpack.c.h.b16 %v830
    %v1773 = vunpack.c.l.b16 %v831
    %v1774 = vunpack.c.h.b16 %v831
    %v1775 = vunpack.c.l.b16 %v832
    %v1776 = vunpack.c.h.b16 %v832
    %v1777 = vunpack.c.l.b16 %v833
    %v1778 = vunpack.c.h.b16 %v833
    %v1779 = vunpack.c.l.b16 %v834
    %v1780 = vunpack.c.h.b16 %v834
    %v1781 = vunpack.c.l.b16 %v835
    %v1782 = vunpack.c.h.b16 %v835
    %v1783 = vunpack.c.l.b16 %v836
    %v1784 = vunpack.c.h.b16 %v836
    %v1785 = vunpack.c.l.b16 %v837
    %v1786 = vunpack.c.h.b16 %v837
    %v1787 = vunpack.c.l.b16 %v838
    %v1788 = vunpack.c.h.b16 %v838
    %v1789 = vunpack.c.l.b16 %v839
    %v1790 = vunpack.c.h.b16 %v839
    %v1791 = vunpack.c.l.b16 %v840
    %v1792 = vunpack.c.h.b16 %v840
    %v1793 = vunpack.c.l.b16 %v841
    %v1794 = vunpack.c.h.b16 %v841
    %v1795 = vunpack.c.l.b16 %v842
    %v1796 = vunpack.c.h.b16 %v842
    %v1797 = vunpack.c.l.b16 %v843
    %v1798 = vunpack.c.h.b16 %v843
    %v1799 = vunpack.c.l.b16 %v844
    %v1800 = vunpack.c.h.b16 %v844
    %v1801 = vunpack.c.l.b16 %v845
    %v1802 = vunpack.c.h.b16 %v845
    %v1803 = vunpack.c.l.b16 %v846
    %v1804 = vunpack.c.h.b16 %v846
    %v1805 = vunpack.c.l.b16 %v847
    %v1806 = vunpack.c.h.b16 %v847
    %v1807 = vunpack.c.l.b16 %v848
    %v1808 = vunpack.c.h.b16 %v848
    %v1809 = vunpack.c.l.b16 %v849
    %v1810 = vunpack.c.h.b16 %v849
    %v1811 = vunpack.c.l.b16 %v850
    %v1812 = vunpack.c.h.b16 %v850
    %v1813 = vunpack.c.l.b16 %v851
    %v1814 = vunpack.c.h.b16 %v851
    %v1815 = vunpack.c.l.b16 %v852
    %v1816 = vunpack.c.h.b16 %v852
    %v1817 = vunpack.c.l.b16 %v853
    %v1818 = vunpack.c.h.b16 %v853
    %v1819 = vunpack.c.l.b16 %v854
    %v1820 = vunpack.c.h.b16 %v854
    %v1821 = vunpack.c.l.b16 %v855
    %v1822 = vunpack.c.h.b16 %v855
    %v1823 = vunpack.c.l.b16 %v856
    %v1824 = vunpack.c.h.b16 %v856
    %v1825 = vunpack.c.l.b16 %v857
    %v1826 = vunpack.c.h.b16 %v857
    %v1827 = vunpack.c.l.b16 %v858
    %v1828 = vunpack.c.h.b16 %v858
    %v1829 = vunpack.c.l.b16 %v859
    %v1830 = vunpack.c.h.b16 %v859
    %v1831 = vunpack.c.l.b16 %v860
    %v1832 = vunpack.c.h.b16 %v860
    %v1833 = vunpack.c.l.b16 %v861
    %v1834 = vunpack.c.h.b16 %v861
    %v1835 = vunpack.c.l.b16 %v862
    %v1836 = vunpack.c.h.b16 %v862
    %v1837 = vunpack.c.l.b16 %v863
    %v1838 = vunpack.c.h.b16 %v863
    %v1839 = vunpack.c.l.b16 %v864
    %v1840 = vunpack.c.h.b16 %v864
    %v1841 = vunpack.c.l.b16 %v865
    %v1842 = vunpack.c.h.b16 %v865
    %v1843 = vunpack.c.l.b16 %v866
    %v1844 = vunpack.c.h.b16 %v866
    %v1845 = vunpack.c.l.b16 %v867
    %v1846 = vunpack.c.h.b16 %v867
    %v1847 = vunpack.c.l.b16 %v868
    %v1848 = vunpack.c.h.b16 %v868
    %v1849 = vunpack.c.l.b16 %v869
    %v1850 = vunpack.c.h.b16 %v869
    %v1851 = vunpack.c.l.b16 %v870
    %v1852 = vunpack.c.h.b16 %v870
    %v1853 = vpack.c.b16 %v1217, %v1213
    %v1854 = vpack.c.b16 %v1218, %v1214
    %v1855 = vpack.c.b16 %v1219, %v1215
    %v1856 = vpack.c.b16 %v1220, %v1216
    %v1857 = vpack.c.b16 %v1225, %v1221
    %v1858 = vpack.c.b16 %v1226, %v1222
    %v1859 = vpack.c.b16 %v1227, %v1223
    %v1860 = vpack.c.b16 %v1228, %v1224
    %v1861 = vpack.c.b16 %v1233, %v1229
    %v1862 = vpack.c.b16 %v1234, %v1230
    %v1863 = vpack.c.b16 %v1235, %v1231
    %v1864 = vpack.c.b16 %v1236, %v1232
    %v1865 = vpack.c.b16 %v1241, %v1237
    %v1866 = vpack.c.b16 %v1242, %v1238
    %v1867 = vpack.c.b16 %v1243, %v1239
    %v1868 = vpack.c.b16 %v1244, %v1240
    %v1869 = vpack.c.b16 %v1249, %v1245
    %v1870 = vpack.c.b16 %v1250, %v1246
    %v1871 = vpack.c.b16 %v1251, %v1247
    %v1872 = vpack.c.b16 %v1252, %v1248
    %v1873 = vpack.c.b16 %v1257, %v1253
    %v1874 = vpack.c.b16 %v1258, %v1254
    %v1875 = vpack.c.b16 %v1259, %v1255
    %v1876 = vpack.c.b16 %v1260, %v1256
    %v1877 = vpack.c.b16 %v1265, %v1261
    %v1878 = vpack.c.b16 %v1266, %v1262
    %v1879 = vpack.c.b16 %v1267, %v1263
    %v1880 = vpack.c.b16 %v1268, %v1264
    %v1881 = vpack.c.b16 %v1273, %v1269
    %v1882 = vpack.c.b16 %v1274, %v1270
    %v1883 = vpack.c.b16 %v1275, %v1271
    %v1884 = vpack.c.b16 %v1276, %v1272
    %v1885 = vpack.c.b16 %v1281, %v1277
    %v1886 = vpack.c.b16 %v1282, %v1278
    %v1887 = vpack.c.b16 %v1283, %v1279
    %v1888 = vpack.c.b16 %v1284, %v1280
    %v1889 = vpack.c.b16 %v1289, %v1285
    %v1890 = vpack.c.b16 %v1290, %v1286
    %v1891 = vpack.c.b16 %v1291, %v1287
    %v1892 = vpack.c.b16 %v1292, %v1288
    %v1893 = vpack.c.b16 %v1297, %v1293
    %v1894 = vpack.c.b16 %v1298, %v1294
    %v1895 = vpack.c.b16 %v1299, %v1295
    %v1896 = vpack.c.b16 %v1300, %v1296
    %v1897 = vpack.c.b16 %v1305, %v1301
    %v1898 = vpack.c.b16 %v1306, %v1302
    %v1899 = vpack.c.b16 %v1307, %v1303
    %v1900 = vpack.c.b16 %v1308, %v1304
    %v1901 = vpack.c.b16 %v1313, %v1309
    %v1902 = vpack.c.b16 %v1314, %v1310
    %v1903 = vpack.c.b16 %v1315, %v1311
    %v1904 = vpack.c.b16 %v1316, %v1312
    %v1905 = vpack.c.b16 %v1321, %v1317
    %v1906 = vpack.c.b16 %v1322, %v1318
    %v1907 = vpack.c.b16 %v1323, %v1319
    %v1908 = vpack.c.b16 %v1324, %v1320
    %v1909 = vpack.c.b16 %v1329, %v1325
    %v1910 = vpack.c.b16 %v1330, %v1326
    %v1911 = vpack.c.b16 %v1331, %v1327
    %v1912 = vpack.c.b16 %v1332, %v1328
    %v1913 = vpack.c.b16 %v1337, %v1333
    %v1914 = vpack.c.b16 %v1338, %v1334
    %v1915 = vpack.c.b16 %v1339, %v1335
    %v1916 = vpack.c.b16 %v1340, %v1336
    %v1917 = vpack.c.b16 %v1345, %v1341
    %v1918 = vpack.c.b16 %v1346, %v1342
    %v1919 = vpack.c.b16 %v1347, %v1343
    %v1920 = vpack.c.b16 %v1348, %v1344
    %v1921 = vpack.c.b16 %v1353, %v1349
    %v1922 = vpack.c.b16 %v1354, %v1350
    %v1923 = vpack.c.b16 %v1355, %v1351
    %v1924 = vpack.c.b16 %v1356, %v1352
    %v1925 = vpack.c.b16 %v1361, %v1357
    %v1926 = vpack.c.b16 %v1362, %v1358
    %v1927 = vpack.c.b16 %v1363, %v1359
    %v1928 = vpack.c.b16 %v1364, %v1360
    %v1929 = vpack.c.b16 %v1369, %v1365
    %v1930 = vpack.c.b16 %v1370, %v1366
    %v1931 = vpack.c.b16 %v1371, %v1367
    %v1932 = vpack.c.b16 %v1372, %v1368
    %v1933 = vpack.c.b16 %v1377, %v1373
    %v1934 = vpack.c.b16 %v1378, %v1374
    %v1935 = vpack.c.b16 %v1379, %v1375
    %v1936 = vpack.c.b16 %v1380, %v1376
    %v1937 = vpack.c.b16 %v1385, %v1381
    %v1938 = vpack.c.b16 %v1386, %v1382
    %v1939 = vpack.c.b16 %v1387, %v1383
    %v1940 = vpack.c.b16 %v1388, %v1384
    %v1941 = vpack.c.b16 %v1393, %v1389
    %v1942 = vpack.c.b16 %v1394, %v1390
    %v1943 = vpack.c.b16 %v1395, %v1391
    %v1944 = vpack.c.b16 %v1396, %v1392
    %v1945 = vpack.c.b16 %v1401, %v1397
    %v1946 = vpack.c.b16 %v1402, %v1398
    %v1947 = vpack.c.b16 %v1403, %v1399
    %v1948 = vpack.c.b16 %v1404, %v1400
    %v1949 = vpack.c.b16 %v1409, %v1405
    %v1950 = vpack.c.b16 %v1410, %v1406
    %v1951 = vpack.c.b16 %v1411, %v1407
    %v1952 = vpack.c.b16 %v1412, %v1408
    %v1953 = vpack.c.b16 %v1417, %v1413
    %v1954 = vpack.c.b16 %v1418, %v1414
    %v1955 = vpack.c.b16 %v1419, %v1415
    %v1956 = vpack.c.b16 %v1420, %v1416
    %v1957 = vpack.c.b16 %v1425, %v1421
    %v1958 = vpack.c.b16 %v1426, %v1422
    %v1959 = vpack.c.b16 %v1427, %v1423
    %v1960 = vpack.c.b16 %v1428, %v1424
    %v1961 = vpack.c.b16 %v1433, %v1429
    %v1962 = vpack.c.b16 %v1434, %v1430
    %v1963 = vpack.c.b16 %v1435, %v1431
    %v1964 = vpack.c.b16 %v1436, %v1432
    %v1965 = vpack.c.b16 %v1441, %v1437
    %v1966 = vpack.c.b16 %v1442, %v1438
    %v1967 = vpack.c.b16 %v1443, %v1439
    %v1968 = vpack.c.b16 %v1444, %v1440
    %v1969 = vpack.c.b16 %v1449, %v1445
    %v1970 = vpack.c.b16 %v1450, %v1446
    %v1971 = vpack.c.b16 %v1451, %v1447
    %v1972 = vpack.c.b16 %v1452, %v1448
    %v1973 = vpack.c.b16 %v1457, %v1453
    %v1974 = vpack.c.b16 %v1458, %v1454
    %v1975 = vpack.c.b16 %v1459, %v1455
    %v1976 = vpack.c.b16 %v1460, %v1456
    %v1977 = vpack.c.b16 %v1465, %v1461
    %v1978 = vpack.c.b16 %v1466, %v1462
    %v1979 = vpack.c.b16 %v1467, %v1463
    %v1980 = vpack.c.b16 %v1468, %v1464
    %v1981 = vpack.c.b16 %v1473, %v1469
    %v1982 = vpack.c.b16 %v1474, %v1470
    %v1983 = vpack.c.b16 %v1475, %v1471
    %v1984 = vpack.c.b16 %v1476, %v1472
    %v1985 = vpack.c.b16 %v1481, %v1477
    %v1986 = vpack.c.b16 %v1482, %v1478
    %v1987 = vpack.c.b16 %v1483, %v1479
    %v1988 = vpack.c.b16 %v1484, %v1480
    %v1989 = vpack.c.b16 %v1489, %v1485
    %v1990 = vpack.c.b16 %v1490, %v1486
    %v1991 = vpack.c.b16 %v1491, %v1487
    %v1992 = vpack.c.b16 %v1492, %v1488
    %v1993 = vpack.c.b16 %v1497, %v1493
    %v1994 = vpack.c.b16 %v1498, %v1494
    %v1995 = vpack.c.b16 %v1499, %v1495
    %v1996 = vpack.c.b16 %v1500, %v1496
    %v1997 = vpack.c.b16 %v1505, %v1501
    %v1998 = vpack.c.b16 %v1506, %v1502
    %v1999 = vpack.c.b16 %v1507, %v1503
    %v2000 = vpack.c.b16 %v1508, %v1504
    %v2001 = vpack.c.b16 %v1513, %v1509
    %v2002 = vpack.c.b16 %v1514, %v1510
    %v2003 = vpack.c.b16 %v1515, %v1511
    %v2004 = vpack.c.b16 %v1516, %v1512
    %v2005 = vpack.c.b16 %v1521, %v1517
    %v2006 = vpack.c.b16 %v1522, %v1518
    %v2007 = vpack.c.b16 %v1523, %v1519
    %v2008 = vpack.c.b16 %v1524, %v1520
    %v2009 = vpack.c.b16 %v1529, %v1525
    %v2010 = vpack.c.b16 %v1530, %v1526
    %v2011 = vpack.c.b16 %v1531, %v1527
    %v2012 = vpack.c.b16 %v1532, %v1528
    %v2013 = vpack.c.b16 %v1537, %v1533
    %v2014 = vpack.c.b16 %v1538, %v1534
    %v2015 = vpack.c.b16 %v1539, %v1535
    %v2016 = vpack.c.b16 %v1540, %v1536
    %v2017 = vpack.c.b16 %v1545, %v1541
    %v2018 = vpack.c.b16 %v1546, %v1542
    %v2019 = vpack.c.b16 %v1547, %v1543
    %v2020 = vpack.c.b16 %v1548, %v1544
    %v2021 = vpack.c.b16 %v1553, %v1549
    %v2022 = vpack.c.b16 %v1554, %v1550
    %v2023 = vpack.c.b16 %v1555, %v1551
    %v2024 = vpack.c.b16 %v1556, %v1552
    %v2025 = vpack.c.b16 %v1561, %v1557
    %v2026 = vpack.c.b16 %v1562, %v1558
    %v2027 = vpack.c.b16 %v1563, %v1559
    %v2028 = vpack.c.b16 %v1564, %v1560
    %v2029 = vpack.c.b16 %v1569, %v1565
    %v2030 = vpack.c.b16 %v1570, %v1566
    %v2031 = vpack.c.b16 %v1571, %v1567
    %v2032 = vpack.c.b16 %v1572, %v1568
    %v2033 = vpack.c.b16 %v1577, %v1573
    %v2034 = vpack.c.b16 %v1578, %v1574
    %v2035 = vpack.c.b16 %v1579, %v1575
    %v2036 = vpack.c.b16 %v1580, %v1576
    %v2037 = vpack.c.b16 %v1585, %v1581
    %v2038 = vpack.c.b16 %v1586, %v1582
    %v2039 = vpack.c.b16 %v1587, %v1583
    %v2040 = vpack.c.b16 %v1588, %v1584
    %v2041 = vpack.c.b16 %v1593, %v1589
    %v2042 = vpack.c.b16 %v1594, %v1590
    %v2043 = vpack.c.b16 %v1595, %v1591
    %v2044 = vpack.c.b16 %v1596, %v1592
    %v2045 = vpack.c.b16 %v1601, %v1597
    %v2046 = vpack.c.b16 %v1602, %v1598
    %v2047 = vpack.c.b16 %v1603, %v1599
    %v2048 = vpack.c.b16 %v1604, %v1600
    %v2049 = vpack.c.b16 %v1609, %v1605
    %v2050 = vpack.c.b16 %v1610, %v1606
    %v2051 = vpack.c.b16 %v1611, %v1607
    %v2052 = vpack.c.b16 %v1612, %v1608
    %v2053 = vpack.c.b16 %v1617, %v1613
    %v2054 = vpack.c.b16 %v1618, %v1614
    %v2055 = vpack.c.b16 %v1619, %v1615
    %v2056 = vpack.c.b16 %v1620, %v1616
    %v2057 = vpack.c.b16 %v1625, %v1621
    %v2058 = vpack.c.b16 %v1626, %v1622
    %v2059 = vpack.c.b16 %v1627, %v1623
    %v2060 = vpack.c.b16 %v1628, %v1624
    %v2061 = vpack.c.b16 %v1633, %v1629
    %v2062 = vpack.c.b16 %v1634, %v1630
    %v2063 = vpack.c.b16 %v1635, %v1631
    %v2064 = vpack.c.b16 %v1636, %v1632
    %v2065 = vpack.c.b16 %v1641, %v1637
    %v2066 = vpack.c.b16 %v1642, %v1638
    %v2067 = vpack.c.b16 %v1643, %v1639
    %v2068 = vpack.c.b16 %v1644, %v1640
    %v2069 = vpack.c.b16 %v1649, %v1645
    %v2070 = vpack.c.b16 %v1650, %v1646
    %v2071 = vpack.c.b16 %v1651, %v1647
    %v2072 = vpack.c.b16 %v1652, %v1648
    %v2073 = vpack.c.b16 %v1657, %v1653
    %v2074 = vpack.c.b16 %v1658, %v1654
    %v2075 = vpack.c.b16 %v1659, %v1655
    %v2076 = vpack.c.b16 %v1660, %v1656
    %v2077 = vpack.c.b16 %v1665, %v1661
    %v2078 = vpack.c.b16 %v1666, %v1662
    %v2079 = vpack.c.b16 %v1667, %v1663
    %v2080 = vpack.c.b16 %v1668, %v1664
    %v2081 = vpack.c.b16 %v1673, %v1669
    %v2082 = vpack.c.b16 %v1674, %v1670
    %v2083 = vpack.c.b16 %v1675, %v1671
    %v2084 = vpack.c.b16 %v1676, %v1672
    %v2085 = vpack.c.b16 %v1681, %v1677
    %v2086 = vpack.c.b16 %v1682, %v1678
    %v2087 = vpack.c.b16 %v1683, %v1679
    %v2088 = vpack.c.b16 %v1684, %v1680
    %v2089 = vpack.c.b16 %v1689, %v1685
    %v2090 = vpack.c.b16 %v1690, %v1686
    %v2091 = vpack.c.b16 %v1691, %v1687
    %v2092 = vpack.c.b16 %v1692, %v1688
    %v2093 = vpack.c.b16 %v1697, %v1693
    %v2094 = vpack.c.b16 %v1698, %v1694
    %v2095 = vpack.c.b16 %v1699, %v1695
    %v2096 = vpack.c.b16 %v1700, %v1696
    %v2097 = vpack.c.b16 %v1705, %v1701
    %v2098 = vpack.c.b16 %v1706, %v1702
    %v2099 = vpack.c.b16 %v1707, %v1703
    %v2100 = vpack.c.b16 %v1708, %v1704
    %v2101 = vpack.c.b16 %v1713, %v1709
    %v2102 = vpack.c.b16 %v1714, %v1710
    %v2103 = vpack.c.b16 %v1715, %v1711
    %v2104 = vpack.c.b16 %v1716, %v1712
    %v2105 = vpack.c.b16 %v1721, %v1717
    %v2106 = vpack.c.b16 %v1722, %v1718
    %v2107 = vpack.c.b16 %v1723, %v1719
    %v2108 = vpack.c.b16 %v1724, %v1720
    %v2109 = vpack.c.b16 %v1729, %v1725
    %v2110 = vpack.c.b16 %v1730, %v1726
    %v2111 = vpack.c.b16 %v1731, %v1727
    %v2112 = vpack.c.b16 %v1732, %v1728
    %v2113 = vpack.c.b16 %v1737, %v1733
    %v2114 = vpack.c.b16 %v1738, %v1734
    %v2115 = vpack.c.b16 %v1739, %v1735
    %v2116 = vpack.c.b16 %v1740, %v1736
    %v2117 = vpack.c.b16 %v1745, %v1741
    %v2118 = vpack.c.b16 %v1746, %v1742
    %v2119 = vpack.c.b16 %v1747, %v1743
    %v2120 = vpack.c.b16 %v1748, %v1744
    %v2121 = vpack.c.b16 %v1753, %v1749
    %v2122 = vpack.c.b16 %v1754, %v1750
    %v2123 = vpack.c.b16 %v1755, %v1751
    %v2124 = vpack.c.b16 %v1756, %v1752
    %v2125 = vpack.c.b16 %v1761, %v1757
    %v2126 = vpack.c.b16 %v1762, %v1758
    %v2127 = vpack.c.b16 %v1763, %v1759
    %v2128 = vpack.c.b16 %v1764, %v1760
    %v2129 = vpack.c.b16 %v1769, %v1765
    %v2130 = vpack.c.b16 %v1770, %v1766
    %v2131 = vpack.c.b16 %v1771, %v1767
    %v2132 = vpack.c.b16 %v1772, %v1768
    %v2133 = vpack.c.b16 %v1777, %v1773
    %v2134 = vpack.c.b16 %v1778, %v1774
    %v2135 = vpack.c.b16 %v1779, %v1775
    %v2136 = vpack.c.b16 %v1780, %v1776
    %v2137 = vpack.c.b16 %v1785, %v1781
    %v2138 = vpack.c.b16 %v1786, %v1782
    %v2139 = vpack.c.b16 %v1787, %v1783
    %v2140 = vpack.c.b16 %v1788, %v1784
    %v2141 = vpack.c.b16 %v1793, %v1789
    %v2142 = vpack.c.b16 %v1794, %v1790
    %v2143 = vpack.c.b16 %v1795, %v1791
    %v2144 = vpack.c.b16 %v1796, %v1792
    %v2145 = vpack.c.b16 %v1801, %v1797
    %v2146 = vpack.c.b16 %v1802, %v1798
    %v2147 = vpack.c.b16 %v1803, %v1799
    %v2148 = vpack.c.b16 %v1804, %v1800
    %v2149 = vpack.c.b16 %v1809, %v1805
    %v2150 = vpack.c.b16 %v1810, %v1806
    %v2151 = vpack.c.b16 %v1811, %v1807
    %v2152 = vpack.c.b16 %v1812, %v1808
    %v2153 = vpack.c.b16 %v1817, %v1813
    %v2154 = vpack.c.b16 %v1818, %v1814
    %v2155 = vpack.c.b16 %v1819, %v1815
    %v2156 = vpack.c.b16 %v1820, %v1816
    %v2157 = vpack.c.b16 %v1825, %v1821
    %v2158 = vpack.c.b16 %v1826, %v1822
    %v2159 = vpack.c.b16 %v1827, %v1823
    %v2160 = vpack.c.b16 %v1828, %v1824
    %v2161 = vpack.c.b16 %v1833, %v1829
    %v2162 = vpack.c.b16 %v1834, %v1830
    %v2163 = vpack.c.b16 %v1835, %v1831
    %v2164 = vpack.c.b16 %v1836, %v1832
    %v2165 = vpack.c.b16 %v1841, %v1837
    %v2166 = vpack.c.b16 %v1842, %v1838
    %v2167 = vpack.c.b16 %v1843, %v1839
    %v2168 = vpack.c.b16 %v1844, %v1840
    %v2169 = vpack.c.b16 %v1849, %v1845
    %v2170 = vpack.c.b16 %v1850, %v1846
    %v2171 = vpack.c.b16 %v1851, %v1847
    %v2172 = vpack.c.b16 %v1852, %v1848
    %2493 = vmatprep.subr.bf16.mxu0 %v1854
    %2494 = vmatpush1.bf16.msra.mxu0 %v1853
    %2495 = vmatprep.subr.bf16.mxu0 %v1858
    %2496 = vmatpush1.bf16.msra.mxu0 %v1857
    %2497 = vmatprep.subr.bf16.mxu0 %v1862
    %2498 = vmatpush1.bf16.msra.mxu0 %v1861
    %2499 = vmatprep.subr.bf16.mxu0 %v1866
    %2500 = vmatpush1.bf16.msra.mxu0 %v1865
    %2501 = vmatprep.subr.bf16.mxu0 %v1870
    %2502 = vmatpush1.bf16.msra.mxu0 %v1869
    %2503 = vmatprep.subr.bf16.mxu0 %v1874
    %2504 = vmatpush1.bf16.msra.mxu0 %v1873
    %2505 = vmatprep.subr.bf16.mxu0 %v1878
    %2506 = vmatpush1.bf16.msra.mxu0 %v1877
    %2507 = vmatprep.subr.bf16.mxu0 %v1882
    %2508 = vmatpush1.bf16.msra.mxu0 %v1881
    %2509 = vmatprep.subr.bf16.mxu0 %v1886
    %2510 = vmatpush1.bf16.msra.mxu0 %v1885
    %2511 = vmatprep.subr.bf16.mxu0 %v1890
    %2512 = vmatpush1.bf16.msra.mxu0 %v1889
    %2513 = vmatprep.subr.bf16.mxu0 %v1894
    %2514 = vmatpush1.bf16.msra.mxu0 %v1893
    %2515 = vmatprep.subr.bf16.mxu0 %v1898
    %2516 = vmatpush1.bf16.msra.mxu0 %v1897
    %2517 = vmatprep.subr.bf16.mxu0 %v1902
    %2518 = vmatpush1.bf16.msra.mxu0 %v1901
    %2519 = vmatprep.subr.bf16.mxu0 %v1906
    %2520 = vmatpush1.bf16.msra.mxu0 %v1905
    %2521 = vmatprep.subr.bf16.mxu0 %v1910
    %2522 = vmatpush1.bf16.msra.mxu0 %v1909
    %2523 = vmatprep.subr.bf16.mxu0 %v1914
    %2524 = vmatpush1.bf16.msra.mxu0 %v1913
    %2525 = vmatprep.mubr.bf16.mxu0 %v542
    %2526 = vmatmul.mubr.bf16.gmra.mrb[0].mxu0 %v541
    %v2527 = vpop.f32.mrb[0].mxu0
    %v2528 = vadd.f32 %v876, %v2527
    %v2529 = vpop.f32.mrb[0].mxu0
    %v2530 = vadd.f32 %v880, %v2529
    %v2531 = vpop.f32.mrb[0].mxu0
    %v2532 = vpop.f32.mrb[0].mxu0
    %2533 = vdwg.mxu0
    %2534 = vmatprep.subr.bf16.mxu0 %v1918
    %2535 = vmatpush1.bf16.msra.mxu0 %v1917
    %2536 = vmatprep.subr.bf16.mxu0 %v1922
    %2537 = vmatpush1.bf16.msra.mxu0 %v1921
    %2538 = vmatprep.subr.bf16.mxu0 %v1926
    %2539 = vmatpush1.bf16.msra.mxu0 %v1925
    %2540 = vmatprep.subr.bf16.mxu0 %v1930
    %2541 = vmatpush1.bf16.msra.mxu0 %v1929
    %2542 = vmatprep.subr.bf16.mxu0 %v1934
    %2543 = vmatpush1.bf16.msra.mxu0 %v1933
    %2544 = vmatprep.subr.bf16.mxu0 %v1938
    %2545 = vmatpush1.bf16.msra.mxu0 %v1937
    %2546 = vmatprep.subr.bf16.mxu0 %v1942
    %2547 = vmatpush1.bf16.msra.mxu0 %v1941
    %2548 = vmatprep.subr.bf16.mxu0 %v1946
    %2549 = vmatpush1.bf16.msra.mxu0 %v1945
    %2550 = vmatprep.subr.bf16.mxu0 %v1950
    %2551 = vmatpush1.bf16.msra.mxu0 %v1949
    %2552 = vmatprep.subr.bf16.mxu0 %v1954
    %2553 = vmatpush1.bf16.msra.mxu0 %v1953
    %2554 = vmatprep.subr.bf16.mxu0 %v1958
    %2555 = vmatpush1.bf16.msra.mxu0 %v1957
    %2556 = vmatprep.subr.bf16.mxu0 %v1962
    %2557 = vmatpush1.bf16.msra.mxu0 %v1961
    %2558 = vmatprep.subr.bf16.mxu0 %v1966
    %2559 = vmatpush1.bf16.msra.mxu0 %v1965
    %2560 = vmatprep.subr.bf16.mxu0 %v1970
    %2561 = vmatpush1.bf16.msra.mxu0 %v1969
    %2562 = vmatprep.subr.bf16.mxu0 %v1974
    %2563 = vmatpush1.bf16.msra.mxu0 %v1973
    %2564 = vmatprep.subr.bf16.mxu0 %v1978
    %2565 = vmatpush1.bf16.msra.mxu0 %v1977
    %2566 = vmatprep.mubr.bf16.mxu0 %v544
    %2567 = vmatmul.mubr.bf16.gmra.mrb[0].mxu0 %v543
    %v2568 = vpop.f32.mrb[0].mxu0
    %v2569 = vadd.f32 %v2528, %v2568
    %v2570 = vpop.f32.mrb[0].mxu0
    %v2571 = vadd.f32 %v2530, %v2570
    %v2572 = vpop.f32.mrb[0].mxu0
    %v2573 = vpop.f32.mrb[0].mxu0
    %2574 = vdwg.mxu0
    %2575 = vmatprep.subr.bf16.mxu0 %v1982
    %2576 = vmatpush1.bf16.msra.mxu0 %v1981
    %2577 = vmatprep.subr.bf16.mxu0 %v1986
    %2578 = vmatpush1.bf16.msra.mxu0 %v1985
    %2579 = vmatprep.subr.bf16.mxu0 %v1990
    %2580 = vmatpush1.bf16.msra.mxu0 %v1989
    %2581 = vmatprep.subr.bf16.mxu0 %v1994
    %2582 = vmatpush1.bf16.msra.mxu0 %v1993
    %2583 = vmatprep.subr.bf16.mxu0 %v1998
    %2584 = vmatpush1.bf16.msra.mxu0 %v1997
    %2585 = vmatprep.subr.bf16.mxu0 %v2002
    %2586 = vmatpush1.bf16.msra.mxu0 %v2001
    %2587 = vmatprep.subr.bf16.mxu0 %v2006
    %2588 = vmatpush1.bf16.msra.mxu0 %v2005
    %2589 = vmatprep.subr.bf16.mxu0 %v2010
    %2590 = vmatpush1.bf16.msra.mxu0 %v2009
    %2591 = vmatprep.subr.bf16.mxu0 %v2014
    %2592 = vmatpush1.bf16.msra.mxu0 %v2013
    %2593 = vmatprep.subr.bf16.mxu0 %v2018
    %2594 = vmatpush1.bf16.msra.mxu0 %v2017
    %2595 = vmatprep.subr.bf16.mxu0 %v2022
    %2596 = vmatpush1.bf16.msra.mxu0 %v2021
    %2597 = vmatprep.subr.bf16.mxu0 %v2026
    %2598 = vmatpush1.bf16.msra.mxu0 %v2025
    %2599 = vmatprep.subr.bf16.mxu0 %v2030
    %2600 = vmatpush1.bf16.msra.mxu0 %v2029
    %2601 = vmatprep.subr.bf16.mxu0 %v2034
    %2602 = vmatpush1.bf16.msra.mxu0 %v2033
    %2603 = vmatprep.subr.bf16.mxu0 %v2038
    %2604 = vmatpush1.bf16.msra.mxu0 %v2037
    %2605 = vmatprep.subr.bf16.mxu0 %v2042
    %2606 = vmatpush1.bf16.msra.mxu0 %v2041
    %2607 = vmatprep.mubr.bf16.mxu0 %v546
    %2608 = vmatmul.mubr.bf16.gmra.mrb[0].mxu0 %v545
    %v2609 = vpop.f32.mrb[0].mxu0
    %v2610 = vadd.f32 %v2569, %v2609
    %v2611 = vpop.f32.mrb[0].mxu0
    %v2612 = vadd.f32 %v2571, %v2611
    %v2613 = vpop.f32.mrb[0].mxu0
    %v2614 = vpop.f32.mrb[0].mxu0
    %2615 = vdwg.mxu0
    %2616 = vmatprep.subr.bf16.mxu0 %v2046
    %2617 = vmatpush1.bf16.msra.mxu0 %v2045
    %2618 = vmatprep.subr.bf16.mxu0 %v2050
    %2619 = vmatpush1.bf16.msra.mxu0 %v2049
    %2620 = vmatprep.subr.bf16.mxu0 %v2054
    %2621 = vmatpush1.bf16.msra.mxu0 %v2053
    %2622 = vmatprep.subr.bf16.mxu0 %v2058
    %2623 = vmatpush1.bf16.msra.mxu0 %v2057
    %2624 = vmatprep.subr.bf16.mxu0 %v2062
    %2625 = vmatpush1.bf16.msra.mxu0 %v2061
    %2626 = vmatprep.subr.bf16.mxu0 %v2066
    %2627 = vmatpush1.bf16.msra.mxu0 %v2065
    %2628 = vmatprep.subr.bf16.mxu0 %v2070
    %2629 = vmatpush1.bf16.msra.mxu0 %v2069
    %2630 = vmatprep.subr.bf16.mxu0 %v2074
    %2631 = vmatpush1.bf16.msra.mxu0 %v2073
    %2632 = vmatprep.subr.bf16.mxu0 %v2078
    %2633 = vmatpush1.bf16.msra.mxu0 %v2077
    %2634 = vmatprep.subr.bf16.mxu0 %v2082
    %2635 = vmatpush1.bf16.msra.mxu0 %v2081
    %2636 = vmatprep.subr.bf16.mxu0 %v2086
    %2637 = vmatpush1.bf16.msra.mxu0 %v2085
    %2638 = vmatprep.subr.bf16.mxu0 %v2090
    %2639 = vmatpush1.bf16.msra.mxu0 %v2089
    %2640 = vmatprep.subr.bf16.mxu0 %v2094
    %2641 = vmatpush1.bf16.msra.mxu0 %v2093
    %2642 = vmatprep.subr.bf16.mxu0 %v2098
    %2643 = vmatpush1.bf16.msra.mxu0 %v2097
    %2644 = vmatprep.subr.bf16.mxu0 %v2102
    %2645 = vmatpush1.bf16.msra.mxu0 %v2101
    %2646 = vmatprep.subr.bf16.mxu0 %v2106
    %2647 = vmatpush1.bf16.msra.mxu0 %v2105
    %2648 = vmatprep.mubr.bf16.mxu0 %v548
    %2649 = vmatmul.mubr.bf16.gmra.mrb[0].mxu0 %v547
    %v2650 = vpop.f32.mrb[0].mxu0
    %v2651 = vadd.f32 %v2610, %v2650
    %v2652 = vpop.f32.mrb[0].mxu0
    %v2653 = vadd.f32 %v2612, %v2652
    %v2654 = vpop.f32.mrb[0].mxu0
    %v2655 = vpop.f32.mrb[0].mxu0
    %2656 = vdwg.mxu0
    %2657 = vmatprep.subr.bf16.mxu0 %v2110
    %2658 = vmatpush1.bf16.msra.mxu0 %v2109
    %2659 = vmatprep.subr.bf16.mxu0 %v2114
    %2660 = vmatpush1.bf16.msra.mxu0 %v2113
    %2661 = vmatprep.subr.bf16.mxu0 %v2118
    %2662 = vmatpush1.bf16.msra.mxu0 %v2117
    %2663 = vmatprep.subr.bf16.mxu0 %v2122
    %2664 = vmatpush1.bf16.msra.mxu0 %v2121
    %2665 = vmatprep.subr.bf16.mxu0 %v2126
    %2666 = vmatpush1.bf16.msra.mxu0 %v2125
    %2667 = vmatprep.subr.bf16.mxu0 %v2130
    %2668 = vmatpush1.bf16.msra.mxu0 %v2129
    %2669 = vmatprep.subr.bf16.mxu0 %v2134
    %2670 = vmatpush1.bf16.msra.mxu0 %v2133
    %2671 = vmatprep.subr.bf16.mxu0 %v2138
    %2672 = vmatpush1.bf16.msra.mxu0 %v2137
    %2673 = vmatprep.subr.bf16.mxu0 %v2142
    %2674 = vmatpush1.bf16.msra.mxu0 %v2141
    %2675 = vmatprep.subr.bf16.mxu0 %v2146
    %2676 = vmatpush1.bf16.msra.mxu0 %v2145
    %2677 = vmatprep.subr.bf16.mxu0 %v2150
    %2678 = vmatpush1.bf16.msra.mxu0 %v2149
    %2679 = vmatprep.subr.bf16.mxu0 %v2154
    %2680 = vmatpush1.bf16.msra.mxu0 %v2153
    %2681 = vmatprep.subr.bf16.mxu0 %v2158
    %2682 = vmatpush1.bf16.msra.mxu0 %v2157
    %2683 = vmatprep.subr.bf16.mxu0 %v2162
    %2684 = vmatpush1.bf16.msra.mxu0 %v2161
    %2685 = vmatprep.subr.bf16.mxu0 %v2166
    %2686 = vmatpush1.bf16.msra.mxu0 %v2165
    %2687 = vmatprep.subr.bf16.mxu0 %v2170
    %2688 = vmatpush1.bf16.msra.mxu0 %v2169
    %2689 = vmatprep.mubr.bf16.mxu0 %v550
    %2690 = vmatmul.mubr.bf16.gmra.mrb[0].mxu0 %v549
    %v2691 = vpop.f32.mrb[0].mxu0
    %v2692 = vadd.f32 %v2651, %v2691
    %v2693 = vpop.f32.mrb[0].mxu0
    %v2694 = vadd.f32 %v2653, %v2693
    %v2695 = vpop.f32.mrb[0].mxu0
    %v2696 = vpop.f32.mrb[0].mxu0
    %2697 = vdwg.mxu0
    %2698 = vmatprep.subr.bf16.mxu0 %v1856
    %2699 = vmatpush1.bf16.msra.mxu0 %v1855
    %2700 = vmatprep.subr.bf16.mxu0 %v1860
    %2701 = vmatpush1.bf16.msra.mxu0 %v1859
    %2702 = vmatprep.subr.bf16.mxu0 %v1864
    %2703 = vmatpush1.bf16.msra.mxu0 %v1863
    %2704 = vmatprep.subr.bf16.mxu0 %v1868
    %2705 = vmatpush1.bf16.msra.mxu0 %v1867
    %2706 = vmatprep.subr.bf16.mxu0 %v1872
    %2707 = vmatpush1.bf16.msra.mxu0 %v1871
    %2708 = vmatprep.subr.bf16.mxu0 %v1876
    %2709 = vmatpush1.bf16.msra.mxu0 %v1875
    %2710 = vmatprep.subr.bf16.mxu0 %v1880
    %2711 = vmatpush1.bf16.msra.mxu0 %v1879
    %2712 = vmatprep.subr.bf16.mxu0 %v1884
    %2713 = vmatpush1.bf16.msra.mxu0 %v1883
    %2714 = vmatprep.subr.bf16.mxu0 %v1888
    %2715 = vmatpush1.bf16.msra.mxu0 %v1887
    %2716 = vmatprep.subr.bf16.mxu0 %v1892
    %2717 = vmatpush1.bf16.msra.mxu0 %v1891
    %2718 = vmatprep.subr.bf16.mxu0 %v1896
    %2719 = vmatpush1.bf16.msra.mxu0 %v1895
    %2720 = vmatprep.subr.bf16.mxu0 %v1900
    %2721 = vmatpush1.bf16.msra.mxu0 %v1899
    %2722 = vmatprep.subr.bf16.mxu0 %v1904
    %2723 = vmatpush1.bf16.msra.mxu0 %v1903
    %2724 = vmatprep.subr.bf16.mxu0 %v1908
    %2725 = vmatpush1.bf16.msra.mxu0 %v1907
    %2726 = vmatprep.subr.bf16.mxu0 %v1912
    %2727 = vmatpush1.bf16.msra.mxu0 %v1911
    %2728 = vmatprep.subr.bf16.mxu0 %v1916
    %2729 = vmatpush1.bf16.msra.mxu0 %v1915
    %2730 = vmatprep.mubr.bf16.mxu0 %v542
    %2731 = vmatmul.mubr.bf16.gmra.mrb[0].mxu0 %v541
    %v2732 = vpop.f32.mrb[0].mxu0
    %v2733 = vadd.f32 %v884, %v2732
    %v2734 = vpop.f32.mrb[0].mxu0
    %v2735 = vadd.f32 %v888, %v2734
    %v2736 = vpop.f32.mrb[0].mxu0
    %v2737 = vpop.f32.mrb[0].mxu0
    %2738 = vdwg.mxu0
    %2739 = vmatprep.subr.bf16.mxu0 %v1920
    %2740 = vmatpush1.bf16.msra.mxu0 %v1919
    %2741 = vmatprep.subr.bf16.mxu0 %v1924
    %2742 = vmatpush1.bf16.msra.mxu0 %v1923
    %2743 = vmatprep.subr.bf16.mxu0 %v1928
    %2744 = vmatpush1.bf16.msra.mxu0 %v1927
    %2745 = vmatprep.subr.bf16.mxu0 %v1932
    %2746 = vmatpush1.bf16.msra.mxu0 %v1931
    %2747 = vmatprep.subr.bf16.mxu0 %v1936
    %2748 = vmatpush1.bf16.msra.mxu0 %v1935
    %2749 = vmatprep.subr.bf16.mxu0 %v1940
    %2750 = vmatpush1.bf16.msra.mxu0 %v1939
    %2751 = vmatprep.subr.bf16.mxu0 %v1944
    %2752 = vmatpush1.bf16.msra.mxu0 %v1943
    %2753 = vmatprep.subr.bf16.mxu0 %v1948
    %2754 = vmatpush1.bf16.msra.mxu0 %v1947
    %2755 = vmatprep.subr.bf16.mxu0 %v1952
    %2756 = vmatpush1.bf16.msra.mxu0 %v1951
    %2757 = vmatprep.subr.bf16.mxu0 %v1956
    %2758 = vmatpush1.bf16.msra.mxu0 %v1955
    %2759 = vmatprep.subr.bf16.mxu0 %v1960
    %2760 = vmatpush1.bf16.msra.mxu0 %v1959
    %2761 = vmatprep.subr.bf16.mxu0 %v1964
    %2762 = vmatpush1.bf16.msra.mxu0 %v1963
    %2763 = vmatprep.subr.bf16.mxu0 %v1968
    %2764 = vmatpush1.bf16.msra.mxu0 %v1967
    %2765 = vmatprep.subr.bf16.mxu0 %v1972
    %2766 = vmatpush1.bf16.msra.mxu0 %v1971
    %2767 = vmatprep.subr.bf16.mxu0 %v1976
    %2768 = vmatpush1.bf16.msra.mxu0 %v1975
    %2769 = vmatprep.subr.bf16.mxu0 %v1980
    %2770 = vmatpush1.bf16.msra.mxu0 %v1979
    %2771 = vmatprep.mubr.bf16.mxu0 %v544
    %2772 = vmatmul.mubr.bf16.gmra.mrb[0].mxu0 %v543
    %v2773 = vpop.f32.mrb[0].mxu0
    %v2774 = vadd.f32 %v2733, %v2773
    %v2775 = vpop.f32.mrb[0].mxu0
    %v2776 = vadd.f32 %v2735, %v2775
    %v2777 = vpop.f32.mrb[0].mxu0
    %v2778 = vpop.f32.mrb[0].mxu0
    %2779 = vdwg.mxu0
    %2780 = vmatprep.subr.bf16.mxu0 %v1984
    %2781 = vmatpush1.bf16.msra.mxu0 %v1983
    %2782 = vmatprep.subr.bf16.mxu0 %v1988
    %2783 = vmatpush1.bf16.msra.mxu0 %v1987
    %2784 = vmatprep.subr.bf16.mxu0 %v1992
    %2785 = vmatpush1.bf16.msra.mxu0 %v1991
    %2786 = vmatprep.subr.bf16.mxu0 %v1996
    %2787 = vmatpush1.bf16.msra.mxu0 %v1995
    %2788 = vmatprep.subr.bf16.mxu0 %v2000
    %2789 = vmatpush1.bf16.msra.mxu0 %v1999
    %2790 = vmatprep.subr.bf16.mxu0 %v2004
    %2791 = vmatpush1.bf16.msra.mxu0 %v2003
    %2792 = vmatprep.subr.bf16.mxu0 %v2008
    %2793 = vmatpush1.bf16.msra.mxu0 %v2007
    %2794 = vmatprep.subr.bf16.mxu0 %v2012
    %2795 = vmatpush1.bf16.msra.mxu0 %v2011
    %2796 = vmatprep.subr.bf16.mxu0 %v2016
    %2797 = vmatpush1.bf16.msra.mxu0 %v2015
    %2798 = vmatprep.subr.bf16.mxu0 %v2020
    %2799 = vmatpush1.bf16.msra.mxu0 %v2019
    %2800 = vmatprep.subr.bf16.mxu0 %v2024
    %2801 = vmatpush1.bf16.msra.mxu0 %v2023
    %2802 = vmatprep.subr.bf16.mxu0 %v2028
    %2803 = vmatpush1.bf16.msra.mxu0 %v2027
    %2804 = vmatprep.subr.bf16.mxu0 %v2032
    %2805 = vmatpush1.bf16.msra.mxu0 %v2031
    %2806 = vmatprep.subr.bf16.mxu0 %v2036
    %2807 = vmatpush1.bf16.msra.mxu0 %v2035
    %2808 = vmatprep.subr.bf16.mxu0 %v2040
    %2809 = vmatpush1.bf16.msra.mxu0 %v2039
    %2810 = vmatprep.subr.bf16.mxu0 %v2044
    %2811 = vmatpush1.bf16.msra.mxu0 %v2043
    %2812 = vmatprep.mubr.bf16.mxu0 %v546
    %2813 = vmatmul.mubr.bf16.gmra.mrb[0].mxu0 %v545
    %v2814 = vpop.f32.mrb[0].mxu0
    %v2815 = vadd.f32 %v2774, %v2814
    %v2816 = vpop.f32.mrb[0].mxu0
    %v2817 = vadd.f32 %v2776, %v2816
    %v2818 = vpop.f32.mrb[0].mxu0
    %v2819 = vpop.f32.mrb[0].mxu0
    %2820 = vdwg.mxu0
    %2821 = vmatprep.subr.bf16.mxu0 %v2048
    %2822 = vmatpush1.bf16.msra.mxu0 %v2047
    %2823 = vmatprep.subr.bf16.mxu0 %v2052
    %2824 = vmatpush1.bf16.msra.mxu0 %v2051
    %2825 = vmatprep.subr.bf16.mxu0 %v2056
    %2826 = vmatpush1.bf16.msra.mxu0 %v2055
    %2827 = vmatprep.subr.bf16.mxu0 %v2060
    %2828 = vmatpush1.bf16.msra.mxu0 %v2059
    %2829 = vmatprep.subr.bf16.mxu0 %v2064
    %2830 = vmatpush1.bf16.msra.mxu0 %v2063
    %2831 = vmatprep.subr.bf16.mxu0 %v2068
    %2832 = vmatpush1.bf16.msra.mxu0 %v2067
    %2833 = vmatprep.subr.bf16.mxu0 %v2072
    %2834 = vmatpush1.bf16.msra.mxu0 %v2071
    %2835 = vmatprep.subr.bf16.mxu0 %v2076
    %2836 = vmatpush1.bf16.msra.mxu0 %v2075
    %2837 = vmatprep.subr.bf16.mxu0 %v2080
    %2838 = vmatpush1.bf16.msra.mxu0 %v2079
    %2839 = vmatprep.subr.bf16.mxu0 %v2084
    %2840 = vmatpush1.bf16.msra.mxu0 %v2083
    %2841 = vmatprep.subr.bf16.mxu0 %v2088
    %2842 = vmatpush1.bf16.msra.mxu0 %v2087
    %2843 = vmatprep.subr.bf16.mxu0 %v2092
    %2844 = vmatpush1.bf16.msra.mxu0 %v2091
    %2845 = vmatprep.subr.bf16.mxu0 %v2096
    %2846 = vmatpush1.bf16.msra.mxu0 %v2095
    %2847 = vmatprep.subr.bf16.mxu0 %v2100
    %2848 = vmatpush1.bf16.msra.mxu0 %v2099
    %2849 = vmatprep.subr.bf16.mxu0 %v2104
    %2850 = vmatpush1.bf16.msra.mxu0 %v2103
    %2851 = vmatprep.subr.bf16.mxu0 %v2108
    %2852 = vmatpush1.bf16.msra.mxu0 %v2107
    %2853 = vmatprep.mubr.bf16.mxu0 %v548
    %2854 = vmatmul.mubr.bf16.gmra.mrb[0].mxu0 %v547
    %v2855 = vpop.f32.mrb[0].mxu0
    %v2856 = vadd.f32 %v2815, %v2855
    %v2857 = vpop.f32.mrb[0].mxu0
    %v2858 = vadd.f32 %v2817, %v2857
    %v2859 = vpop.f32.mrb[0].mxu0
    %v2860 = vpop.f32.mrb[0].mxu0
    %2861 = vdwg.mxu0
    %2862 = vmatprep.subr.bf16.mxu0 %v2112
    %2863 = vmatpush1.bf16.msra.mxu0 %v2111
    %2864 = vmatprep.subr.bf16.mxu0 %v2116
    %2865 = vmatpush1.bf16.msra.mxu0 %v2115
    %2866 = vmatprep.subr.bf16.mxu0 %v2120
    %2867 = vmatpush1.bf16.msra.mxu0 %v2119
    %2868 = vmatprep.subr.bf16.mxu0 %v2124
    %2869 = vmatpush1.bf16.msra.mxu0 %v2123
    %2870 = vmatprep.subr.bf16.mxu0 %v2128
    %2871 = vmatpush1.bf16.msra.mxu0 %v2127
    %2872 = vmatprep.subr.bf16.mxu0 %v2132
    %2873 = vmatpush1.bf16.msra.mxu0 %v2131
    %2874 = vmatprep.subr.bf16.mxu0 %v2136
    %2875 = vmatpush1.bf16.msra.mxu0 %v2135
    %2876 = vmatprep.subr.bf16.mxu0 %v2140
    %2877 = vmatpush1.bf16.msra.mxu0 %v2139
    %2878 = vmatprep.subr.bf16.mxu0 %v2144
    %2879 = vmatpush1.bf16.msra.mxu0 %v2143
    %2880 = vmatprep.subr.bf16.mxu0 %v2148
    %2881 = vmatpush1.bf16.msra.mxu0 %v2147
    %2882 = vmatprep.subr.bf16.mxu0 %v2152
    %2883 = vmatpush1.bf16.msra.mxu0 %v2151
    %2884 = vmatprep.subr.bf16.mxu0 %v2156
    %2885 = vmatpush1.bf16.msra.mxu0 %v2155
    %2886 = vmatprep.subr.bf16.mxu0 %v2160
    %2887 = vmatpush1.bf16.msra.mxu0 %v2159
    %2888 = vmatprep.subr.bf16.mxu0 %v2164
    %2889 = vmatpush1.bf16.msra.mxu0 %v2163
    %2890 = vmatprep.subr.bf16.mxu0 %v2168
    %2891 = vmatpush1.bf16.msra.mxu0 %v2167
    %2892 = vmatprep.subr.bf16.mxu0 %v2172
    %2893 = vmatpush1.bf16.msra.mxu0 %v2171
    %2894 = vmatprep.mubr.bf16.mxu0 %v550
    %2895 = vmatmul.mubr.bf16.gmra.mrb[0].mxu0 %v549
    %v2896 = vpop.f32.mrb[0].mxu0
    %v2897 = vadd.f32 %v2856, %v2896
    %v2898 = vpop.f32.mrb[0].mxu0
    %v2899 = vadd.f32 %v2858, %v2898
    %v2900 = vpop.f32.mrb[0].mxu0
    %v2901 = vpop.f32.mrb[0].mxu0
    %2902 = vdwg.mxu0
    %v2903 = vmax.f32 %v2692, 0.0
    %v2904 = vmax.f32 %v2694, 0.0
    %v2905 = vmax.f32 %v2897, 0.0
    %v2906 = vmax.f32 %v2899, 0.0
    %v2907 = vpack.c.bf16 %v2903, %v2903
    %v2908 = vpack.c.bf16 %v2904, %v2904
    %v2909 = vpack.c.bf16 %v2905, %v2905
    %v2910 = vpack.c.bf16 %v2906, %v2906
    %v2911 = vld [vmem:[#allocation11] sm:$0xff]
    %v2912 = vld [vmem:[#allocation11 + $0x8] sm:$0xff]
    %v2913 = vld [vmem:[#allocation11 + $0x10] sm:$0xff]
    %v2914 = vld [vmem:[#allocation11 + $0x18] sm:$0xff]
    %v2915 = vld [vmem:[#allocation11 + $0x20] sm:$0xff]
    %v2916 = vld [vmem:[#allocation11 + $0x28] sm:$0xff]
    %v2917 = vld [vmem:[#allocation11 + $0x30] sm:$0xff]
    %v2918 = vld [vmem:[#allocation11 + $0x38] sm:$0xff]
    %v2919 = vld [vmem:[#allocation11 + $0x40] sm:$0xff]
    %v2920 = vld [vmem:[#allocation11 + $0x48] sm:$0xff]
    %v2921 = vld [vmem:[#allocation11 + $0x50] sm:$0xff]
    %v2922 = vld [vmem:[#allocation11 + $0x58] sm:$0xff]
    %v2923 = vld [vmem:[#allocation11 + $0x60] sm:$0xff]
    %v2924 = vld [vmem:[#allocation11 + $0x68] sm:$0xff]
    %v2925 = vld [vmem:[#allocation11 + $0x70] sm:$0xff]
    %v2926 = vld [vmem:[#allocation11 + $0x78] sm:$0xff]
    %v2927 = vld [vmem:[#allocation11 + $0x80] sm:$0xff]
    %v2928 = vld [vmem:[#allocation11 + $0x88] sm:$0xff]
    %v2929 = vld [vmem:[#allocation11 + $0x90] sm:$0xff]
    %v2930 = vld [vmem:[#allocation11 + $0x98] sm:$0xff]
    %v2931 = vld [vmem:[#allocation11 + $0xa0] sm:$0xff]
    %v2932 = vld [vmem:[#allocation11 + $0xa8] sm:$0xff]
    %v2933 = vld [vmem:[#allocation11 + $0xb0] sm:$0xff]
    %v2934 = vld [vmem:[#allocation11 + $0xb8] sm:$0xff]
    %v2935 = vld [vmem:[#allocation11 + $0xc0] sm:$0xff]
    %v2936 = vld [vmem:[#allocation11 + $0xc8] sm:$0xff]
    %v2937 = vld [vmem:[#allocation11 + $0xd0] sm:$0xff]
    %v2938 = vld [vmem:[#allocation11 + $0xd8] sm:$0xff]
    %v2939 = vld [vmem:[#allocation11 + $0xe0] sm:$0xff]
    %v2940 = vld [vmem:[#allocation11 + $0xe8] sm:$0xff]
    %v2941 = vld [vmem:[#allocation11 + $0xf0] sm:$0xff]
    %v2942 = vld [vmem:[#allocation11 + $0xf8] sm:$0xff]
    %v2943 = vld [vmem:[#allocation11 + $0x100] sm:$0xff]
    %v2944 = vld [vmem:[#allocation11 + $0x108] sm:$0xff]
    %v2945 = vld [vmem:[#allocation11 + $0x110] sm:$0xff]
    %v2946 = vld [vmem:[#allocation11 + $0x118] sm:$0xff]
    %v2947 = vld [vmem:[#allocation11 + $0x120] sm:$0xff]
    %v2948 = vld [vmem:[#allocation11 + $0x128] sm:$0xff]
    %v2949 = vld [vmem:[#allocation11 + $0x130] sm:$0xff]
    %v2950 = vld [vmem:[#allocation11 + $0x138] sm:$0xff]
    %v2951 = vld [vmem:[#allocation11 + $0x140] sm:$0xff]
    %v2952 = vld [vmem:[#allocation11 + $0x148] sm:$0xff]
    %v2953 = vld [vmem:[#allocation11 + $0x150] sm:$0xff]
    %v2954 = vld [vmem:[#allocation11 + $0x158] sm:$0xff]
    %v2955 = vld [vmem:[#allocation11 + $0x160] sm:$0xff]
    %v2956 = vld [vmem:[#allocation11 + $0x168] sm:$0xff]
    %v2957 = vld [vmem:[#allocation11 + $0x170] sm:$0xff]
    %v2958 = vld [vmem:[#allocation11 + $0x178] sm:$0xff]
    %v2959 = vld [vmem:[#allocation11 + $0x180] sm:$0xff]
    %v2960 = vld [vmem:[#allocation11 + $0x188] sm:$0xff]
    %v2961 = vld [vmem:[#allocation11 + $0x190] sm:$0xff]
    %v2962 = vld [vmem:[#allocation11 + $0x198] sm:$0xff]
    %v2963 = vld [vmem:[#allocation11 + $0x1a0] sm:$0xff]
    %v2964 = vld [vmem:[#allocation11 + $0x1a8] sm:$0xff]
    %v2965 = vld [vmem:[#allocation11 + $0x1b0] sm:$0xff]
    %v2966 = vld [vmem:[#allocation11 + $0x1b8] sm:$0xff]
    %v2967 = vld [vmem:[#allocation11 + $0x1c0] sm:$0xff]
    %v2968 = vld [vmem:[#allocation11 + $0x1c8] sm:$0xff]
    %v2969 = vld [vmem:[#allocation11 + $0x1d0] sm:$0xff]
    %v2970 = vld [vmem:[#allocation11 + $0x1d8] sm:$0xff]
    %v2971 = vld [vmem:[#allocation11 + $0x1e0] sm:$0xff]
    %v2972 = vld [vmem:[#allocation11 + $0x1e8] sm:$0xff]
    %v2973 = vld [vmem:[#allocation11 + $0x1f0] sm:$0xff]
    %v2974 = vld [vmem:[#allocation11 + $0x1f8] sm:$0xff]
    %v2975 = vld [vmem:[#allocation13] sm:$0x3]
    %v2977 = vlaneseq
    %v2978 = vshrl.u32 %v2977, 7
    %v2979 = vsub.s32 0, %v2978
    %v2980 = vrot.slane %v2975, %v2979
    %v2981 = vlaneseq
    %v2982 = vshrl.u32 %v2981, 7
    %v2983 = vsub.s32 1, %v2982
    %v2984 = vrot.slane %v2975, %v2983
    %v3051 = vunpack.c.l.b16 %v2911
    %v3052 = vunpack.c.h.b16 %v2911
    %v3053 = vunpack.c.l.b16 %v2912
    %v3054 = vunpack.c.h.b16 %v2912
    %v3055 = vunpack.c.l.b16 %v2913
    %v3056 = vunpack.c.h.b16 %v2913
    %v3057 = vunpack.c.l.b16 %v2914
    %v3058 = vunpack.c.h.b16 %v2914
    %v3059 = vunpack.c.l.b16 %v2915
    %v3060 = vunpack.c.h.b16 %v2915
    %v3061 = vunpack.c.l.b16 %v2916
    %v3062 = vunpack.c.h.b16 %v2916
    %v3063 = vunpack.c.l.b16 %v2917
    %v3064 = vunpack.c.h.b16 %v2917
    %v3065 = vunpack.c.l.b16 %v2918
    %v3066 = vunpack.c.h.b16 %v2918
    %v3067 = vunpack.c.l.b16 %v2919
    %v3068 = vunpack.c.h.b16 %v2919
    %v3069 = vunpack.c.l.b16 %v2920
    %v3070 = vunpack.c.h.b16 %v2920
    %v3071 = vunpack.c.l.b16 %v2921
    %v3072 = vunpack.c.h.b16 %v2921
    %v3073 = vunpack.c.l.b16 %v2922
    %v3074 = vunpack.c.h.b16 %v2922
    %v3075 = vunpack.c.l.b16 %v2923
    %v3076 = vunpack.c.h.b16 %v2923
    %v3077 = vunpack.c.l.b16 %v2924
    %v3078 = vunpack.c.h.b16 %v2924
    %v3079 = vunpack.c.l.b16 %v2925
    %v3080 = vunpack.c.h.b16 %v2925
    %v3081 = vunpack.c.l.b16 %v2926
    %v3082 = vunpack.c.h.b16 %v2926
    %v3083 = vunpack.c.l.b16 %v2927
    %v3084 = vunpack.c.h.b16 %v2927
    %v3085 = vunpack.c.l.b16 %v2928
    %v3086 = vunpack.c.h.b16 %v2928
    %v3087 = vunpack.c.l.b16 %v2929
    %v3088 = vunpack.c.h.b16 %v2929
    %v3089 = vunpack.c.l.b16 %v2930
    %v3090 = vunpack.c.h.b16 %v2930
    %v3091 = vunpack.c.l.b16 %v2931
    %v3092 = vunpack.c.h.b16 %v2931
    %v3093 = vunpack.c.l.b16 %v2932
    %v3094 = vunpack.c.h.b16 %v2932
    %v3095 = vunpack.c.l.b16 %v2933
    %v3096 = vunpack.c.h.b16 %v2933
    %v3097 = vunpack.c.l.b16 %v2934
    %v3098 = vunpack.c.h.b16 %v2934
    %v3099 = vunpack.c.l.b16 %v2935
    %v3100 = vunpack.c.h.b16 %v2935
    %v3101 = vunpack.c.l.b16 %v2936
    %v3102 = vunpack.c.h.b16 %v2936
    %v3103 = vunpack.c.l.b16 %v2937
    %v3104 = vunpack.c.h.b16 %v2937
    %v3105 = vunpack.c.l.b16 %v2938
    %v3106 = vunpack.c.h.b16 %v2938
    %v3107 = vunpack.c.l.b16 %v2939
    %v3108 = vunpack.c.h.b16 %v2939
    %v3109 = vunpack.c.l.b16 %v2940
    %v3110 = vunpack.c.h.b16 %v2940
    %v3111 = vunpack.c.l.b16 %v2941
    %v3112 = vunpack.c.h.b16 %v2941
    %v3113 = vunpack.c.l.b16 %v2942
    %v3114 = vunpack.c.h.b16 %v2942
    %v3115 = vunpack.c.l.b16 %v2943
    %v3116 = vunpack.c.h.b16 %v2943
    %v3117 = vunpack.c.l.b16 %v2944
    %v3118 = vunpack.c.h.b16 %v2944
    %v3119 = vunpack.c.l.b16 %v2945
    %v3120 = vunpack.c.h.b16 %v2945
    %v3121 = vunpack.c.l.b16 %v2946
    %v3122 = vunpack.c.h.b16 %v2946
    %v3123 = vunpack.c.l.b16 %v2947
    %v3124 = vunpack.c.h.b16 %v2947
    %v3125 = vunpack.c.l.b16 %v2948
    %v3126 = vunpack.c.h.b16 %v2948
    %v3127 = vunpack.c.l.b16 %v2949
    %v3128 = vunpack.c.h.b16 %v2949
    %v3129 = vunpack.c.l.b16 %v2950
    %v3130 = vunpack.c.h.b16 %v2950
    %v3131 = vunpack.c.l.b16 %v2951
    %v3132 = vunpack.c.h.b16 %v2951
    %v3133 = vunpack.c.l.b16 %v2952
    %v3134 = vunpack.c.h.b16 %v2952
    %v3135 = vunpack.c.l.b16 %v2953
    %v3136 = vunpack.c.h.b16 %v2953
    %v3137 = vunpack.c.l.b16 %v2954
    %v3138 = vunpack.c.h.b16 %v2954
    %v3139 = vunpack.c.l.b16 %v2955
    %v3140 = vunpack.c.h.b16 %v2955
    %v3141 = vunpack.c.l.b16 %v2956
    %v3142 = vunpack.c.h.b16 %v2956
    %v3143 = vunpack.c.l.b16 %v2957
    %v3144 = vunpack.c.h.b16 %v2957
    %v3145 = vunpack.c.l.b16 %v2958
    %v3146 = vunpack.c.h.b16 %v2958
    %v3147 = vunpack.c.l.b16 %v2959
    %v3148 = vunpack.c.h.b16 %v2959
    %v3149 = vunpack.c.l.b16 %v2960
    %v3150 = vunpack.c.h.b16 %v2960
    %v3151 = vunpack.c.l.b16 %v2961
    %v3152 = vunpack.c.h.b16 %v2961
    %v3153 = vunpack.c.l.b16 %v2962
    %v3154 = vunpack.c.h.b16 %v2962
    %v3155 = vunpack.c.l.b16 %v2963
    %v3156 = vunpack.c.h.b16 %v2963
    %v3157 = vunpack.c.l.b16 %v2964
    %v3158 = vunpack.c.h.b16 %v2964
    %v3159 = vunpack.c.l.b16 %v2965
    %v3160 = vunpack.c.h.b16 %v2965
    %v3161 = vunpack.c.l.b16 %v2966
    %v3162 = vunpack.c.h.b16 %v2966
    %v3163 = vunpack.c.l.b16 %v2967
    %v3164 = vunpack.c.h.b16 %v2967
    %v3165 = vunpack.c.l.b16 %v2968
    %v3166 = vunpack.c.h.b16 %v2968
    %v3167 = vunpack.c.l.b16 %v2969
    %v3168 = vunpack.c.h.b16 %v2969
    %v3169 = vunpack.c.l.b16 %v2970
    %v3170 = vunpack.c.h.b16 %v2970
    %v3171 = vunpack.c.l.b16 %v2971
    %v3172 = vunpack.c.h.b16 %v2971
    %v3173 = vunpack.c.l.b16 %v2972
    %v3174 = vunpack.c.h.b16 %v2972
    %v3175 = vunpack.c.l.b16 %v2973
    %v3176 = vunpack.c.h.b16 %v2973
    %v3177 = vunpack.c.l.b16 %v2974
    %v3178 = vunpack.c.h.b16 %v2974
    %v3179 = vpack.c.b16 %v3053, %v3051
    %v3180 = vpack.c.b16 %v3054, %v3052
    %v3181 = vpack.c.b16 %v3057, %v3055
    %v3182 = vpack.c.b16 %v3058, %v3056
    %v3183 = vpack.c.b16 %v3061, %v3059
    %v3184 = vpack.c.b16 %v3062, %v3060
    %v3185 = vpack.c.b16 %v3065, %v3063
    %v3186 = vpack.c.b16 %v3066, %v3064
    %v3187 = vpack.c.b16 %v3069, %v3067
    %v3188 = vpack.c.b16 %v3070, %v3068
    %v3189 = vpack.c.b16 %v3073, %v3071
    %v3190 = vpack.c.b16 %v3074, %v3072
    %v3191 = vpack.c.b16 %v3077, %v3075
    %v3192 = vpack.c.b16 %v3078, %v3076
    %v3193 = vpack.c.b16 %v3081, %v3079
    %v3194 = vpack.c.b16 %v3082, %v3080
    %v3195 = vpack.c.b16 %v3085, %v3083
    %v3196 = vpack.c.b16 %v3086, %v3084
    %v3197 = vpack.c.b16 %v3089, %v3087
    %v3198 = vpack.c.b16 %v3090, %v3088
    %v3199 = vpack.c.b16 %v3093, %v3091
    %v3200 = vpack.c.b16 %v3094, %v3092
    %v3201 = vpack.c.b16 %v3097, %v3095
    %v3202 = vpack.c.b16 %v3098, %v3096
    %v3203 = vpack.c.b16 %v3101, %v3099
    %v3204 = vpack.c.b16 %v3102, %v3100
    %v3205 = vpack.c.b16 %v3105, %v3103
    %v3206 = vpack.c.b16 %v3106, %v3104
    %v3207 = vpack.c.b16 %v3109, %v3107
    %v3208 = vpack.c.b16 %v3110, %v3108
    %v3209 = vpack.c.b16 %v3113, %v3111
    %v3210 = vpack.c.b16 %v3114, %v3112
    %v3211 = vpack.c.b16 %v3117, %v3115
    %v3212 = vpack.c.b16 %v3118, %v3116
    %v3213 = vpack.c.b16 %v3121, %v3119
    %v3214 = vpack.c.b16 %v3122, %v3120
    %v3215 = vpack.c.b16 %v3125, %v3123
    %v3216 = vpack.c.b16 %v3126, %v3124
    %v3217 = vpack.c.b16 %v3129, %v3127
    %v3218 = vpack.c.b16 %v3130, %v3128
    %v3219 = vpack.c.b16 %v3133, %v3131
    %v3220 = vpack.c.b16 %v3134, %v3132
    %v3221 = vpack.c.b16 %v3137, %v3135
    %v3222 = vpack.c.b16 %v3138, %v3136
    %v3223 = vpack.c.b16 %v3141, %v3139
    %v3224 = vpack.c.b16 %v3142, %v3140
    %v3225 = vpack.c.b16 %v3145, %v3143
    %v3226 = vpack.c.b16 %v3146, %v3144
    %v3227 = vpack.c.b16 %v3149, %v3147
    %v3228 = vpack.c.b16 %v3150, %v3148
    %v3229 = vpack.c.b16 %v3153, %v3151
    %v3230 = vpack.c.b16 %v3154, %v3152
    %v3231 = vpack.c.b16 %v3157, %v3155
    %v3232 = vpack.c.b16 %v3158, %v3156
    %v3233 = vpack.c.b16 %v3161, %v3159
    %v3234 = vpack.c.b16 %v3162, %v3160
    %v3235 = vpack.c.b16 %v3165, %v3163
    %v3236 = vpack.c.b16 %v3166, %v3164
    %v3237 = vpack.c.b16 %v3169, %v3167
    %v3238 = vpack.c.b16 %v3170, %v3168
    %v3239 = vpack.c.b16 %v3173, %v3171
    %v3240 = vpack.c.b16 %v3174, %v3172
    %v3241 = vpack.c.b16 %v3177, %v3175
    %v3242 = vpack.c.b16 %v3178, %v3176
    %3307 = vmatprep.subr.bf16.mxu0 %v3180
    %3308 = vmatpush1.bf16.msra.mxu0 %v3179
    %3309 = vmatprep.subr.bf16.mxu0 %v3182
    %3310 = vmatpush1.bf16.msra.mxu0 %v3181
    %3311 = vmatprep.subr.bf16.mxu0 %v3184
    %3312 = vmatpush1.bf16.msra.mxu0 %v3183
    %3313 = vmatprep.subr.bf16.mxu0 %v3186
    %3314 = vmatpush1.bf16.msra.mxu0 %v3185
    %3315 = vmatprep.subr.bf16.mxu0 %v3188
    %3316 = vmatpush1.bf16.msra.mxu0 %v3187
    %3317 = vmatprep.subr.bf16.mxu0 %v3190
    %3318 = vmatpush1.bf16.msra.mxu0 %v3189
    %3319 = vmatprep.subr.bf16.mxu0 %v3192
    %3320 = vmatpush1.bf16.msra.mxu0 %v3191
    %3321 = vmatprep.subr.bf16.mxu0 %v3194
    %3322 = vmatpush1.bf16.msra.mxu0 %v3193
    %3323 = vmatprep.subr.bf16.mxu0 %v3196
    %3324 = vmatpush1.bf16.msra.mxu0 %v3195
    %3325 = vmatprep.subr.bf16.mxu0 %v3198
    %3326 = vmatpush1.bf16.msra.mxu0 %v3197
    %3327 = vmatprep.subr.bf16.mxu0 %v3200
    %3328 = vmatpush1.bf16.msra.mxu0 %v3199
    %3329 = vmatprep.subr.bf16.mxu0 %v3202
    %3330 = vmatpush1.bf16.msra.mxu0 %v3201
    %3331 = vmatprep.subr.bf16.mxu0 %v3204
    %3332 = vmatpush1.bf16.msra.mxu0 %v3203
    %3333 = vmatprep.subr.bf16.mxu0 %v3206
    %3334 = vmatpush1.bf16.msra.mxu0 %v3205
    %3335 = vmatprep.subr.bf16.mxu0 %v3208
    %3336 = vmatpush1.bf16.msra.mxu0 %v3207
    %3337 = vmatprep.subr.bf16.mxu0 %v3210
    %3338 = vmatpush1.bf16.msra.mxu0 %v3209
    %3339 = vmatprep.mubr.bf16.mxu0 %v2908
    %3340 = vmatmul.mubr.bf16.gmra.mrb[0].mxu0 %v2907
    %v3341 = vpop.f32.mrb[0].mxu0
    %v3342 = vadd.f32 %v2980, %v3341
    %v3343 = vpop.f32.mrb[0].mxu0
    %v3344 = vadd.f32 %v2984, %v3343
    %v3345 = vpop.f32.mrb[0].mxu0
    %v3346 = vpop.f32.mrb[0].mxu0
    %3347 = vdwg.mxu0
    %3348 = vmatprep.subr.bf16.mxu0 %v3212
    %3349 = vmatpush1.bf16.msra.mxu0 %v3211
    %3350 = vmatprep.subr.bf16.mxu0 %v3214
    %3351 = vmatpush1.bf16.msra.mxu0 %v3213
    %3352 = vmatprep.subr.bf16.mxu0 %v3216
    %3353 = vmatpush1.bf16.msra.mxu0 %v3215
    %3354 = vmatprep.subr.bf16.mxu0 %v3218
    %3355 = vmatpush1.bf16.msra.mxu0 %v3217
    %3356 = vmatprep.subr.bf16.mxu0 %v3220
    %3357 = vmatpush1.bf16.msra.mxu0 %v3219
    %3358 = vmatprep.subr.bf16.mxu0 %v3222
    %3359 = vmatpush1.bf16.msra.mxu0 %v3221
    %3360 = vmatprep.subr.bf16.mxu0 %v3224
    %3361 = vmatpush1.bf16.msra.mxu0 %v3223
    %3362 = vmatprep.subr.bf16.mxu0 %v3226
    %3363 = vmatpush1.bf16.msra.mxu0 %v3225
    %3364 = vmatprep.subr.bf16.mxu0 %v3228
    %3365 = vmatpush1.bf16.msra.mxu0 %v3227
    %3366 = vmatprep.subr.bf16.mxu0 %v3230
    %3367 = vmatpush1.bf16.msra.mxu0 %v3229
    %3368 = vmatprep.subr.bf16.mxu0 %v3232
    %3369 = vmatpush1.bf16.msra.mxu0 %v3231
    %3370 = vmatprep.subr.bf16.mxu0 %v3234
    %3371 = vmatpush1.bf16.msra.mxu0 %v3233
    %3372 = vmatprep.subr.bf16.mxu0 %v3236
    %3373 = vmatpush1.bf16.msra.mxu0 %v3235
    %3374 = vmatprep.subr.bf16.mxu0 %v3238
    %3375 = vmatpush1.bf16.msra.mxu0 %v3237
    %3376 = vmatprep.subr.bf16.mxu0 %v3240
    %3377 = vmatpush1.bf16.msra.mxu0 %v3239
    %3378 = vmatprep.subr.bf16.mxu0 %v3242
    %3379 = vmatpush1.bf16.msra.mxu0 %v3241
    %3380 = vmatprep.mubr.bf16.mxu0 %v2910
    %3381 = vmatmul.mubr.bf16.gmra.mrb[0].mxu0 %v2909
    %v3382 = vpop.f32.mrb[0].mxu0
    %v3383 = vadd.f32 %v3342, %v3382
    %v3384 = vpop.f32.mrb[0].mxu0
    %v3385 = vadd.f32 %v3344, %v3384
    %v3386 = vpop.f32.mrb[0].mxu0
    %v3387 = vpop.f32.mrb[0].mxu0
    %3388 = vdwg.mxu0
    %v3389 = vmax.f32 %v3383, 0.0
    %v3390 = vmax.f32 %v3385, 0.0
    %v3391 = vpack.c.bf16 %v3389, %v3389
    %v3392 = vpack.c.bf16 %v3390, %v3390
    %v3393 = vld [vmem:[#allocation14] sm:$0xf]
    %v3394 = vld [vmem:[#allocation14 + $0x4] sm:$0xf]
    %v3395 = vld [vmem:[#allocation14 + $0x8] sm:$0xf]
    %v3396 = vld [vmem:[#allocation14 + $0xc] sm:$0xf]
    %v3397 = vld [vmem:[#allocation14 + $0x10] sm:$0xf]
    %v3398 = vld [vmem:[#allocation14 + $0x14] sm:$0xf]
    %v3399 = vld [vmem:[#allocation14 + $0x18] sm:$0xf]
    %v3400 = vld [vmem:[#allocation14 + $0x1c] sm:$0xf]
    %v3401 = vld [vmem:[#allocation14 + $0x20] sm:$0xf]
    %v3402 = vld [vmem:[#allocation14 + $0x24] sm:$0xf]
    %v3403 = vld [vmem:[#allocation14 + $0x28] sm:$0xf]
    %v3404 = vld [vmem:[#allocation14 + $0x2c] sm:$0xf]
    %v3405 = vld [vmem:[#allocation14 + $0x30] sm:$0xf]
    %v3406 = vld [vmem:[#allocation14 + $0x34] sm:$0xf]
    %v3407 = vld [vmem:[#allocation14 + $0x38] sm:$0xf]
    %v3408 = vld [vmem:[#allocation14 + $0x3c] sm:$0xf]
    %v3409 = vld [vmem:[#allocation14 + $0x40] sm:$0xf]
    %v3410 = vld [vmem:[#allocation14 + $0x44] sm:$0xf]
    %v3411 = vld [vmem:[#allocation14 + $0x48] sm:$0xf]
    %v3412 = vld [vmem:[#allocation14 + $0x4c] sm:$0xf]
    %v3413 = vld [vmem:[#allocation14 + $0x50] sm:$0xf]
    %v3414 = vld [vmem:[#allocation14 + $0x54] sm:$0xf]
    %v3415 = vld [vmem:[#allocation14 + $0x58] sm:$0xf]
    %v3416 = vld [vmem:[#allocation14 + $0x5c] sm:$0xf]
    %v3417 = vld [vmem:[#allocation14 + $0x60] sm:$0xf]
    %v3418 = vld [vmem:[#allocation14 + $0x64] sm:$0xf]
    %v3419 = vld [vmem:[#allocation14 + $0x68] sm:$0xf]
    %v3420 = vld [vmem:[#allocation14 + $0x6c] sm:$0xf]
    %v3421 = vld [vmem:[#allocation14 + $0x70] sm:$0xf]
    %v3422 = vld [vmem:[#allocation14 + $0x74] sm:$0xf]
    %v3423 = vld [vmem:[#allocation14 + $0x78] sm:$0xf]
    %v3424 = vld [vmem:[#allocation14 + $0x7c] sm:$0xf]
    %v3425 = vld [vmem:[#allocation16] sm:$0x1]
    %v3427 = vlaneseq
    %v3428 = vshrl.u32 %v3427, 7
    %v3429 = vsub.s32 0, %v3428
    %v3430 = vrot.slane %v3425, %v3429
    %v3464 = vunpack.c.l.b16 %v3393
    %v3465 = vunpack.c.l.b16 %v3394
    %v3466 = vunpack.c.l.b16 %v3395
    %v3467 = vunpack.c.l.b16 %v3396
    %v3468 = vunpack.c.l.b16 %v3397
    %v3469 = vunpack.c.l.b16 %v3398
    %v3470 = vunpack.c.l.b16 %v3399
    %v3471 = vunpack.c.l.b16 %v3400
    %v3472 = vunpack.c.l.b16 %v3401
    %v3473 = vunpack.c.l.b16 %v3402
    %v3474 = vunpack.c.l.b16 %v3403
    %v3475 = vunpack.c.l.b16 %v3404
    %v3476 = vunpack.c.l.b16 %v3405
    %v3477 = vunpack.c.l.b16 %v3406
    %v3478 = vunpack.c.l.b16 %v3407
    %v3479 = vunpack.c.l.b16 %v3408
    %v3480 = vunpack.c.l.b16 %v3409
    %v3481 = vunpack.c.l.b16 %v3410
    %v3482 = vunpack.c.l.b16 %v3411
    %v3483 = vunpack.c.l.b16 %v3412
    %v3484 = vunpack.c.l.b16 %v3413
    %v3485 = vunpack.c.l.b16 %v3414
    %v3486 = vunpack.c.l.b16 %v3415
    %v3487 = vunpack.c.l.b16 %v3416
    %v3488 = vunpack.c.l.b16 %v3417
    %v3489 = vunpack.c.l.b16 %v3418
    %v3490 = vunpack.c.l.b16 %v3419
    %v3491 = vunpack.c.l.b16 %v3420
    %v3492 = vunpack.c.l.b16 %v3421
    %v3493 = vunpack.c.l.b16 %v3422
    %v3494 = vunpack.c.l.b16 %v3423
    %v3495 = vunpack.c.l.b16 %v3424
    %v3496 = vpack.c.b16 %v3465, %v3464
    %v3497 = vpack.c.b16 %v3467, %v3466
    %v3498 = vpack.c.b16 %v3469, %v3468
    %v3499 = vpack.c.b16 %v3471, %v3470
    %v3500 = vpack.c.b16 %v3473, %v3472
    %v3501 = vpack.c.b16 %v3475, %v3474
    %v3502 = vpack.c.b16 %v3477, %v3476
    %v3503 = vpack.c.b16 %v3479, %v3478
    %v3504 = vpack.c.b16 %v3481, %v3480
    %v3505 = vpack.c.b16 %v3483, %v3482
    %v3506 = vpack.c.b16 %v3485, %v3484
    %v3507 = vpack.c.b16 %v3487, %v3486
    %v3508 = vpack.c.b16 %v3489, %v3488
    %v3509 = vpack.c.b16 %v3491, %v3490
    %v3510 = vpack.c.b16 %v3493, %v3492
    %v3511 = vpack.c.b16 %v3495, %v3494
    %3528 = vmatprep.subr.bf16.mxu0 0
    %3529 = vmatpush1.bf16.msra.mxu0 %v3496
    %3530 = vmatprep.subr.bf16.mxu0 0
    %3531 = vmatpush1.bf16.msra.mxu0 %v3497
    %3532 = vmatprep.subr.bf16.mxu0 0
    %3533 = vmatpush1.bf16.msra.mxu0 %v3498
    %3534 = vmatprep.subr.bf16.mxu0 0
    %3535 = vmatpush1.bf16.msra.mxu0 %v3499
    %3536 = vmatprep.subr.bf16.mxu0 0
    %3537 = vmatpush1.bf16.msra.mxu0 %v3500
    %3538 = vmatprep.subr.bf16.mxu0 0
    %3539 = vmatpush1.bf16.msra.mxu0 %v3501
    %3540 = vmatprep.subr.bf16.mxu0 0
    %3541 = vmatpush1.bf16.msra.mxu0 %v3502
    %3542 = vmatprep.subr.bf16.mxu0 0
    %3543 = vmatpush1.bf16.msra.mxu0 %v3503
    %3544 = vmatprep.subr.bf16.mxu0 0
    %3545 = vmatpush1.bf16.msra.mxu0 %v3504
    %3546 = vmatprep.subr.bf16.mxu0 0
    %3547 = vmatpush1.bf16.msra.mxu0 %v3505
    %3548 = vmatprep.subr.bf16.mxu0 0
    %3549 = vmatpush1.bf16.msra.mxu0 %v3506
    %3550 = vmatprep.subr.bf16.mxu0 0
    %3551 = vmatpush1.bf16.msra.mxu0 %v3507
    %3552 = vmatprep.subr.bf16.mxu0 0
    %3553 = vmatpush1.bf16.msra.mxu0 %v3508
    %3554 = vmatprep.subr.bf16.mxu0 0
    %3555 = vmatpush1.bf16.msra.mxu0 %v3509
    %3556 = vmatprep.subr.bf16.mxu0 0
    %3557 = vmatpush1.bf16.msra.mxu0 %v3510
    %3558 = vmatprep.subr.bf16.mxu0 0
    %3559 = vmatpush1.bf16.msra.mxu0 %v3511
    %3560 = vmatprep.mubr.bf16.mxu0 %v3392
    %3561 = vmatmul.mubr.bf16.gmra.mrb[0].mxu0 %v3391
    %v3562 = vpop.f32.mrb[0].mxu0
    %v3563 = vadd.f32 %v3430, %v3562
    %v3564 = vpop.f32.mrb[0].mxu0
    %v3565 = vpop.f32.mrb[0].mxu0
    %v3566 = vpop.f32.mrb[0].mxu0
    %3567 = vdwg.mxu0
    %3568 = vst [vmem:[#allocation17] sm:$0xff] %v3563
    // Predicated region
    $region74: #{tpu_custom_call.1} parent=1 // pred_check
      _
    $region75: #{tpu_custom_call.1} parent=1 // pred_check_branch
      %3570 = sbr.rel (0) target = $region77
    $region76: #{tpu_custom_call.1} parent=1 // pred_region
      %s3572 = ssub.s32 128, 128
      %3573 = vsyncadd [#allocation4], %s3572
      %s3575 = sshll.u32 [#allocation17], 4
      %s3576 = int_to_ptr.vmem [resolvable:$true] %s3575
      %3578 = dma.vmem_to_hbm [thread:$0]  %s3576, 128, %s9, [#allocation4]
    $region77: #{tpu_custom_call.1} parent=1 // pred_fallthru
      _
    // Predicated region
    $region78: #{tpu_custom_call.1} parent=1 // pred_check
      _
    $region79: #{tpu_custom_call.1} parent=1 // pred_check_branch
      %3580 = sbr.rel (0) target = $region81
    $region80: #{tpu_custom_call.1} parent=1 // pred_region
      %3581 = dma.done [#allocation4], 128
    $region81: #{tpu_custom_call.1} parent=1 // pred_fallthru
      _
    %3582 = vsyncpa [#allocation3], 1
    %3583 = vsyncpa [#allocation6], 1
    %3584 = vsyncpa [#allocation9], 1
    %3585 = vsyncpa [#allocation12], 1
    %3586 = vsyncpa [#allocation15], 1
    %3587 = vsyncpa [#allocation4], 1

</llo_original>
